<compile_context>
chip_gen: v7x
topology: tpu7x:2x2x1
jax: 0.10.0
libtpu: 0.0.40
codegen_flags: <defaults>
</compile_context>

<pallas_src>
import functools

import numpy as np
import jax
import jax.numpy as jnp
from jax import lax
from jax.experimental import pallas as pl
from jax.experimental.pallas import tpu as pltpu

EPS = 1e-5  # PyTorch BatchNorm2d default eps


# ----------------------------- Pallas kernel ------------------------------- #
def bottleneck_kernel(x_ref, w1_ref, b1_ref, w2_ref, b2_ref, w3_ref, ws_ref,
                      b3s_ref, o_ref, *, img_h, img_w):
    """One block of whole images in dense pixel-major layout.

    x_ref : (m, Cin)  bf16, m = nb * H * W pixel rows
    o_ref : (m, Cout) out dtype
    """
    x = x_ref[...]                                           # (m, Cin) bf16
    m = x.shape[0]

    # conv_in 1x1 (BN1 scale folded into the bf16 weight) + f32 bias + ReLU.
    h1 = jnp.dot(x, w1_ref[...], preferred_element_type=jnp.float32)
    h1 = jnp.maximum(h1 + b1_ref[...], 0.0)                  # (m, Cm) f32

    # Per-row within-image coordinates as (m, 1) ints — broadcast inside the
    # where() below instead of materializing full-width int32 masks.
    pix = lax.broadcasted_iota(jnp.int32, (m, 1), 0) % (img_h * img_w)
    col = pix % img_w
    not_top = pix >= img_w                   # row y-1 exists
    not_bot = pix < (img_h - 1) * img_w      # row y+1 exists
    not_lft = col > 0                        # col x-1 exists
    not_rgt = col < img_w - 1                # col x+1 exists

    # 3x3 conv, pad=1, stride=1.  Every tap (dy, dx) is a static sublane roll
    # of the pixel rows by dy*W+dx, a (m,1) boundary mask, and an accumulating
    # bf16 MXU matmul with the per-tap (Cm, Cm) weight (BN2 scale pre-folded).
    # Blocks hold whole images, so roll wrap-around rows are always masked.
    # TODO(synk): when Cm % 128 == 0 the nine taps can be K-stacked (im2col
    # lane-concat + w2 reshaped to (9*Cm, Cm)) into one K=9*Cm matmul to fill
    # v6e/v7x's 256-deep MXU; kept as 9 accumulating matmuls here because
    # lane-concat of non-128-aligned Cm-wide pieces forces relayouts.
    h1b = h1.astype(jnp.bfloat16)
    acc = jnp.dot(h1b, w2_ref[4], preferred_element_type=jnp.float32)  # center
    for dy in (-1, 0, 1):
        for dx in (-1, 0, 1):
            if dy == 0 and dx == 0:
                continue
            t = (dy + 1) * 3 + (dx + 1)
            delta = dy * img_w + dx
            # nbr[r, :] = h1[r + delta, :]  (roll done in f32: plain sublane
            # rotate, avoids packed-bf16 odd-shift repacking).
            nbr = pltpu.roll(h1, (-delta) % m, axis=0)
            conds = []
            if dy < 0:
                conds.append(not_top)
            if dy > 0:
                conds.append(not_bot)
            if dx < 0:
                conds.append(not_lft)
            if dx > 0:
                conds.append(not_rgt)
            valid = conds[0]
            for c in conds[1:]:
                valid = jnp.logical_and(valid, c)
            nbr = jnp.where(valid, nbr, 0.0)                 # (m,1) broadcast
            acc = acc + jnp.dot(nbr.astype(jnp.bfloat16), w2_ref[t],
                                preferred_element_type=jnp.float32)
    h2 = jnp.maximum(acc + b2_ref[...], 0.0)                 # (m, Cm) f32

    # conv_out 1x1 (BN3 scale folded) and skip 1x1 (BNs scale folded) computed
    # HERE at the end so no (m, Cout) f32 tensor lives across the 3x3 stage.
    # Residual add + merged (b3 + bs) bias + final ReLU; lane-dense store.
    h3 = jnp.dot(h2.astype(jnp.bfloat16), w3_ref[...],
                 preferred_element_type=jnp.float32)
    sk = jnp.dot(x, ws_ref[...], preferred_element_type=jnp.float32)
    o_ref[...] = jnp.maximum(h3 + sk + b3s_ref[...], 0.0).astype(o_ref.dtype)


# ------------------------------ params ------------------------------------- #
def init_params(key, in_planes, out_planes):
    mid = out_planes // 4
    keys = jax.random.split(key, 8)

    def conv_w(k, cout, cin, kh, kw):
        fan_in = cin * kh * kw
        return jax.random.normal(k, (cout, cin, kh, kw), jnp.float32) / np.sqrt(fan_in)

    def bn_params(k, c):
        k1, k2, k3, k4 = jax.random.split(k, 4)
        gamma = jax.random.uniform(k1, (c,), jnp.float32, 0.5, 1.5)
        beta = 0.1 * jax.random.normal(k2, (c,), jnp.float32)
        mean = 0.1 * jax.random.normal(k3, (c,), jnp.float32)
        var = jax.random.uniform(k4, (c,), jnp.float32, 0.5, 1.5)
        return (gamma, beta, mean, var)

    return dict(
        w1=conv_w(keys[0], mid, in_planes, 1, 1),        bn1=bn_params(keys[1], mid),
        w2=conv_w(keys[2], mid, mid, 3, 3),              bn2=bn_params(keys[3], mid),
        w3=conv_w(keys[4], out_planes, mid, 1, 1),       bn3=bn_params(keys[5], out_planes),
        ws=conv_w(keys[6], out_planes, in_planes, 1, 1), bns=bn_params(keys[7], out_planes),
    )


# --------------------- host-side operand preparation ----------------------- #
def prepare_operands(params):
    """Fold eval-mode BN into the weights (scales -> bf16 weight columns,
    biases stay f32).  Pure numpy, run ONCE at setup."""
    def fold(bn):
        g, b, m, v = (np.asarray(t, np.float32) for t in bn)
        s = g / np.sqrt(v + EPS)
        return s, (b - m * s).astype(np.float32)

    w1 = np.asarray(params['w1'], np.float32)   # (Cm,  Cin, 1, 1)
    w2 = np.asarray(params['w2'], np.float32)   # (Cm,  Cm,  3, 3)
    w3 = np.asarray(params['w3'], np.float32)   # (Cout, Cm, 1, 1)
    ws = np.asarray(params['ws'], np.float32)   # (Cout, Cin, 1, 1)

    s1, b1 = fold(params['bn1'])
    s2, b2 = fold(params['bn2'])
    s3, b3 = fold(params['bn3'])
    ss, bs = fold(params['bns'])

    W1 = w1[:, :, 0, 0].T * s1[None, :]         # (Cin, Cm)
    W3 = w3[:, :, 0, 0].T * s3[None, :]         # (Cm,  Cout)
    Ws = ws[:, :, 0, 0].T * ss[None, :]         # (Cin, Cout)
    cm = w2.shape[0]
    W2 = np.empty((9, cm, cm), np.float32)      # tap t = ky*3 + kx, dy=ky-1, dx=kx-1
    for ky in range(3):
        for kx in range(3):
            W2[ky * 3 + kx] = w2[:, :, ky, kx].T * s2[None, :]

    return dict(
        w1=jnp.asarray(W1, jnp.bfloat16), b1=jnp.asarray(b1[None, :], jnp.float32),
        w2=jnp.asarray(W2, jnp.bfloat16), b2=jnp.asarray(b2[None, :], jnp.float32),
        w3=jnp.asarray(W3, jnp.bfloat16), ws=jnp.asarray(Ws, jnp.bfloat16),
        b3s=jnp.asarray((b3 + bs)[None, :], jnp.float32),
    )


# ------------------------------ wrapper ------------------------------------ #
def _vmem_capacity_bytes(default=128 << 20):
    """Physical VMEM per core via pltpu.get_tpu_info (safe fallback)."""
    try:
        fn = getattr(pltpu, "get_tpu_info", None)
        if fn is None:
            return default
        return int(getattr(fn(), "vmem_capacity_bytes", default))
    except Exception:
        return default


def _images_per_block(N, H, W, target_rows):
    """Largest divisor nb of N with nb*H*W <= target_rows, keeping >= 2 grid
    steps whenever N >= 2 so ("parallel",) can shard across v7x's 2 TCs.
    Blocks must hold WHOLE images (the 3x3 boundary masks rely on it)."""
    per_img = H * W
    best = 1
    for nb in range(1, N + 1):
        if N % nb:
            continue
        if N >= 2 and (N // nb) < 2:
            continue
        if nb == 1 or nb * per_img <= target_rows:
            best = nb
    return best


def bottleneck_pallas(x_nhwc, ops, *, out_dtype=jnp.float32):
    """x_nhwc: (N, H, W, Cin), ideally already bf16 (no extra cast pass).
    Returns (N, H, W, Cout) in out_dtype.
    TODO(synk): pass out_dtype=jnp.bfloat16 on v5e (lowest HBM BW / 1 vst slot)
    when the consuming layer accepts bf16."""
    N, H, W, Cin = x_nhwc.shape
    Cout = ops['w3'].shape[1]
    assert ops['w1'].shape[0] == Cin

    # Generation-aware block sizing: bigger row tiles on 128 MiB v5e/v6e,
    # tighter on v7x's 64 MiB.
    vmem_cap = _vmem_capacity_bytes()
    osz = np.dtype(out_dtype).itemsize
    const_bytes = sum(int(np.prod(v.shape)) * v.dtype.itemsize for v in ops.values())
    bytes_per_row = Cin * 2 + Cout * osz              # bf16 in block + out block
    base_target = 1024 if vmem_cap >= (100 << 20) else 512
    row_budget = int((0.45 * vmem_cap - 2 * const_bytes) // (2 * bytes_per_row))
    target_rows = max(H * W, min(base_target, row_budget))
    nb = _images_per_block(N, H, W, target_rows)
    m = nb * H * W
    assert m % 8 == 0, "rows per block must be a multiple of 8 (sublane tiling)"

    x2d = x_nhwc.reshape(N * H * W, Cin)              # free reshape, no transpose
    if x2d.dtype != jnp.bfloat16:
        x2d = x2d.astype(jnp.bfloat16)                # no-op for bf16 producers

    def const_spec(shape):
        nd = len(shape)
        return pl.BlockSpec(shape, lambda *_, _nd=nd: (0,) * _nd)

    grid_spec = pltpu.PrefetchScalarGridSpec(
        num_scalar_prefetch=0,
        grid=(N // nb,),
        in_specs=[
            pl.BlockSpec((m, Cin), lambda b: (b, 0)),
            const_spec(ops['w1'].shape), const_spec(ops['b1'].shape),
            const_spec(ops['w2'].shape), const_spec(ops['b2'].shape),
            const_spec(ops['w3'].shape), const_spec(ops['ws'].shape),
            const_spec(ops['b3s'].shape),
        ],
        out_specs=pl.BlockSpec((m, Cout), lambda b: (b, 0)),
    )

    # Scoped VMEM: double-buffered x/out blocks + (now tiny, dense) constant
    # operands, capped at ~60% of the detected generation's physical VMEM.
    # (Constants are only a few 100 KiB after the dense-layout rewrite, so
    #  their default double-buffering is noise.)
    io_bytes = m * bytes_per_row
    vmem_limit = max(16 << 20,
                     min(2 * (const_bytes + io_bytes) + (8 << 20),
                         int(0.6 * vmem_cap)))

    kernel = functools.partial(bottleneck_kernel, img_h=H, img_w=W)
    out2d = pl.pallas_call(
        kernel,
        out_shape=jax.ShapeDtypeStruct((N * H * W, Cout), out_dtype),
        grid_spec=grid_spec,
        compiler_params=pltpu.CompilerParams(
            dimension_semantics=("parallel",),
            vmem_limit_bytes=int(vmem_limit)),
    )(x2d, ops['w1'], ops['b1'], ops['w2'], ops['b2'],
      ops['w3'], ops['ws'], ops['b3s'])

    return out2d.reshape(N, H, W, Cout)


# ------------------------------ pure-JAX reference -------------------------- #
def _conv2d(x, w, stride=1, padding=0, groups=1):
    return lax.conv_general_dilated(
        x, w, (stride, stride), [(padding, padding)] * 2,
        dimension_numbers=('NCHW', 'OIHW', 'NCHW'),
        feature_group_count=groups, precision=lax.Precision.HIGHEST)


def _bn_eval(x, bn):
    g, b, m, v = bn
    s = g / jnp.sqrt(v + EPS)
    return x * s[None, :, None, None] + (b - m * s)[None, :, None, None]


def bottleneck_ref(x, p):
    h = jax.nn.relu(_bn_eval(_conv2d(x, p['w1']), p['bn1']))
    h = jax.nn.relu(_bn_eval(_conv2d(h, p['w2'], padding=1), p['bn2']))
    h = _bn_eval(_conv2d(h, p['w3']), p['bn3'])
    sk = _bn_eval(_conv2d(x, p['ws']), p['bns'])
    return jax.nn.relu(h + sk)


# ----------------------------------- main ------------------------------------ #
if __name__ == "__main__":
    key = jax.random.PRNGKey(0)
    kx_, kp = jax.random.split(key)
    in_planes, out_planes = 32, 128          # mid channels = out_planes // 4 = 32
    N, H, W = 2, 16, 16
    x_nchw = jax.random.normal(kx_, (N, in_planes, H, W), jnp.float32)  # NCHW (PyTorch)
    params = init_params(kp, in_planes, out_planes)

    # One-time host-side weight prep (BN folded into bf16 weights / f32 biases).
    ops = prepare_operands(params)

    # Producer-side layout conversion done ONCE outside the kernel's hot path:
    # the kernel API takes NHWC bf16 directly (no in-path transpose/cast).
    x_nhwc = jnp.transpose(x_nchw, (0, 2, 3, 1)).astype(jnp.bfloat16)

    out_nhwc = jax.block_until_ready(bottleneck_pallas(x_nhwc, ops))
    ref_nchw = jax.block_until_ready(bottleneck_ref(x_nchw, params))

    # bf16 MXU operands (f32 accumulation) vs. f32/HIGHEST reference.
    out_nchw = np.transpose(np.asarray(out_nhwc, np.float32), (0, 3, 1, 2))
    np.testing.assert_allclose(out_nchw, np.asarray(ref_nchw),
                               rtol=2e-2, atol=5e-2)
    print("KERNEL_OK")
</pallas_src>

<mosaic_0001>
module attributes {stable_mosaic.version = 11 : i64} {
  func.func @bottleneck_kernel(%arg0: i32, %arg1: memref<256x32xbf16, #tpu.memory_space<vmem>>, %arg2: memref<32x32xbf16, #tpu.memory_space<vmem>>, %arg3: memref<1x32xf32, #tpu.memory_space<vmem>>, %arg4: memref<9x32x32xbf16, #tpu.memory_space<vmem>>, %arg5: memref<1x32xf32, #tpu.memory_space<vmem>>, %arg6: memref<32x128xbf16, #tpu.memory_space<vmem>>, %arg7: memref<32x128xbf16, #tpu.memory_space<vmem>>, %arg8: memref<1x128xf32, #tpu.memory_space<vmem>>, %arg9: memref<256x128xf32, #tpu.memory_space<vmem>>) attributes {dimension_semantics = [#tpu.dimension_semantics<parallel>], iteration_bounds = array<i64: 2>, scalar_prefetch = 0 : i64, scratch_operands = 0 : i64, tpu.core_type = #tpu.core_type<tc>, window_params = [{transform_indices = @transform_0, window_bounds = array<i64: 256, 32>}, {pipeline_mode = #tpu.pipeline_mode<synchronous>, transform_indices = @transform_1, window_bounds = array<i64: 32, 32>}, {pipeline_mode = #tpu.pipeline_mode<synchronous>, transform_indices = @transform_2, window_bounds = array<i64: 1, 32>}, {pipeline_mode = #tpu.pipeline_mode<synchronous>, transform_indices = @transform_3, window_bounds = array<i64: 9, 32, 32>}, {pipeline_mode = #tpu.pipeline_mode<synchronous>, transform_indices = @transform_4, window_bounds = array<i64: 1, 32>}, {pipeline_mode = #tpu.pipeline_mode<synchronous>, transform_indices = @transform_5, window_bounds = array<i64: 32, 128>}, {pipeline_mode = #tpu.pipeline_mode<synchronous>, transform_indices = @transform_6, window_bounds = array<i64: 32, 128>}, {pipeline_mode = #tpu.pipeline_mode<synchronous>, transform_indices = @transform_7, window_bounds = array<i64: 1, 128>}, {transform_indices = @transform_8, window_bounds = array<i64: 256, 128>}]} {
    %c0 = arith.constant 0 : index
    %c0_0 = arith.constant 0 : index
    %0 = vector.load %arg1[%c0, %c0_0] : memref<256x32xbf16, #tpu.memory_space<vmem>>, vector<256x32xbf16>
    %c0_1 = arith.constant 0 : index
    %c0_2 = arith.constant 0 : index
    %1 = vector.load %arg2[%c0_1, %c0_2] : memref<32x32xbf16, #tpu.memory_space<vmem>>, vector<32x32xbf16>
    %cst = arith.constant dense<0.000000e+00> : vector<256x32xf32>
    %2 = tpu.matmul %0, %1, %cst {dimension_numbers = #tpu.dot_dimension_numbers<[1], [0], [0], [1], [0, 0, 1, 1], [], []>} : vector<256x32xbf16>, vector<32x32xbf16>, vector<256x32xf32> -> vector<256x32xf32>
    %c0_3 = arith.constant 0 : index
    %c0_4 = arith.constant 0 : index
    %3 = vector.load %arg3[%c0_3, %c0_4] : memref<1x32xf32, #tpu.memory_space<vmem>>, vector<1x32xf32>
    %4 = vector.broadcast %3 : vector<1x32xf32> to vector<256x32xf32>
    %5 = arith.addf %2, %4 : vector<256x32xf32>
    %cst_5 = arith.constant 0.000000e+00 : f32
    %6 = vector.broadcast %cst_5 : f32 to vector<256x32xf32>
    %7 = arith.maximumf %5, %6 : vector<256x32xf32>
    %8 = tpu.iota {dimensions = array<i32: 0>} : vector<256x1xi32>
    %c256_i32 = arith.constant 256 : i32
    %c0_i32 = arith.constant 0 : i32
    %9 = arith.cmpi eq, %c256_i32, %c0_i32 : i32
    %c1_i32 = arith.constant 1 : i32
    %10 = arith.select %9, %c1_i32, %c256_i32 : i32
    %11 = vector.broadcast %10 : i32 to vector<256x1xi32>
    %12 = arith.remsi %8, %11 : vector<256x1xi32>
    %c0_i32_6 = arith.constant 0 : i32
    %13 = vector.broadcast %c0_i32_6 : i32 to vector<256x1xi32>
    %14 = arith.cmpi ne, %12, %13 : vector<256x1xi32>
    %c0_i32_7 = arith.constant 0 : i32
    %15 = vector.broadcast %c0_i32_7 : i32 to vector<256x1xi32>
    %16 = arith.cmpi slt, %12, %15 : vector<256x1xi32>
    %c0_i32_8 = arith.constant 0 : i32
    %17 = arith.cmpi slt, %10, %c0_i32_8 : i32
    %18 = vector.broadcast %17 : i1 to vector<256x1xi1>
    %19 = vector.broadcast %18 : vector<256x1xi1> to vector<256x1xi1>
    %20 = arith.xori %16, %19 : vector<256x1xi1>
    %21 = arith.andi %20, %14 : vector<256x1xi1>
    %22 = vector.broadcast %10 : i32 to vector<256x1xi32>
    %23 = arith.addi %12, %22 : vector<256x1xi32>
    %24 = arith.select %21, %23, %12 : vector<256x1xi1>, vector<256x1xi32>
    %c16_i32 = arith.constant 16 : i32
    %c0_i32_9 = arith.constant 0 : i32
    %25 = arith.cmpi eq, %c16_i32, %c0_i32_9 : i32
    %c1_i32_10 = arith.constant 1 : i32
    %26 = arith.select %25, %c1_i32_10, %c16_i32 : i32
    %27 = vector.broadcast %26 : i32 to vector<256x1xi32>
    %28 = arith.remsi %24, %27 : vector<256x1xi32>
    %c0_i32_11 = arith.constant 0 : i32
    %29 = vector.broadcast %c0_i32_11 : i32 to vector<256x1xi32>
    %30 = arith.cmpi ne, %28, %29 : vector<256x1xi32>
    %c0_i32_12 = arith.constant 0 : i32
    %31 = vector.broadcast %c0_i32_12 : i32 to vector<256x1xi32>
    %32 = arith.cmpi slt, %28, %31 : vector<256x1xi32>
    %c0_i32_13 = arith.constant 0 : i32
    %33 = arith.cmpi slt, %26, %c0_i32_13 : i32
    %34 = vector.broadcast %33 : i1 to vector<256x1xi1>
    %35 = vector.broadcast %34 : vector<256x1xi1> to vector<256x1xi1>
    %36 = arith.xori %32, %35 : vector<256x1xi1>
    %37 = arith.andi %36, %30 : vector<256x1xi1>
    %38 = vector.broadcast %26 : i32 to vector<256x1xi32>
    %39 = arith.addi %28, %38 : vector<256x1xi32>
    %40 = arith.select %37, %39, %28 : vector<256x1xi1>, vector<256x1xi32>
    %c16_i32_14 = arith.constant 16 : i32
    %41 = vector.broadcast %c16_i32_14 : i32 to vector<256x1xi32>
    %42 = arith.cmpi sge, %24, %41 : vector<256x1xi32>
    %c240_i32 = arith.constant 240 : i32
    %43 = vector.broadcast %c240_i32 : i32 to vector<256x1xi32>
    %44 = arith.cmpi slt, %24, %43 : vector<256x1xi32>
    %c0_i32_15 = arith.constant 0 : i32
    %45 = vector.broadcast %c0_i32_15 : i32 to vector<256x1xi32>
    %46 = arith.cmpi sgt, %40, %45 : vector<256x1xi32>
    %c15_i32 = arith.constant 15 : i32
    %47 = vector.broadcast %c15_i32 : i32 to vector<256x1xi32>
    %48 = arith.cmpi slt, %40, %47 : vector<256x1xi32>
    %49 = arith.truncf %7 : vector<256x32xf32> to vector<256x32xbf16>
    %c4 = arith.constant 4 : index
    %c0_16 = arith.constant 0 : index
    %c0_17 = arith.constant 0 : index
    %50 = vector.load %arg4[%c4, %c0_16, %c0_17] : memref<9x32x32xbf16, #tpu.memory_space<vmem>>, vector<1x32x32xbf16>
    %51 = vector.shape_cast %50 : vector<1x32x32xbf16> to vector<32x32xbf16>
    %cst_18 = arith.constant dense<0.000000e+00> : vector<256x32xf32>
    %52 = tpu.matmul %49, %51, %cst_18 {dimension_numbers = #tpu.dot_dimension_numbers<[1], [0], [0], [1], [0, 0, 1, 1], [], []>} : vector<256x32xbf16>, vector<32x32xbf16>, vector<256x32xf32> -> vector<256x32xf32>
    %c17_i32 = arith.constant 17 : i32
    %53 = tpu.dynamic_rotate %7 by %c17_i32 dim 0 : vector<256x32xf32>, i32 -> vector<256x32xf32>
    %54 = arith.andi %42, %46 : vector<256x1xi1>
    %cst_19 = arith.constant 0.000000e+00 : f32
    %55 = vector.shape_cast %54 : vector<256x1xi1> to vector<256x1xi1>
    %56 = vector.broadcast %55 : vector<256x1xi1> to vector<256x32xi1>
    %57 = vector.broadcast %cst_19 : f32 to vector<256x32xf32>
    %58 = arith.select %56, %53, %57 : vector<256x32xi1>, vector<256x32xf32>
    %59 = arith.truncf %58 : vector<256x32xf32> to vector<256x32xbf16>
    %c0_20 = arith.constant 0 : index
    %c0_21 = arith.constant 0 : index
    %c0_22 = arith.constant 0 : index
    %60 = vector.load %arg4[%c0_20, %c0_21, %c0_22] : memref<9x32x32xbf16, #tpu.memory_space<vmem>>, vector<1x32x32xbf16>
    %61 = vector.shape_cast %60 : vector<1x32x32xbf16> to vector<32x32xbf16>
    %cst_23 = arith.constant dense<0.000000e+00> : vector<256x32xf32>
    %62 = tpu.matmul %59, %61, %cst_23 {dimension_numbers = #tpu.dot_dimension_numbers<[1], [0], [0], [1], [0, 0, 1, 1], [], []>} : vector<256x32xbf16>, vector<32x32xbf16>, vector<256x32xf32> -> vector<256x32xf32>
    %63 = arith.addf %52, %62 : vector<256x32xf32>
    %c16_i32_24 = arith.constant 16 : i32
    %64 = tpu.dynamic_rotate %7 by %c16_i32_24 dim 0 : vector<256x32xf32>, i32 -> vector<256x32xf32>
    %cst_25 = arith.constant 0.000000e+00 : f32
    %65 = vector.shape_cast %42 : vector<256x1xi1> to vector<256x1xi1>
    %66 = vector.broadcast %65 : vector<256x1xi1> to vector<256x32xi1>
    %67 = vector.broadcast %cst_25 : f32 to vector<256x32xf32>
    %68 = arith.select %66, %64, %67 : vector<256x32xi1>, vector<256x32xf32>
    %69 = arith.truncf %68 : vector<256x32xf32> to vector<256x32xbf16>
    %c1 = arith.constant 1 : index
    %c0_26 = arith.constant 0 : index
    %c0_27 = arith.constant 0 : index
    %70 = vector.load %arg4[%c1, %c0_26, %c0_27] : memref<9x32x32xbf16, #tpu.memory_space<vmem>>, vector<1x32x32xbf16>
    %71 = vector.shape_cast %70 : vector<1x32x32xbf16> to vector<32x32xbf16>
    %cst_28 = arith.constant dense<0.000000e+00> : vector<256x32xf32>
    %72 = tpu.matmul %69, %71, %cst_28 {dimension_numbers = #tpu.dot_dimension_numbers<[1], [0], [0], [1], [0, 0, 1, 1], [], []>} : vector<256x32xbf16>, vector<32x32xbf16>, vector<256x32xf32> -> vector<256x32xf32>
    %73 = arith.addf %63, %72 : vector<256x32xf32>
    %c15_i32_29 = arith.constant 15 : i32
    %74 = tpu.dynamic_rotate %7 by %c15_i32_29 dim 0 : vector<256x32xf32>, i32 -> vector<256x32xf32>
    %75 = arith.andi %42, %48 : vector<256x1xi1>
    %cst_30 = arith.constant 0.000000e+00 : f32
    %76 = vector.shape_cast %75 : vector<256x1xi1> to vector<256x1xi1>
    %77 = vector.broadcast %76 : vector<256x1xi1> to vector<256x32xi1>
    %78 = vector.broadcast %cst_30 : f32 to vector<256x32xf32>
    %79 = arith.select %77, %74, %78 : vector<256x32xi1>, vector<256x32xf32>
    %80 = arith.truncf %79 : vector<256x32xf32> to vector<256x32xbf16>
    %c2 = arith.constant 2 : index
    %c0_31 = arith.constant 0 : index
    %c0_32 = arith.constant 0 : index
    %81 = vector.load %arg4[%c2, %c0_31, %c0_32] : memref<9x32x32xbf16, #tpu.memory_space<vmem>>, vector<1x32x32xbf16>
    %82 = vector.shape_cast %81 : vector<1x32x32xbf16> to vector<32x32xbf16>
    %cst_33 = arith.constant dense<0.000000e+00> : vector<256x32xf32>
    %83 = tpu.matmul %80, %82, %cst_33 {dimension_numbers = #tpu.dot_dimension_numbers<[1], [0], [0], [1], [0, 0, 1, 1], [], []>} : vector<256x32xbf16>, vector<32x32xbf16>, vector<256x32xf32> -> vector<256x32xf32>
    %84 = arith.addf %73, %83 : vector<256x32xf32>
    %c1_i32_34 = arith.constant 1 : i32
    %85 = tpu.dynamic_rotate %7 by %c1_i32_34 dim 0 : vector<256x32xf32>, i32 -> vector<256x32xf32>
    %cst_35 = arith.constant 0.000000e+00 : f32
    %86 = vector.shape_cast %46 : vector<256x1xi1> to vector<256x1xi1>
    %87 = vector.broadcast %86 : vector<256x1xi1> to vector<256x32xi1>
    %88 = vector.broadcast %cst_35 : f32 to vector<256x32xf32>
    %89 = arith.select %87, %85, %88 : vector<256x32xi1>, vector<256x32xf32>
    %90 = arith.truncf %89 : vector<256x32xf32> to vector<256x32xbf16>
    %c3 = arith.constant 3 : index
    %c0_36 = arith.constant 0 : index
    %c0_37 = arith.constant 0 : index
    %91 = vector.load %arg4[%c3, %c0_36, %c0_37] : memref<9x32x32xbf16, #tpu.memory_space<vmem>>, vector<1x32x32xbf16>
    %92 = vector.shape_cast %91 : vector<1x32x32xbf16> to vector<32x32xbf16>
    %cst_38 = arith.constant dense<0.000000e+00> : vector<256x32xf32>
    %93 = tpu.matmul %90, %92, %cst_38 {dimension_numbers = #tpu.dot_dimension_numbers<[1], [0], [0], [1], [0, 0, 1, 1], [], []>} : vector<256x32xbf16>, vector<32x32xbf16>, vector<256x32xf32> -> vector<256x32xf32>
    %94 = arith.addf %84, %93 : vector<256x32xf32>
    %c255_i32 = arith.constant 255 : i32
    %95 = tpu.dynamic_rotate %7 by %c255_i32 dim 0 : vector<256x32xf32>, i32 -> vector<256x32xf32>
    %cst_39 = arith.constant 0.000000e+00 : f32
    %96 = vector.shape_cast %48 : vector<256x1xi1> to vector<256x1xi1>
    %97 = vector.broadcast %96 : vector<256x1xi1> to vector<256x32xi1>
    %98 = vector.broadcast %cst_39 : f32 to vector<256x32xf32>
    %99 = arith.select %97, %95, %98 : vector<256x32xi1>, vector<256x32xf32>
    %100 = arith.truncf %99 : vector<256x32xf32> to vector<256x32xbf16>
    %c5 = arith.constant 5 : index
    %c0_40 = arith.constant 0 : index
    %c0_41 = arith.constant 0 : index
    %101 = vector.load %arg4[%c5, %c0_40, %c0_41] : memref<9x32x32xbf16, #tpu.memory_space<vmem>>, vector<1x32x32xbf16>
    %102 = vector.shape_cast %101 : vector<1x32x32xbf16> to vector<32x32xbf16>
    %cst_42 = arith.constant dense<0.000000e+00> : vector<256x32xf32>
    %103 = tpu.matmul %100, %102, %cst_42 {dimension_numbers = #tpu.dot_dimension_numbers<[1], [0], [0], [1], [0, 0, 1, 1], [], []>} : vector<256x32xbf16>, vector<32x32xbf16>, vector<256x32xf32> -> vector<256x32xf32>
    %104 = arith.addf %94, %103 : vector<256x32xf32>
    %c241_i32 = arith.constant 241 : i32
    %105 = tpu.dynamic_rotate %7 by %c241_i32 dim 0 : vector<256x32xf32>, i32 -> vector<256x32xf32>
    %106 = arith.andi %44, %46 : vector<256x1xi1>
    %cst_43 = arith.constant 0.000000e+00 : f32
    %107 = vector.shape_cast %106 : vector<256x1xi1> to vector<256x1xi1>
    %108 = vector.broadcast %107 : vector<256x1xi1> to vector<256x32xi1>
    %109 = vector.broadcast %cst_43 : f32 to vector<256x32xf32>
    %110 = arith.select %108, %105, %109 : vector<256x32xi1>, vector<256x32xf32>
    %111 = arith.truncf %110 : vector<256x32xf32> to vector<256x32xbf16>
    %c6 = arith.constant 6 : index
    %c0_44 = arith.constant 0 : index
    %c0_45 = arith.constant 0 : index
    %112 = vector.load %arg4[%c6, %c0_44, %c0_45] : memref<9x32x32xbf16, #tpu.memory_space<vmem>>, vector<1x32x32xbf16>
    %113 = vector.shape_cast %112 : vector<1x32x32xbf16> to vector<32x32xbf16>
    %cst_46 = arith.constant dense<0.000000e+00> : vector<256x32xf32>
    %114 = tpu.matmul %111, %113, %cst_46 {dimension_numbers = #tpu.dot_dimension_numbers<[1], [0], [0], [1], [0, 0, 1, 1], [], []>} : vector<256x32xbf16>, vector<32x32xbf16>, vector<256x32xf32> -> vector<256x32xf32>
    %115 = arith.addf %104, %114 : vector<256x32xf32>
    %c240_i32_47 = arith.constant 240 : i32
    %116 = tpu.dynamic_rotate %7 by %c240_i32_47 dim 0 : vector<256x32xf32>, i32 -> vector<256x32xf32>
    %cst_48 = arith.constant 0.000000e+00 : f32
    %117 = vector.shape_cast %44 : vector<256x1xi1> to vector<256x1xi1>
    %118 = vector.broadcast %117 : vector<256x1xi1> to vector<256x32xi1>
    %119 = vector.broadcast %cst_48 : f32 to vector<256x32xf32>
    %120 = arith.select %118, %116, %119 : vector<256x32xi1>, vector<256x32xf32>
    %121 = arith.truncf %120 : vector<256x32xf32> to vector<256x32xbf16>
    %c7 = arith.constant 7 : index
    %c0_49 = arith.constant 0 : index
    %c0_50 = arith.constant 0 : index
    %122 = vector.load %arg4[%c7, %c0_49, %c0_50] : memref<9x32x32xbf16, #tpu.memory_space<vmem>>, vector<1x32x32xbf16>
    %123 = vector.shape_cast %122 : vector<1x32x32xbf16> to vector<32x32xbf16>
    %cst_51 = arith.constant dense<0.000000e+00> : vector<256x32xf32>
    %124 = tpu.matmul %121, %123, %cst_51 {dimension_numbers = #tpu.dot_dimension_numbers<[1], [0], [0], [1], [0, 0, 1, 1], [], []>} : vector<256x32xbf16>, vector<32x32xbf16>, vector<256x32xf32> -> vector<256x32xf32>
    %125 = arith.addf %115, %124 : vector<256x32xf32>
    %c239_i32 = arith.constant 239 : i32
    %126 = tpu.dynamic_rotate %7 by %c239_i32 dim 0 : vector<256x32xf32>, i32 -> vector<256x32xf32>
    %127 = arith.andi %44, %48 : vector<256x1xi1>
    %cst_52 = arith.constant 0.000000e+00 : f32
    %128 = vector.shape_cast %127 : vector<256x1xi1> to vector<256x1xi1>
    %129 = vector.broadcast %128 : vector<256x1xi1> to vector<256x32xi1>
    %130 = vector.broadcast %cst_52 : f32 to vector<256x32xf32>
    %131 = arith.select %129, %126, %130 : vector<256x32xi1>, vector<256x32xf32>
    %132 = arith.truncf %131 : vector<256x32xf32> to vector<256x32xbf16>
    %c8 = arith.constant 8 : index
    %c0_53 = arith.constant 0 : index
    %c0_54 = arith.constant 0 : index
    %133 = vector.load %arg4[%c8, %c0_53, %c0_54] : memref<9x32x32xbf16, #tpu.memory_space<vmem>>, vector<1x32x32xbf16>
    %134 = vector.shape_cast %133 : vector<1x32x32xbf16> to vector<32x32xbf16>
    %cst_55 = arith.constant dense<0.000000e+00> : vector<256x32xf32>
    %135 = tpu.matmul %132, %134, %cst_55 {dimension_numbers = #tpu.dot_dimension_numbers<[1], [0], [0], [1], [0, 0, 1, 1], [], []>} : vector<256x32xbf16>, vector<32x32xbf16>, vector<256x32xf32> -> vector<256x32xf32>
    %136 = arith.addf %125, %135 : vector<256x32xf32>
    %c0_56 = arith.constant 0 : index
    %c0_57 = arith.constant 0 : index
    %137 = vector.load %arg5[%c0_56, %c0_57] : memref<1x32xf32, #tpu.memory_space<vmem>>, vector<1x32xf32>
    %138 = vector.broadcast %137 : vector<1x32xf32> to vector<256x32xf32>
    %139 = arith.addf %136, %138 : vector<256x32xf32>
    %cst_58 = arith.constant 0.000000e+00 : f32
    %140 = vector.broadcast %cst_58 : f32 to vector<256x32xf32>
    %141 = arith.maximumf %139, %140 : vector<256x32xf32>
    %142 = arith.truncf %141 : vector<256x32xf32> to vector<256x32xbf16>
    %c0_59 = arith.constant 0 : index
    %c0_60 = arith.constant 0 : index
    %143 = vector.load %arg6[%c0_59, %c0_60] : memref<32x128xbf16, #tpu.memory_space<vmem>>, vector<32x128xbf16>
    %cst_61 = arith.constant dense<0.000000e+00> : vector<256x128xf32>
    %144 = tpu.matmul %142, %143, %cst_61 {dimension_numbers = #tpu.dot_dimension_numbers<[1], [0], [0], [1], [0, 0, 1, 1], [], []>} : vector<256x32xbf16>, vector<32x128xbf16>, vector<256x128xf32> -> vector<256x128xf32>
    %c0_62 = arith.constant 0 : index
    %c0_63 = arith.constant 0 : index
    %145 = vector.load %arg7[%c0_62, %c0_63] : memref<32x128xbf16, #tpu.memory_space<vmem>>, vector<32x128xbf16>
    %cst_64 = arith.constant dense<0.000000e+00> : vector<256x128xf32>
    %146 = tpu.matmul %0, %145, %cst_64 {dimension_numbers = #tpu.dot_dimension_numbers<[1], [0], [0], [1], [0, 0, 1, 1], [], []>} : vector<256x32xbf16>, vector<32x128xbf16>, vector<256x128xf32> -> vector<256x128xf32>
    %147 = arith.addf %144, %146 : vector<256x128xf32>
    %c0_65 = arith.constant 0 : index
    %c0_66 = arith.constant 0 : index
    %148 = vector.load %arg8[%c0_65, %c0_66] : memref<1x128xf32, #tpu.memory_space<vmem>>, vector<1x128xf32>
    %149 = vector.broadcast %148 : vector<1x128xf32> to vector<256x128xf32>
    %150 = arith.addf %147, %149 : vector<256x128xf32>
    %cst_67 = arith.constant 0.000000e+00 : f32
    %151 = vector.broadcast %cst_67 : f32 to vector<256x128xf32>
    %152 = arith.maximumf %150, %151 : vector<256x128xf32>
    %c0_68 = arith.constant 0 : index
    %c0_69 = arith.constant 0 : index
    %153 = vector.load %arg9[%c0_68, %c0_69] : memref<256x128xf32, #tpu.memory_space<vmem>>, vector<256x128xf32>
    tpu.vector_store %arg9[%c0_68, %c0_69], %152 {strides = array<i32>} : memref<256x128xf32, #tpu.memory_space<vmem>>, vector<256x128xf32>,
    return
  }
  func.func @transform_0(%arg0: i32) -> (i32, i32) {
    %c0_i32 = arith.constant 0 : i32
    %c0_i32_0 = arith.constant 0 : i32
    return %arg0, %c0_i32 : i32, i32
  }
  func.func @transform_1(%arg0: i32) -> (i32, i32) {
    %c0_i32 = arith.constant 0 : i32
    %c0_i32_0 = arith.constant 0 : i32
    %c0_i32_1 = arith.constant 0 : i32
    return %c0_i32, %c0_i32_0 : i32, i32
  }
  func.func @transform_2(%arg0: i32) -> (i32, i32) {
    %c0_i32 = arith.constant 0 : i32
    %c0_i32_0 = arith.constant 0 : i32
    %c0_i32_1 = arith.constant 0 : i32
    return %c0_i32, %c0_i32_0 : i32, i32
  }
  func.func @transform_3(%arg0: i32) -> (i32, i32, i32) {
    %c0_i32 = arith.constant 0 : i32
    %c0_i32_0 = arith.constant 0 : i32
    %c0_i32_1 = arith.constant 0 : i32
    %c0_i32_2 = arith.constant 0 : i32
    return %c0_i32, %c0_i32_0, %c0_i32_1 : i32, i32, i32
  }
  func.func @transform_4(%arg0: i32) -> (i32, i32) {
    %c0_i32 = arith.constant 0 : i32
    %c0_i32_0 = arith.constant 0 : i32
    %c0_i32_1 = arith.constant 0 : i32
    return %c0_i32, %c0_i32_0 : i32, i32
  }
  func.func @transform_5(%arg0: i32) -> (i32, i32) {
    %c0_i32 = arith.constant 0 : i32
    %c0_i32_0 = arith.constant 0 : i32
    %c0_i32_1 = arith.constant 0 : i32
    return %c0_i32, %c0_i32_0 : i32, i32
  }
  func.func @transform_6(%arg0: i32) -> (i32, i32) {
    %c0_i32 = arith.constant 0 : i32
    %c0_i32_0 = arith.constant 0 : i32
    %c0_i32_1 = arith.constant 0 : i32
    return %c0_i32, %c0_i32_0 : i32, i32
  }
  func.func @transform_7(%arg0: i32) -> (i32, i32) {
    %c0_i32 = arith.constant 0 : i32
    %c0_i32_0 = arith.constant 0 : i32
    %c0_i32_1 = arith.constant 0 : i32
    return %c0_i32, %c0_i32_0 : i32, i32
  }
  func.func @transform_8(%arg0: i32) -> (i32, i32) {
    %c0_i32 = arith.constant 0 : i32
    %c0_i32_0 = arith.constant 0 : i32
    return %arg0, %c0_i32 : i32, i32
  }
}

</mosaic_0001>

<llo_original>
// kernel: tpu_custom_call.1
$region0: #{tpu_custom_call.1}
  #allocation0 [shape = 'u32[]', space=smem, size = 0x4, offset = 0x4, fixed_abs, tag = 'smem constant byte address 0x4 - core index']
  #allocation1 [shape = 'u32[144,128]{1,0:T(1,128)}', space=vmem, size = 0x12000, scoped, tag = 'internal scratch']
  %s0 = inlined_call_operand.vmem [shape: bf16[512,32], index: 0, kind: input, shape index: {}]
  %s1 = inlined_call_operand.vmem [shape: bf16[32,32], index: 1, kind: input, shape index: {}]
  %s2 = inlined_call_operand.vmem [shape: f32[1,32], index: 2, kind: input, shape index: {}]
  %s3 = inlined_call_operand.vmem [shape: bf16[9,32,32], index: 3, kind: input, shape index: {}]
  %s4 = inlined_call_operand.vmem [shape: f32[1,32], index: 4, kind: input, shape index: {}]
  %s5 = inlined_call_operand.vmem [shape: bf16[32,128], index: 5, kind: input, shape index: {}]
  %s6 = inlined_call_operand.vmem [shape: bf16[32,128], index: 6, kind: input, shape index: {}]
  %s7 = inlined_call_operand.vmem [shape: f32[1,128], index: 7, kind: input, shape index: {}]
  %s8 = inlined_call_operand.hbm [shape: f32[512,128], index: 8, kind: output, shape index: {}]
  %s9 = sld [smem:[#allocation0]]
  $region65: #{tpu_custom_call.1} parent=0
    _
  %s11 = ssub.s32 1, %s9
  %s12 = scalar_select 0, %s11, %s9
  $region1: #{tpu_custom_call.1} parent=0
    #allocation2 [shape = 'u8[262144]{0}', space=vmem, size = 0x40000, scoped, tag = 'output window, operand 0']
    #allocation3 [shape = 's32[2]{0}', space=sflag, size = 0x8, scoped, tag = 'scoped memory for tpu_custom_call.1']
    %13 = vsyncpa [#allocation3], 0
    %s14 = scalar_lea.sflag [#allocation3], 1
    %15 = vsyncpa %s14, 0
    loop: start=0, step=1, limit=4
    $region2: #{tpu_custom_call.1} parent=1 // loop_pre_header
      _
    $region3: #{tpu_custom_call.1} parent=1 // loop_header
      %s17 = sphi 0, %s21
      %p18 = scmp.ge.s32.totalorder %s17, 4
      %s27 = sphi 0, %s29
      %s30 = sphi 0, %s27
      %s31 = sphi 0, %s30
      %s47 = sphi 0, %s31
      %s51 = sphi 0, %s51
      %s53 = sphi 0, %s51
      %s54 = sphi 0, %s53
      %s68 = sphi 0, %s54
      %s72 = sphi 0, %s72
      %s74 = sphi 0, %s72
      %s75 = sphi 0, %s74
      %s89 = sphi 0, %s75
      %s93 = sphi 0, %s93
      %s95 = sphi 0, %s93
      %s96 = sphi 0, %s95
      %s110 = sphi 0, %s96
      %s114 = sphi 0, %s114
      %s116 = sphi 0, %s114
      %s117 = sphi 0, %s116
      %s131 = sphi 0, %s117
      %s135 = sphi 0, %s135
      %s137 = sphi 0, %s135
      %s138 = sphi 0, %s137
      %s152 = sphi 0, %s138
      %s156 = sphi 0, %s156
      %s158 = sphi 0, %s156
      %s159 = sphi 0, %s158
      %s173 = sphi 0, %s159
      %s177 = sphi 0, %s177
      %s179 = sphi 0, %s177
      %s180 = sphi 0, %s179
      %s194 = sphi 0, %s180
      %s200 = sphi 0, %s202
      %s203 = sphi 0, %s200
      %s204 = sphi 0, %s203
      %s220 = sphi 0, %s204
    $region4: #{tpu_custom_call.1} parent=1 // loop_header_branch
      %20 = sbr.rel (%p18) target = $region8
    $region5: #{tpu_custom_call.1} parent=1 // loop_body
      %s22 = ssub.s32 %s17, 1
      %s23 = ssub.s32 %s17, 2
      %s24 = sadd.s32 %s17, 1
      %s25 = ssub.s32 %s17, %s24
      %p26 = scmp.eq.s32.totalorder %s25, 0
      %s28 = sadd.s32 %s27, 1
      %s29 = scalar_select %p26, %s27, %s28
      %p32 = pneg %p26
      %p33 = scmp.eq.s32.totalorder %s17, 1
      %p34 = por %p32, %p33
      %p35 = scmp.ne.s32.totalorder %s27, %s30
      %p36 = scmp.eq.s32.totalorder %s17, 0
      %p37 = por %p35, %p36
      %p38 = scmp.ne.s32.totalorder %s27, %s30
      %p39 = scmp.eq.s32.totalorder %s22, 1
      %p40 = por %p38, %p39
      %p41 = scmp.ne.s32.totalorder %s30, %s31
      %p42 = scmp.eq.s32.totalorder %s22, 0
      %p43 = por %p41, %p42
      %p44 = scmp.ne.s32.totalorder %s30, %s31
      %p45 = scmp.eq.s32.totalorder %s23, 1
      %p46 = por %p44, %p45
      %p48 = scmp.ne.s32.totalorder %s31, %s47
      %p49 = scmp.eq.s32.totalorder %s23, 0
      %p50 = por %p48, %p49
      %s52 = sadd.s32 %s51, 1
      %p55 = scmp.eq.s32.totalorder %s17, 1
      %p56 = scmp.ne.s32.totalorder %s51, %s53
      %p57 = scmp.eq.s32.totalorder %s17, 0
      %p58 = por %p56, %p57
      %p59 = scmp.ne.s32.totalorder %s51, %s53
      %p60 = scmp.eq.s32.totalorder %s22, 1
      %p61 = por %p59, %p60
      %p62 = scmp.ne.s32.totalorder %s53, %s54
      %p63 = scmp.eq.s32.totalorder %s22, 0
      %p64 = por %p62, %p63
      %p65 = scmp.ne.s32.totalorder %s53, %s54
      %p66 = scmp.eq.s32.totalorder %s23, 1
      %p67 = por %p65, %p66
      %p69 = scmp.ne.s32.totalorder %s54, %s68
      %p70 = scmp.eq.s32.totalorder %s23, 0
      %p71 = por %p69, %p70
      %s73 = sadd.s32 %s72, 1
      %p76 = scmp.eq.s32.totalorder %s17, 1
      %p77 = scmp.ne.s32.totalorder %s72, %s74
      %p78 = scmp.eq.s32.totalorder %s17, 0
      %p79 = por %p77, %p78
      %p80 = scmp.ne.s32.totalorder %s72, %s74
      %p81 = scmp.eq.s32.totalorder %s22, 1
      %p82 = por %p80, %p81
      %p83 = scmp.ne.s32.totalorder %s74, %s75
      %p84 = scmp.eq.s32.totalorder %s22, 0
      %p85 = por %p83, %p84
      %p86 = scmp.ne.s32.totalorder %s74, %s75
      %p87 = scmp.eq.s32.totalorder %s23, 1
      %p88 = por %p86, %p87
      %p90 = scmp.ne.s32.totalorder %s75, %s89
      %p91 = scmp.eq.s32.totalorder %s23, 0
      %p92 = por %p90, %p91
      %s94 = sadd.s32 %s93, 1
      %p97 = scmp.eq.s32.totalorder %s17, 1
      %p98 = scmp.ne.s32.totalorder %s93, %s95
      %p99 = scmp.eq.s32.totalorder %s17, 0
      %p100 = por %p98, %p99
      %p101 = scmp.ne.s32.totalorder %s93, %s95
      %p102 = scmp.eq.s32.totalorder %s22, 1
      %p103 = por %p101, %p102
      %p104 = scmp.ne.s32.totalorder %s95, %s96
      %p105 = scmp.eq.s32.totalorder %s22, 0
      %p106 = por %p104, %p105
      %p107 = scmp.ne.s32.totalorder %s95, %s96
      %p108 = scmp.eq.s32.totalorder %s23, 1
      %p109 = por %p107, %p108
      %p111 = scmp.ne.s32.totalorder %s96, %s110
      %p112 = scmp.eq.s32.totalorder %s23, 0
      %p113 = por %p111, %p112
      %s115 = sadd.s32 %s114, 1
      %p118 = scmp.eq.s32.totalorder %s17, 1
      %p119 = scmp.ne.s32.totalorder %s114, %s116
      %p120 = scmp.eq.s32.totalorder %s17, 0
      %p121 = por %p119, %p120
      %p122 = scmp.ne.s32.totalorder %s114, %s116
      %p123 = scmp.eq.s32.totalorder %s22, 1
      %p124 = por %p122, %p123
      %p125 = scmp.ne.s32.totalorder %s116, %s117
      %p126 = scmp.eq.s32.totalorder %s22, 0
      %p127 = por %p125, %p126
      %p128 = scmp.ne.s32.totalorder %s116, %s117
      %p129 = scmp.eq.s32.totalorder %s23, 1
      %p130 = por %p128, %p129
      %p132 = scmp.ne.s32.totalorder %s117, %s131
      %p133 = scmp.eq.s32.totalorder %s23, 0
      %p134 = por %p132, %p133
      %s136 = sadd.s32 %s135, 1
      %p139 = scmp.eq.s32.totalorder %s17, 1
      %p140 = scmp.ne.s32.totalorder %s135, %s137
      %p141 = scmp.eq.s32.totalorder %s17, 0
      %p142 = por %p140, %p141
      %p143 = scmp.ne.s32.totalorder %s135, %s137
      %p144 = scmp.eq.s32.totalorder %s22, 1
      %p145 = por %p143, %p144
      %p146 = scmp.ne.s32.totalorder %s137, %s138
      %p147 = scmp.eq.s32.totalorder %s22, 0
      %p148 = por %p146, %p147
      %p149 = scmp.ne.s32.totalorder %s137, %s138
      %p150 = scmp.eq.s32.totalorder %s23, 1
      %p151 = por %p149, %p150
      %p153 = scmp.ne.s32.totalorder %s138, %s152
      %p154 = scmp.eq.s32.totalorder %s23, 0
      %p155 = por %p153, %p154
      %s157 = sadd.s32 %s156, 1
      %p160 = scmp.eq.s32.totalorder %s17, 1
      %p161 = scmp.ne.s32.totalorder %s156, %s158
      %p162 = scmp.eq.s32.totalorder %s17, 0
      %p163 = por %p161, %p162
      %p164 = scmp.ne.s32.totalorder %s156, %s158
      %p165 = scmp.eq.s32.totalorder %s22, 1
      %p166 = por %p164, %p165
      %p167 = scmp.ne.s32.totalorder %s158, %s159
      %p168 = scmp.eq.s32.totalorder %s22, 0
      %p169 = por %p167, %p168
      %p170 = scmp.ne.s32.totalorder %s158, %s159
      %p171 = scmp.eq.s32.totalorder %s23, 1
      %p172 = por %p170, %p171
      %p174 = scmp.ne.s32.totalorder %s159, %s173
      %p175 = scmp.eq.s32.totalorder %s23, 0
      %p176 = por %p174, %p175
      %s178 = sadd.s32 %s177, 1
      %p181 = scmp.eq.s32.totalorder %s17, 1
      %p182 = scmp.ne.s32.totalorder %s177, %s179
      %p183 = scmp.eq.s32.totalorder %s17, 0
      %p184 = por %p182, %p183
      %p185 = scmp.ne.s32.totalorder %s177, %s179
      %p186 = scmp.eq.s32.totalorder %s22, 1
      %p187 = por %p185, %p186
      %p188 = scmp.ne.s32.totalorder %s179, %s180
      %p189 = scmp.eq.s32.totalorder %s22, 0
      %p190 = por %p188, %p189
      %p191 = scmp.ne.s32.totalorder %s179, %s180
      %p192 = scmp.eq.s32.totalorder %s23, 1
      %p193 = por %p191, %p192
      %p195 = scmp.ne.s32.totalorder %s180, %s194
      %p196 = scmp.eq.s32.totalorder %s23, 0
      %p197 = por %p195, %p196
      %s198 = ssub.s32 %s17, %s24
      %p199 = scmp.eq.s32.totalorder %s198, 0
      %s201 = sadd.s32 %s200, 1
      %s202 = scalar_select %p199, %s200, %s201
      %p205 = pneg %p199
      %p206 = scmp.eq.s32.totalorder %s17, 1
      %p207 = por %p205, %p206
      %p208 = scmp.ne.s32.totalorder %s200, %s203
      %p209 = scmp.eq.s32.totalorder %s17, 0
      %p210 = por %p208, %p209
      %p211 = scmp.ne.s32.totalorder %s200, %s203
      %p212 = scmp.eq.s32.totalorder %s22, 1
      %p213 = por %p211, %p212
      %p214 = scmp.ne.s32.totalorder %s203, %s204
      %p215 = scmp.eq.s32.totalorder %s22, 0
      %p216 = por %p214, %p215
      %p217 = scmp.ne.s32.totalorder %s203, %s204
      %p218 = scmp.eq.s32.totalorder %s23, 1
      %p219 = por %p217, %p218
      %p221 = scmp.ne.s32.totalorder %s204, %s220
      %p222 = scmp.eq.s32.totalorder %s23, 0
      %p223 = por %p221, %p222
      %p224 = scmp.le.s32.totalorder 1, %s17
      %p225 = scmp.lt.s32.totalorder %s17, 3
      %p226 = pnand %p224, %p225
      %p227 = pneg %p226
      // Predicated region
      $region9: #{tpu_custom_call.1} parent=5 // pred_check
        _
      $region10: #{tpu_custom_call.1} parent=5 // pred_check_branch
        %229 = sbr.rel (%p226) target = $region12
      $region11: #{tpu_custom_call.1} parent=5 // pred_region
        %s230 = ssub.s32 %s17, 1
        // Predicated region
        $region13: #{tpu_custom_call.1} parent=11 // pred_check
          %p231 = pneg %p64
        $region14: #{tpu_custom_call.1} parent=11 // pred_check_branch
          %233 = sbr.rel (%p231) target = $region16
        $region15: #{tpu_custom_call.1} parent=11 // pred_region
          _
        $region16: #{tpu_custom_call.1} parent=11 // pred_fallthru
          _
        // Predicated region
        $region17: #{tpu_custom_call.1} parent=11 // pred_check
          %p234 = pneg %p85
        $region18: #{tpu_custom_call.1} parent=11 // pred_check_branch
          %236 = sbr.rel (%p234) target = $region20
        $region19: #{tpu_custom_call.1} parent=11 // pred_region
          _
        $region20: #{tpu_custom_call.1} parent=11 // pred_fallthru
          _
        // Predicated region
        $region21: #{tpu_custom_call.1} parent=11 // pred_check
          %p237 = pneg %p106
        $region22: #{tpu_custom_call.1} parent=11 // pred_check_branch
          %239 = sbr.rel (%p237) target = $region24
        $region23: #{tpu_custom_call.1} parent=11 // pred_region
          _
        $region24: #{tpu_custom_call.1} parent=11 // pred_fallthru
          _
        // Predicated region
        $region25: #{tpu_custom_call.1} parent=11 // pred_check
          %p240 = pneg %p127
        $region26: #{tpu_custom_call.1} parent=11 // pred_check_branch
          %242 = sbr.rel (%p240) target = $region28
        $region27: #{tpu_custom_call.1} parent=11 // pred_region
          _
        $region28: #{tpu_custom_call.1} parent=11 // pred_fallthru
          _
        // Predicated region
        $region29: #{tpu_custom_call.1} parent=11 // pred_check
          %p243 = pneg %p148
        $region30: #{tpu_custom_call.1} parent=11 // pred_check_branch
          %245 = sbr.rel (%p243) target = $region32
        $region31: #{tpu_custom_call.1} parent=11 // pred_region
          _
        $region32: #{tpu_custom_call.1} parent=11 // pred_fallthru
          _
        // Predicated region
        $region33: #{tpu_custom_call.1} parent=11 // pred_check
          %p246 = pneg %p169
        $region34: #{tpu_custom_call.1} parent=11 // pred_check_branch
          %248 = sbr.rel (%p246) target = $region36
        $region35: #{tpu_custom_call.1} parent=11 // pred_region
          _
        $region36: #{tpu_custom_call.1} parent=11 // pred_fallthru
          _
        // Predicated region
        $region37: #{tpu_custom_call.1} parent=11 // pred_check
          %p249 = pneg %p190
        $region38: #{tpu_custom_call.1} parent=11 // pred_check_branch
          %251 = sbr.rel (%p249) target = $region40
        $region39: #{tpu_custom_call.1} parent=11 // pred_region
          _
        $region40: #{tpu_custom_call.1} parent=11 // pred_fallthru
          _
      $region12: #{tpu_custom_call.1} parent=5 // pred_fallthru
        _
      %p252 = scmp.lt.s32.totalorder %s17, 2
      // Predicated region
      $region41: #{tpu_custom_call.1} parent=5 // pred_check
        %p253 = pneg %p252
      $region42: #{tpu_custom_call.1} parent=5 // pred_check_branch
        %255 = sbr.rel (%p253) target = $region44
      $region43: #{tpu_custom_call.1} parent=5 // pred_region
        // Predicated region
        $region45: #{tpu_custom_call.1} parent=43 // pred_check
          %p256 = pneg %p37
        $region46: #{tpu_custom_call.1} parent=43 // pred_check_branch
          %258 = sbr.rel (%p256) target = $region48
        $region47: #{tpu_custom_call.1} parent=43 // pred_region
          %s259 = smul.u32 32, %s17
          %p260 = scmp.lt.s32.totalorder %s259, 63
          %s261 = scalar_select %p260, %s259, 63
          %s262 = smul.addr %s261, 4
          %s263 = scalar_lea.vmem %s0, %s262
          %s264 = smul.u32 32, %s17
        $region48: #{tpu_custom_call.1} parent=43 // pred_fallthru
          _
      $region44: #{tpu_custom_call.1} parent=5 // pred_fallthru
        _
      %p265 = scmp.le.s32.totalorder 1, %s17
      %p266 = scmp.lt.s32.totalorder %s17, 3
      %p267 = pnand %p265, %p266
      %p268 = pneg %p267
      // Predicated region
      $region49: #{tpu_custom_call.1} parent=5 // pred_check
        _
      $region50: #{tpu_custom_call.1} parent=5 // pred_check_branch
        %270 = sbr.rel (%p267) target = $region52
      $region51: #{tpu_custom_call.1} parent=5 // pred_region
        %s271 = ssub.s32 %s17, 1
        %s272 = smul.u32 32, %s22
        %p273 = scmp.lt.s32.totalorder %s272, 63
        %s274 = scalar_select %p273, %s272, 63
        %s275 = smul.addr %s274, 4
        %s276 = scalar_lea.vmem %s0, %s275
        %p277 = pneg %p43
        %p278 = pneg %p40
        %p279 = pneg %p64
        %p280 = pneg %p61
        %p281 = pneg %p85
        %p282 = pneg %p82
        %p283 = pneg %p106
        %p284 = pneg %p103
        %p285 = pneg %p127
        %p286 = pneg %p124
        %p287 = pneg %p148
        %p288 = pneg %p145
        %p289 = pneg %p169
        %p290 = pneg %p166
        %p291 = pneg %p190
        %p292 = pneg %p187
        %p293 = pneg %p216
        %p294 = pneg %p213
        %s295 = sand.u32 %s203, 1
        %s296 = scalar_lea.sflag [#allocation3], %s295
        %s297 = sand.u32 %s203, 1
        %s298 = smul.addr %s297, 256
        %s299 = scalar_lea.vmem [#allocation2], %s298
        %s300 = smul.u32 32, %s22
        %p301 = scmp.lt.s32.totalorder %s300, 63
        %s302 = scalar_select %p301, %s300, 63
        %s303 = smul.addr %s302, 4
        %s304 = scalar_lea.vmem %s0, %s303
        %s305 = smul.u32 32, %s22
        %s306 = smul.u32 32, %s22
        %v308 = vld [vmem:[%s304] sm:$0xf]
        %v309 = vld [vmem:[%s304 + $0x4] sm:$0xf]
        %v310 = vld [vmem:[%s304 + $0x8] sm:$0xf]
        %v311 = vld [vmem:[%s304 + $0xc] sm:$0xf]
        %v312 = vld [vmem:[%s304 + $0x10] sm:$0xf]
        %v313 = vld [vmem:[%s304 + $0x14] sm:$0xf]
        %v314 = vld [vmem:[%s304 + $0x18] sm:$0xf]
        %v315 = vld [vmem:[%s304 + $0x1c] sm:$0xf]
        %v316 = vld [vmem:[%s304 + $0x20] sm:$0xf]
        %v317 = vld [vmem:[%s304 + $0x24] sm:$0xf]
        %v318 = vld [vmem:[%s304 + $0x28] sm:$0xf]
        %v319 = vld [vmem:[%s304 + $0x2c] sm:$0xf]
        %v320 = vld [vmem:[%s304 + $0x30] sm:$0xf]
        %v321 = vld [vmem:[%s304 + $0x34] sm:$0xf]
        %v322 = vld [vmem:[%s304 + $0x38] sm:$0xf]
        %v323 = vld [vmem:[%s304 + $0x3c] sm:$0xf]
        %v324 = vld [vmem:[%s304 + $0x40] sm:$0xf]
        %v325 = vld [vmem:[%s304 + $0x44] sm:$0xf]
        %v326 = vld [vmem:[%s304 + $0x48] sm:$0xf]
        %v327 = vld [vmem:[%s304 + $0x4c] sm:$0xf]
        %v328 = vld [vmem:[%s304 + $0x50] sm:$0xf]
        %v329 = vld [vmem:[%s304 + $0x54] sm:$0xf]
        %v330 = vld [vmem:[%s304 + $0x58] sm:$0xf]
        %v331 = vld [vmem:[%s304 + $0x5c] sm:$0xf]
        %v332 = vld [vmem:[%s304 + $0x60] sm:$0xf]
        %v333 = vld [vmem:[%s304 + $0x64] sm:$0xf]
        %v334 = vld [vmem:[%s304 + $0x68] sm:$0xf]
        %v335 = vld [vmem:[%s304 + $0x6c] sm:$0xf]
        %v336 = vld [vmem:[%s304 + $0x70] sm:$0xf]
        %v337 = vld [vmem:[%s304 + $0x74] sm:$0xf]
        %v338 = vld [vmem:[%s304 + $0x78] sm:$0xf]
        %v339 = vld [vmem:[%s304 + $0x7c] sm:$0xf]
        %v340 = vld [vmem:[%s1] sm:$0xf]
        %v341 = vld [vmem:[%s1 + $0x4] sm:$0xf]
        %v342 = vld [vmem:[%s1 + $0x8] sm:$0xf]
        %v343 = vld [vmem:[%s1 + $0xc] sm:$0xf]
        %v344 = vld [vmem:[%s2] sm:$0x1]
        %v346 = vlaneseq
        %v347 = vshrl.u32 %v346, 7
        %v348 = vsub.s32 0, %v347
        %v349 = vrot.slane %v344, %v348
        %v383 = vunpack.c.l.b16 %v308
        %v384 = vunpack.c.l.b16 %v309
        %v385 = vunpack.c.l.b16 %v310
        %v386 = vunpack.c.l.b16 %v311
        %v387 = vunpack.c.l.b16 %v312
        %v388 = vunpack.c.l.b16 %v313
        %v389 = vunpack.c.l.b16 %v314
        %v390 = vunpack.c.l.b16 %v315
        %v391 = vunpack.c.l.b16 %v316
        %v392 = vunpack.c.l.b16 %v317
        %v393 = vunpack.c.l.b16 %v318
        %v394 = vunpack.c.l.b16 %v319
        %v395 = vunpack.c.l.b16 %v320
        %v396 = vunpack.c.l.b16 %v321
        %v397 = vunpack.c.l.b16 %v322
        %v398 = vunpack.c.l.b16 %v323
        %v399 = vunpack.c.l.b16 %v324
        %v400 = vunpack.c.l.b16 %v325
        %v401 = vunpack.c.l.b16 %v326
        %v402 = vunpack.c.l.b16 %v327
        %v403 = vunpack.c.l.b16 %v328
        %v404 = vunpack.c.l.b16 %v329
        %v405 = vunpack.c.l.b16 %v330
        %v406 = vunpack.c.l.b16 %v331
        %v407 = vunpack.c.l.b16 %v332
        %v408 = vunpack.c.l.b16 %v333
        %v409 = vunpack.c.l.b16 %v334
        %v410 = vunpack.c.l.b16 %v335
        %v411 = vunpack.c.l.b16 %v336
        %v412 = vunpack.c.l.b16 %v337
        %v413 = vunpack.c.l.b16 %v338
        %v414 = vunpack.c.l.b16 %v339
        %v415 = vpack.c.b16 %v384, %v383
        %v416 = vpack.c.b16 %v386, %v385
        %v417 = vpack.c.b16 %v388, %v387
        %v418 = vpack.c.b16 %v390, %v389
        %v419 = vpack.c.b16 %v392, %v391
        %v420 = vpack.c.b16 %v394, %v393
        %v421 = vpack.c.b16 %v396, %v395
        %v422 = vpack.c.b16 %v398, %v397
        %v423 = vpack.c.b16 %v400, %v399
        %v424 = vpack.c.b16 %v402, %v401
        %v425 = vpack.c.b16 %v404, %v403
        %v426 = vpack.c.b16 %v406, %v405
        %v427 = vpack.c.b16 %v408, %v407
        %v428 = vpack.c.b16 %v410, %v409
        %v429 = vpack.c.b16 %v412, %v411
        %v430 = vpack.c.b16 %v414, %v413
        %v435 = vunpack.c.l.b16 %v340
        %v436 = vunpack.c.l.b16 %v341
        %v437 = vunpack.c.l.b16 %v342
        %v438 = vunpack.c.l.b16 %v343
        %v439 = vpack.c.b16 %v436, %v435
        %v440 = vpack.c.b16 %v438, %v437
        %vm443 = vcmask 261120
        %v445 = vsel %vm443, %v415, 0
        %v448 = vsel %vm443, %v416, 0
        %v451 = vsel %vm443, %v417, 0
        %v454 = vsel %vm443, %v418, 0
        %v457 = vsel %vm443, %v419, 0
        %v460 = vsel %vm443, %v420, 0
        %v463 = vsel %vm443, %v421, 0
        %v466 = vsel %vm443, %v422, 0
        %v469 = vsel %vm443, %v423, 0
        %v472 = vsel %vm443, %v424, 0
        %v475 = vsel %vm443, %v425, 0
        %v478 = vsel %vm443, %v426, 0
        %v481 = vsel %vm443, %v427, 0
        %v484 = vsel %vm443, %v428, 0
        %v487 = vsel %vm443, %v429, 0
        %v490 = vsel %vm443, %v430, 0
        %492 = vmatprep.subr.bf16.mxu0 0
        %493 = vmatpush1.bf16.msra.mxu0 %v439
        %494 = vmatprep.subr.bf16.mxu0 0
        %495 = vmatpush1.bf16.msra.mxu0 %v440
        %496 = vmatprep.subr.bf16.mxu0 0
        %497 = vmatpush1.bf16.msra.mxu0 0
        %498 = vmatprep.subr.bf16.mxu0 0
        %499 = vmatpush1.bf16.msra.mxu0 0
        %500 = vmatprep.subr.bf16.mxu0 0
        %501 = vmatpush1.bf16.msra.mxu0 0
        %502 = vmatprep.subr.bf16.mxu0 0
        %503 = vmatpush1.bf16.msra.mxu0 0
        %504 = vmatprep.subr.bf16.mxu0 0
        %505 = vmatpush1.bf16.msra.mxu0 0
        %506 = vmatprep.subr.bf16.mxu0 0
        %507 = vmatpush1.bf16.msra.mxu0 0
        %508 = vmatprep.subr.bf16.mxu0 0
        %509 = vmatpush1.bf16.msra.mxu0 0
        %510 = vmatprep.subr.bf16.mxu0 0
        %511 = vmatpush1.bf16.msra.mxu0 0
        %512 = vmatprep.subr.bf16.mxu0 0
        %513 = vmatpush1.bf16.msra.mxu0 0
        %514 = vmatprep.subr.bf16.mxu0 0
        %515 = vmatpush1.bf16.msra.mxu0 0
        %516 = vmatprep.subr.bf16.mxu0 0
        %517 = vmatpush1.bf16.msra.mxu0 0
        %518 = vmatprep.subr.bf16.mxu0 0
        %519 = vmatpush1.bf16.msra.mxu0 0
        %520 = vmatprep.subr.bf16.mxu0 0
        %521 = vmatpush1.bf16.msra.mxu0 0
        %522 = vmatprep.subr.bf16.mxu0 0
        %523 = vmatpush1.bf16.msra.mxu0 0
        %524 = vmatprep.mubr.bf16.mxu0 0
        %525 = vmatmul.mubr.bf16.gmra.mrb[0].mxu0 %v445
        %v526 = vpop.f32.mrb[0].mxu0
        %v527 = vadd.f32 %v349, %v526
        %v528 = vpop.f32.mrb[0].mxu0
        %v529 = vpop.f32.mrb[0].mxu0
        %v530 = vadd.f32 %v349, %v529
        %v531 = vpop.f32.mrb[0].mxu0
        %532 = vmatprep.mubr.bf16.mxu0 0
        %533 = vmatmul.mubr.bf16.gmra.mrb[0].mxu0 %v448
        %v534 = vpop.f32.mrb[0].mxu0
        %v535 = vadd.f32 %v349, %v534
        %v536 = vpop.f32.mrb[0].mxu0
        %v537 = vpop.f32.mrb[0].mxu0
        %v538 = vadd.f32 %v349, %v537
        %v539 = vpop.f32.mrb[0].mxu0
        %540 = vmatprep.mubr.bf16.mxu0 0
        %541 = vmatmul.mubr.bf16.gmra.mrb[0].mxu0 %v451
        %v542 = vpop.f32.mrb[0].mxu0
        %v543 = vadd.f32 %v349, %v542
        %v544 = vpop.f32.mrb[0].mxu0
        %v545 = vpop.f32.mrb[0].mxu0
        %v546 = vadd.f32 %v349, %v545
        %v547 = vpop.f32.mrb[0].mxu0
        %548 = vmatprep.mubr.bf16.mxu0 0
        %549 = vmatmul.mubr.bf16.gmra.mrb[0].mxu0 %v454
        %v550 = vpop.f32.mrb[0].mxu0
        %v551 = vadd.f32 %v349, %v550
        %v552 = vpop.f32.mrb[0].mxu0
        %v553 = vpop.f32.mrb[0].mxu0
        %v554 = vadd.f32 %v349, %v553
        %v555 = vpop.f32.mrb[0].mxu0
        %556 = vmatprep.mubr.bf16.mxu0 0
        %557 = vmatmul.mubr.bf16.gmra.mrb[0].mxu0 %v457
        %v558 = vpop.f32.mrb[0].mxu0
        %v559 = vadd.f32 %v349, %v558
        %v560 = vpop.f32.mrb[0].mxu0
        %v561 = vpop.f32.mrb[0].mxu0
        %v562 = vadd.f32 %v349, %v561
        %v563 = vpop.f32.mrb[0].mxu0
        %564 = vmatprep.mubr.bf16.mxu0 0
        %565 = vmatmul.mubr.bf16.gmra.mrb[0].mxu0 %v460
        %v566 = vpop.f32.mrb[0].mxu0
        %v567 = vadd.f32 %v349, %v566
        %v568 = vpop.f32.mrb[0].mxu0
        %v569 = vpop.f32.mrb[0].mxu0
        %v570 = vadd.f32 %v349, %v569
        %v571 = vpop.f32.mrb[0].mxu0
        %572 = vmatprep.mubr.bf16.mxu0 0
        %573 = vmatmul.mubr.bf16.gmra.mrb[0].mxu0 %v463
        %v574 = vpop.f32.mrb[0].mxu0
        %v575 = vadd.f32 %v349, %v574
        %v576 = vpop.f32.mrb[0].mxu0
        %v577 = vpop.f32.mrb[0].mxu0
        %v578 = vadd.f32 %v349, %v577
        %v579 = vpop.f32.mrb[0].mxu0
        %580 = vmatprep.mubr.bf16.mxu0 0
        %581 = vmatmul.mubr.bf16.gmra.mrb[0].mxu0 %v466
        %v582 = vpop.f32.mrb[0].mxu0
        %v583 = vadd.f32 %v349, %v582
        %v584 = vpop.f32.mrb[0].mxu0
        %v585 = vpop.f32.mrb[0].mxu0
        %v586 = vadd.f32 %v349, %v585
        %v587 = vpop.f32.mrb[0].mxu0
        %588 = vmatprep.mubr.bf16.mxu0 0
        %589 = vmatmul.mubr.bf16.gmra.mrb[0].mxu0 %v469
        %v590 = vpop.f32.mrb[0].mxu0
        %v591 = vadd.f32 %v349, %v590
        %v592 = vpop.f32.mrb[0].mxu0
        %v593 = vpop.f32.mrb[0].mxu0
        %v594 = vadd.f32 %v349, %v593
        %v595 = vpop.f32.mrb[0].mxu0
        %596 = vmatprep.mubr.bf16.mxu0 0
        %597 = vmatmul.mubr.bf16.gmra.mrb[0].mxu0 %v472
        %v598 = vpop.f32.mrb[0].mxu0
        %v599 = vadd.f32 %v349, %v598
        %v600 = vpop.f32.mrb[0].mxu0
        %v601 = vpop.f32.mrb[0].mxu0
        %v602 = vadd.f32 %v349, %v601
        %v603 = vpop.f32.mrb[0].mxu0
        %604 = vmatprep.mubr.bf16.mxu0 0
        %605 = vmatmul.mubr.bf16.gmra.mrb[0].mxu0 %v475
        %v606 = vpop.f32.mrb[0].mxu0
        %v607 = vadd.f32 %v349, %v606
        %v608 = vpop.f32.mrb[0].mxu0
        %v609 = vpop.f32.mrb[0].mxu0
        %v610 = vadd.f32 %v349, %v609
        %v611 = vpop.f32.mrb[0].mxu0
        %612 = vmatprep.mubr.bf16.mxu0 0
        %613 = vmatmul.mubr.bf16.gmra.mrb[0].mxu0 %v478
        %v614 = vpop.f32.mrb[0].mxu0
        %v615 = vadd.f32 %v349, %v614
        %v616 = vpop.f32.mrb[0].mxu0
        %v617 = vpop.f32.mrb[0].mxu0
        %v618 = vadd.f32 %v349, %v617
        %v619 = vpop.f32.mrb[0].mxu0
        %620 = vmatprep.mubr.bf16.mxu0 0
        %621 = vmatmul.mubr.bf16.gmra.mrb[0].mxu0 %v481
        %v622 = vpop.f32.mrb[0].mxu0
        %v623 = vadd.f32 %v349, %v622
        %v624 = vpop.f32.mrb[0].mxu0
        %v625 = vpop.f32.mrb[0].mxu0
        %v626 = vadd.f32 %v349, %v625
        %v627 = vpop.f32.mrb[0].mxu0
        %628 = vmatprep.mubr.bf16.mxu0 0
        %629 = vmatmul.mubr.bf16.gmra.mrb[0].mxu0 %v484
        %v630 = vpop.f32.mrb[0].mxu0
        %v631 = vadd.f32 %v349, %v630
        %v632 = vpop.f32.mrb[0].mxu0
        %v633 = vpop.f32.mrb[0].mxu0
        %v634 = vadd.f32 %v349, %v633
        %v635 = vpop.f32.mrb[0].mxu0
        %636 = vmatprep.mubr.bf16.mxu0 0
        %637 = vmatmul.mubr.bf16.gmra.mrb[0].mxu0 %v487
        %v638 = vpop.f32.mrb[0].mxu0
        %v639 = vadd.f32 %v349, %v638
        %v640 = vpop.f32.mrb[0].mxu0
        %v641 = vpop.f32.mrb[0].mxu0
        %v642 = vadd.f32 %v349, %v641
        %v643 = vpop.f32.mrb[0].mxu0
        %644 = vmatprep.mubr.bf16.mxu0 0
        %645 = vmatmul.mubr.bf16.gmra.mrb[0].mxu0 %v490
        %v646 = vpop.f32.mrb[0].mxu0
        %v647 = vadd.f32 %v349, %v646
        %v648 = vpop.f32.mrb[0].mxu0
        %v649 = vpop.f32.mrb[0].mxu0
        %v650 = vadd.f32 %v349, %v649
        %v651 = vpop.f32.mrb[0].mxu0
        %652 = vdwg.mxu0
        %v653 = vmax.f32 %v527, 0.0
        %v654 = vmax.f32 %v530, 0.0
        %v655 = vmax.f32 %v535, 0.0
        %v656 = vmax.f32 %v538, 0.0
        %v657 = vmax.f32 %v543, 0.0
        %v658 = vmax.f32 %v546, 0.0
        %v659 = vmax.f32 %v551, 0.0
        %v660 = vmax.f32 %v554, 0.0
        %v661 = vmax.f32 %v559, 0.0
        %v662 = vmax.f32 %v562, 0.0
        %v663 = vmax.f32 %v567, 0.0
        %v664 = vmax.f32 %v570, 0.0
        %v665 = vmax.f32 %v575, 0.0
        %v666 = vmax.f32 %v578, 0.0
        %v667 = vmax.f32 %v583, 0.0
        %v668 = vmax.f32 %v586, 0.0
        %v669 = vmax.f32 %v591, 0.0
        %v670 = vmax.f32 %v594, 0.0
        %v671 = vmax.f32 %v599, 0.0
        %v672 = vmax.f32 %v602, 0.0
        %v673 = vmax.f32 %v607, 0.0
        %v674 = vmax.f32 %v610, 0.0
        %v675 = vmax.f32 %v615, 0.0
        %v676 = vmax.f32 %v618, 0.0
        %v677 = vmax.f32 %v623, 0.0
        %v678 = vmax.f32 %v626, 0.0
        %v679 = vmax.f32 %v631, 0.0
        %v680 = vmax.f32 %v634, 0.0
        %v681 = vmax.f32 %v639, 0.0
        %v682 = vmax.f32 %v642, 0.0
        %v683 = vmax.f32 %v647, 0.0
        %v684 = vmax.f32 %v650, 0.0
        %v685 = vlaneseq
        %v686 = vshrl.u32 %v685, 7
        %v687 = vadd.s32 %v686, 8
        %v688 = vadd.s32 %v686, 16
        %v689 = vadd.s32 %v686, 24
        %v690 = vadd.s32 %v686, 32
        %v691 = vadd.s32 %v686, 40
        %v692 = vadd.s32 %v686, 48
        %v693 = vadd.s32 %v686, 56
        %v694 = vadd.s32 %v686, 64
        %v695 = vadd.s32 %v686, 72
        %v696 = vadd.s32 %v686, 80
        %v697 = vadd.s32 %v686, 88
        %v698 = vadd.s32 %v686, 96
        %v699 = vadd.s32 %v686, 104
        %v700 = vadd.s32 %v686, 112
        %v701 = vadd.s32 %v686, 120
        %v702 = vadd.s32 %v686, 128
        %v703 = vadd.s32 %v686, 136
        %v704 = vadd.s32 %v686, 144
        %v705 = vadd.s32 %v686, 152
        %v706 = vadd.s32 %v686, 160
        %v707 = vadd.s32 %v686, 168
        %v708 = vadd.s32 %v686, 176
        %v709 = vadd.s32 %v686, 184
        %v710 = vadd.s32 %v686, 192
        %v711 = vadd.s32 %v686, 200
        %v712 = vadd.s32 %v686, 208
        %v713 = vadd.s32 %v686, 216
        %v714 = vadd.s32 %v686, 224
        %v715 = vadd.s32 %v686, 232
        %v716 = vadd.s32 %v686, 240
        %v717 = vadd.s32 %v686, 248
        %vm718 = vcmp.lt.s32.totalorder %v686, 0
        %v719 = vsub.s32 0, %v686
        %v720 = vsel %vm718, %v719, %v686
        %v721 = vshrl.u32 %v720, 8
        %v722 = vand.u32 %v720, 255
        %v723 = vsub.s32 0, %v722
        %v724 = vsel %vm718, %v723, %v722
        %vm725 = vcmp.lt.s32.totalorder %v687, 0
        %v726 = vsub.s32 0, %v687
        %v727 = vsel %vm725, %v726, %v687
        %v728 = vshrl.u32 %v727, 8
        %v729 = vand.u32 %v727, 255
        %v730 = vsub.s32 0, %v729
        %v731 = vsel %vm725, %v730, %v729
        %vm732 = vcmp.lt.s32.totalorder %v688, 0
        %v733 = vsub.s32 0, %v688
        %v734 = vsel %vm732, %v733, %v688
        %v735 = vshrl.u32 %v734, 8
        %v736 = vand.u32 %v734, 255
        %v737 = vsub.s32 0, %v736
        %v738 = vsel %vm732, %v737, %v736
        %vm739 = vcmp.lt.s32.totalorder %v689, 0
        %v740 = vsub.s32 0, %v689
        %v741 = vsel %vm739, %v740, %v689
        %v742 = vshrl.u32 %v741, 8
        %v743 = vand.u32 %v741, 255
        %v744 = vsub.s32 0, %v743
        %v745 = vsel %vm739, %v744, %v743
        %vm746 = vcmp.lt.s32.totalorder %v690, 0
        %v747 = vsub.s32 0, %v690
        %v748 = vsel %vm746, %v747, %v690
        %v749 = vshrl.u32 %v748, 8
        %v750 = vand.u32 %v748, 255
        %v751 = vsub.s32 0, %v750
        %v752 = vsel %vm746, %v751, %v750
        %vm753 = vcmp.lt.s32.totalorder %v691, 0
        %v754 = vsub.s32 0, %v691
        %v755 = vsel %vm753, %v754, %v691
        %v756 = vshrl.u32 %v755, 8
        %v757 = vand.u32 %v755, 255
        %v758 = vsub.s32 0, %v757
        %v759 = vsel %vm753, %v758, %v757
        %vm760 = vcmp.lt.s32.totalorder %v692, 0
        %v761 = vsub.s32 0, %v692
        %v762 = vsel %vm760, %v761, %v692
        %v763 = vshrl.u32 %v762, 8
        %v764 = vand.u32 %v762, 255
        %v765 = vsub.s32 0, %v764
        %v766 = vsel %vm760, %v765, %v764
        %vm767 = vcmp.lt.s32.totalorder %v693, 0
        %v768 = vsub.s32 0, %v693
        %v769 = vsel %vm767, %v768, %v693
        %v770 = vshrl.u32 %v769, 8
        %v771 = vand.u32 %v769, 255
        %v772 = vsub.s32 0, %v771
        %v773 = vsel %vm767, %v772, %v771
        %vm774 = vcmp.lt.s32.totalorder %v694, 0
        %v775 = vsub.s32 0, %v694
        %v776 = vsel %vm774, %v775, %v694
        %v777 = vshrl.u32 %v776, 8
        %v778 = vand.u32 %v776, 255
        %v779 = vsub.s32 0, %v778
        %v780 = vsel %vm774, %v779, %v778
        %vm781 = vcmp.lt.s32.totalorder %v695, 0
        %v782 = vsub.s32 0, %v695
        %v783 = vsel %vm781, %v782, %v695
        %v784 = vshrl.u32 %v783, 8
        %v785 = vand.u32 %v783, 255
        %v786 = vsub.s32 0, %v785
        %v787 = vsel %vm781, %v786, %v785
        %vm788 = vcmp.lt.s32.totalorder %v696, 0
        %v789 = vsub.s32 0, %v696
        %v790 = vsel %vm788, %v789, %v696
        %v791 = vshrl.u32 %v790, 8
        %v792 = vand.u32 %v790, 255
        %v793 = vsub.s32 0, %v792
        %v794 = vsel %vm788, %v793, %v792
        %vm795 = vcmp.lt.s32.totalorder %v697, 0
        %v796 = vsub.s32 0, %v697
        %v797 = vsel %vm795, %v796, %v697
        %v798 = vshrl.u32 %v797, 8
        %v799 = vand.u32 %v797, 255
        %v800 = vsub.s32 0, %v799
        %v801 = vsel %vm795, %v800, %v799
        %vm802 = vcmp.lt.s32.totalorder %v698, 0
        %v803 = vsub.s32 0, %v698
        %v804 = vsel %vm802, %v803, %v698
        %v805 = vshrl.u32 %v804, 8
        %v806 = vand.u32 %v804, 255
        %v807 = vsub.s32 0, %v806
        %v808 = vsel %vm802, %v807, %v806
        %vm809 = vcmp.lt.s32.totalorder %v699, 0
        %v810 = vsub.s32 0, %v699
        %v811 = vsel %vm809, %v810, %v699
        %v812 = vshrl.u32 %v811, 8
        %v813 = vand.u32 %v811, 255
        %v814 = vsub.s32 0, %v813
        %v815 = vsel %vm809, %v814, %v813
        %vm816 = vcmp.lt.s32.totalorder %v700, 0
        %v817 = vsub.s32 0, %v700
        %v818 = vsel %vm816, %v817, %v700
        %v819 = vshrl.u32 %v818, 8
        %v820 = vand.u32 %v818, 255
        %v821 = vsub.s32 0, %v820
        %v822 = vsel %vm816, %v821, %v820
        %vm823 = vcmp.lt.s32.totalorder %v701, 0
        %v824 = vsub.s32 0, %v701
        %v825 = vsel %vm823, %v824, %v701
        %v826 = vshrl.u32 %v825, 8
        %v827 = vand.u32 %v825, 255
        %v828 = vsub.s32 0, %v827
        %v829 = vsel %vm823, %v828, %v827
        %vm830 = vcmp.lt.s32.totalorder %v702, 0
        %v831 = vsub.s32 0, %v702
        %v832 = vsel %vm830, %v831, %v702
        %v833 = vshrl.u32 %v832, 8
        %v834 = vand.u32 %v832, 255
        %v835 = vsub.s32 0, %v834
        %v836 = vsel %vm830, %v835, %v834
        %vm837 = vcmp.lt.s32.totalorder %v703, 0
        %v838 = vsub.s32 0, %v703
        %v839 = vsel %vm837, %v838, %v703
        %v840 = vshrl.u32 %v839, 8
        %v841 = vand.u32 %v839, 255
        %v842 = vsub.s32 0, %v841
        %v843 = vsel %vm837, %v842, %v841
        %vm844 = vcmp.lt.s32.totalorder %v704, 0
        %v845 = vsub.s32 0, %v704
        %v846 = vsel %vm844, %v845, %v704
        %v847 = vshrl.u32 %v846, 8
        %v848 = vand.u32 %v846, 255
        %v849 = vsub.s32 0, %v848
        %v850 = vsel %vm844, %v849, %v848
        %vm851 = vcmp.lt.s32.totalorder %v705, 0
        %v852 = vsub.s32 0, %v705
        %v853 = vsel %vm851, %v852, %v705
        %v854 = vshrl.u32 %v853, 8
        %v855 = vand.u32 %v853, 255
        %v856 = vsub.s32 0, %v855
        %v857 = vsel %vm851, %v856, %v855
        %vm858 = vcmp.lt.s32.totalorder %v706, 0
        %v859 = vsub.s32 0, %v706
        %v860 = vsel %vm858, %v859, %v706
        %v861 = vshrl.u32 %v860, 8
        %v862 = vand.u32 %v860, 255
        %v863 = vsub.s32 0, %v862
        %v864 = vsel %vm858, %v863, %v862
        %vm865 = vcmp.lt.s32.totalorder %v707, 0
        %v866 = vsub.s32 0, %v707
        %v867 = vsel %vm865, %v866, %v707
        %v868 = vshrl.u32 %v867, 8
        %v869 = vand.u32 %v867, 255
        %v870 = vsub.s32 0, %v869
        %v871 = vsel %vm865, %v870, %v869
        %vm872 = vcmp.lt.s32.totalorder %v708, 0
        %v873 = vsub.s32 0, %v708
        %v874 = vsel %vm872, %v873, %v708
        %v875 = vshrl.u32 %v874, 8
        %v876 = vand.u32 %v874, 255
        %v877 = vsub.s32 0, %v876
        %v878 = vsel %vm872, %v877, %v876
        %vm879 = vcmp.lt.s32.totalorder %v709, 0
        %v880 = vsub.s32 0, %v709
        %v881 = vsel %vm879, %v880, %v709
        %v882 = vshrl.u32 %v881, 8
        %v883 = vand.u32 %v881, 255
        %v884 = vsub.s32 0, %v883
        %v885 = vsel %vm879, %v884, %v883
        %vm886 = vcmp.lt.s32.totalorder %v710, 0
        %v887 = vsub.s32 0, %v710
        %v888 = vsel %vm886, %v887, %v710
        %v889 = vshrl.u32 %v888, 8
        %v890 = vand.u32 %v888, 255
        %v891 = vsub.s32 0, %v890
        %v892 = vsel %vm886, %v891, %v890
        %vm893 = vcmp.lt.s32.totalorder %v711, 0
        %v894 = vsub.s32 0, %v711
        %v895 = vsel %vm893, %v894, %v711
        %v896 = vshrl.u32 %v895, 8
        %v897 = vand.u32 %v895, 255
        %v898 = vsub.s32 0, %v897
        %v899 = vsel %vm893, %v898, %v897
        %vm900 = vcmp.lt.s32.totalorder %v712, 0
        %v901 = vsub.s32 0, %v712
        %v902 = vsel %vm900, %v901, %v712
        %v903 = vshrl.u32 %v902, 8
        %v904 = vand.u32 %v902, 255
        %v905 = vsub.s32 0, %v904
        %v906 = vsel %vm900, %v905, %v904
        %vm907 = vcmp.lt.s32.totalorder %v713, 0
        %v908 = vsub.s32 0, %v713
        %v909 = vsel %vm907, %v908, %v713
        %v910 = vshrl.u32 %v909, 8
        %v911 = vand.u32 %v909, 255
        %v912 = vsub.s32 0, %v911
        %v913 = vsel %vm907, %v912, %v911
        %vm914 = vcmp.lt.s32.totalorder %v714, 0
        %v915 = vsub.s32 0, %v714
        %v916 = vsel %vm914, %v915, %v714
        %v917 = vshrl.u32 %v916, 8
        %v918 = vand.u32 %v916, 255
        %v919 = vsub.s32 0, %v918
        %v920 = vsel %vm914, %v919, %v918
        %vm921 = vcmp.lt.s32.totalorder %v715, 0
        %v922 = vsub.s32 0, %v715
        %v923 = vsel %vm921, %v922, %v715
        %v924 = vshrl.u32 %v923, 8
        %v925 = vand.u32 %v923, 255
        %v926 = vsub.s32 0, %v925
        %v927 = vsel %vm921, %v926, %v925
        %vm928 = vcmp.lt.s32.totalorder %v716, 0
        %v929 = vsub.s32 0, %v716
        %v930 = vsel %vm928, %v929, %v716
        %v931 = vshrl.u32 %v930, 8
        %v932 = vand.u32 %v930, 255
        %v933 = vsub.s32 0, %v932
        %v934 = vsel %vm928, %v933, %v932
        %vm935 = vcmp.lt.s32.totalorder %v717, 0
        %v936 = vsub.s32 0, %v717
        %v937 = vsel %vm935, %v936, %v717
        %v938 = vshrl.u32 %v937, 8
        %v939 = vand.u32 %v937, 255
        %v940 = vsub.s32 0, %v939
        %v941 = vsel %vm935, %v940, %v939
        %vm942 = vcmp.ne.s32.totalorder %v724, 0
        %vm943 = vcmp.ne.s32.totalorder %v731, 0
        %vm944 = vcmp.ne.s32.totalorder %v738, 0
        %vm945 = vcmp.ne.s32.totalorder %v745, 0
        %vm946 = vcmp.ne.s32.totalorder %v752, 0
        %vm947 = vcmp.ne.s32.totalorder %v759, 0
        %vm948 = vcmp.ne.s32.totalorder %v766, 0
        %vm949 = vcmp.ne.s32.totalorder %v773, 0
        %vm950 = vcmp.ne.s32.totalorder %v780, 0
        %vm951 = vcmp.ne.s32.totalorder %v787, 0
        %vm952 = vcmp.ne.s32.totalorder %v794, 0
        %vm953 = vcmp.ne.s32.totalorder %v801, 0
        %vm954 = vcmp.ne.s32.totalorder %v808, 0
        %vm955 = vcmp.ne.s32.totalorder %v815, 0
        %vm956 = vcmp.ne.s32.totalorder %v822, 0
        %vm957 = vcmp.ne.s32.totalorder %v829, 0
        %vm958 = vcmp.ne.s32.totalorder %v836, 0
        %vm959 = vcmp.ne.s32.totalorder %v843, 0
        %vm960 = vcmp.ne.s32.totalorder %v850, 0
        %vm961 = vcmp.ne.s32.totalorder %v857, 0
        %vm962 = vcmp.ne.s32.totalorder %v864, 0
        %vm963 = vcmp.ne.s32.totalorder %v871, 0
        %vm964 = vcmp.ne.s32.totalorder %v878, 0
        %vm965 = vcmp.ne.s32.totalorder %v885, 0
        %vm966 = vcmp.ne.s32.totalorder %v892, 0
        %vm967 = vcmp.ne.s32.totalorder %v899, 0
        %vm968 = vcmp.ne.s32.totalorder %v906, 0
        %vm969 = vcmp.ne.s32.totalorder %v913, 0
        %vm970 = vcmp.ne.s32.totalorder %v920, 0
        %vm971 = vcmp.ne.s32.totalorder %v927, 0
        %vm972 = vcmp.ne.s32.totalorder %v934, 0
        %vm973 = vcmp.ne.s32.totalorder %v941, 0
        %vm974 = vcmp.lt.s32.totalorder %v724, 0
        %vm975 = vcmp.lt.s32.totalorder %v731, 0
        %vm976 = vcmp.lt.s32.totalorder %v738, 0
        %vm977 = vcmp.lt.s32.totalorder %v745, 0
        %vm978 = vcmp.lt.s32.totalorder %v752, 0
        %vm979 = vcmp.lt.s32.totalorder %v759, 0
        %vm980 = vcmp.lt.s32.totalorder %v766, 0
        %vm981 = vcmp.lt.s32.totalorder %v773, 0
        %vm982 = vcmp.lt.s32.totalorder %v780, 0
        %vm983 = vcmp.lt.s32.totalorder %v787, 0
        %vm984 = vcmp.lt.s32.totalorder %v794, 0
        %vm985 = vcmp.lt.s32.totalorder %v801, 0
        %vm986 = vcmp.lt.s32.totalorder %v808, 0
        %vm987 = vcmp.lt.s32.totalorder %v815, 0
        %vm988 = vcmp.lt.s32.totalorder %v822, 0
        %vm989 = vcmp.lt.s32.totalorder %v829, 0
        %vm990 = vcmp.lt.s32.totalorder %v836, 0
        %vm991 = vcmp.lt.s32.totalorder %v843, 0
        %vm992 = vcmp.lt.s32.totalorder %v850, 0
        %vm993 = vcmp.lt.s32.totalorder %v857, 0
        %vm994 = vcmp.lt.s32.totalorder %v864, 0
        %vm995 = vcmp.lt.s32.totalorder %v871, 0
        %vm996 = vcmp.lt.s32.totalorder %v878, 0
        %vm997 = vcmp.lt.s32.totalorder %v885, 0
        %vm998 = vcmp.lt.s32.totalorder %v892, 0
        %vm999 = vcmp.lt.s32.totalorder %v899, 0
        %vm1000 = vcmp.lt.s32.totalorder %v906, 0
        %vm1001 = vcmp.lt.s32.totalorder %v913, 0
        %vm1002 = vcmp.lt.s32.totalorder %v920, 0
        %vm1003 = vcmp.lt.s32.totalorder %v927, 0
        %vm1004 = vcmp.lt.s32.totalorder %v934, 0
        %vm1005 = vcmp.lt.s32.totalorder %v941, 0
        %vm1006 = vmand %vm974, %vm942
        %vm1007 = vmand %vm975, %vm943
        %vm1008 = vmand %vm976, %vm944
        %vm1009 = vmand %vm977, %vm945
        %vm1010 = vmand %vm978, %vm946
        %vm1011 = vmand %vm979, %vm947
        %vm1012 = vmand %vm980, %vm948
        %vm1013 = vmand %vm981, %vm949
        %vm1014 = vmand %vm982, %vm950
        %vm1015 = vmand %vm983, %vm951
        %vm1016 = vmand %vm984, %vm952
        %vm1017 = vmand %vm985, %vm953
        %vm1018 = vmand %vm986, %vm954
        %vm1019 = vmand %vm987, %vm955
        %vm1020 = vmand %vm988, %vm956
        %vm1021 = vmand %vm989, %vm957
        %vm1022 = vmand %vm990, %vm958
        %vm1023 = vmand %vm991, %vm959
        %vm1024 = vmand %vm992, %vm960
        %vm1025 = vmand %vm993, %vm961
        %vm1026 = vmand %vm994, %vm962
        %vm1027 = vmand %vm995, %vm963
        %vm1028 = vmand %vm996, %vm964
        %vm1029 = vmand %vm997, %vm965
        %vm1030 = vmand %vm998, %vm966
        %vm1031 = vmand %vm999, %vm967
        %vm1032 = vmand %vm1000, %vm968
        %vm1033 = vmand %vm1001, %vm969
        %vm1034 = vmand %vm1002, %vm970
        %vm1035 = vmand %vm1003, %vm971
        %vm1036 = vmand %vm1004, %vm972
        %vm1037 = vmand %vm1005, %vm973
        %v1038 = vadd.s32 %v724, 256
        %v1039 = vadd.s32 %v731, 256
        %v1040 = vadd.s32 %v738, 256
        %v1041 = vadd.s32 %v745, 256
        %v1042 = vadd.s32 %v752, 256
        %v1043 = vadd.s32 %v759, 256
        %v1044 = vadd.s32 %v766, 256
        %v1045 = vadd.s32 %v773, 256
        %v1046 = vadd.s32 %v780, 256
        %v1047 = vadd.s32 %v787, 256
        %v1048 = vadd.s32 %v794, 256
        %v1049 = vadd.s32 %v801, 256
        %v1050 = vadd.s32 %v808, 256
        %v1051 = vadd.s32 %v815, 256
        %v1052 = vadd.s32 %v822, 256
        %v1053 = vadd.s32 %v829, 256
        %v1054 = vadd.s32 %v836, 256
        %v1055 = vadd.s32 %v843, 256
        %v1056 = vadd.s32 %v850, 256
        %v1057 = vadd.s32 %v857, 256
        %v1058 = vadd.s32 %v864, 256
        %v1059 = vadd.s32 %v871, 256
        %v1060 = vadd.s32 %v878, 256
        %v1061 = vadd.s32 %v885, 256
        %v1062 = vadd.s32 %v892, 256
        %v1063 = vadd.s32 %v899, 256
        %v1064 = vadd.s32 %v906, 256
        %v1065 = vadd.s32 %v913, 256
        %v1066 = vadd.s32 %v920, 256
        %v1067 = vadd.s32 %v927, 256
        %v1068 = vadd.s32 %v934, 256
        %v1069 = vadd.s32 %v941, 256
        %v1070 = vsel %vm1006, %v1038, %v724
        %v1071 = vsel %vm1007, %v1039, %v731
        %v1072 = vsel %vm1008, %v1040, %v738
        %v1073 = vsel %vm1009, %v1041, %v745
        %v1074 = vsel %vm1010, %v1042, %v752
        %v1075 = vsel %vm1011, %v1043, %v759
        %v1076 = vsel %vm1012, %v1044, %v766
        %v1077 = vsel %vm1013, %v1045, %v773
        %v1078 = vsel %vm1014, %v1046, %v780
        %v1079 = vsel %vm1015, %v1047, %v787
        %v1080 = vsel %vm1016, %v1048, %v794
        %v1081 = vsel %vm1017, %v1049, %v801
        %v1082 = vsel %vm1018, %v1050, %v808
        %v1083 = vsel %vm1019, %v1051, %v815
        %v1084 = vsel %vm1020, %v1052, %v822
        %v1085 = vsel %vm1021, %v1053, %v829
        %v1086 = vsel %vm1022, %v1054, %v836
        %v1087 = vsel %vm1023, %v1055, %v843
        %v1088 = vsel %vm1024, %v1056, %v850
        %v1089 = vsel %vm1025, %v1057, %v857
        %v1090 = vsel %vm1026, %v1058, %v864
        %v1091 = vsel %vm1027, %v1059, %v871
        %v1092 = vsel %vm1028, %v1060, %v878
        %v1093 = vsel %vm1029, %v1061, %v885
        %v1094 = vsel %vm1030, %v1062, %v892
        %v1095 = vsel %vm1031, %v1063, %v899
        %v1096 = vsel %vm1032, %v1064, %v906
        %v1097 = vsel %vm1033, %v1065, %v913
        %v1098 = vsel %vm1034, %v1066, %v920
        %v1099 = vsel %vm1035, %v1067, %v927
        %v1100 = vsel %vm1036, %v1068, %v934
        %v1101 = vsel %vm1037, %v1069, %v941
        %vm1102 = vcmp.lt.s32.totalorder %v1070, 0
        %v1103 = vsub.s32 0, %v1070
        %v1104 = vsel %vm1102, %v1103, %v1070
        %v1105 = vshrl.u32 %v1104, 4
        %v1106 = vand.u32 %v1104, 15
        %v1107 = vsub.s32 0, %v1106
        %v1108 = vsel %vm1102, %v1107, %v1106
        %vm1109 = vcmp.lt.s32.totalorder %v1071, 0
        %v1110 = vsub.s32 0, %v1071
        %v1111 = vsel %vm1109, %v1110, %v1071
        %v1112 = vshrl.u32 %v1111, 4
        %v1113 = vand.u32 %v1111, 15
        %v1114 = vsub.s32 0, %v1113
        %v1115 = vsel %vm1109, %v1114, %v1113
        %vm1116 = vcmp.lt.s32.totalorder %v1072, 0
        %v1117 = vsub.s32 0, %v1072
        %v1118 = vsel %vm1116, %v1117, %v1072
        %v1119 = vshrl.u32 %v1118, 4
        %v1120 = vand.u32 %v1118, 15
        %v1121 = vsub.s32 0, %v1120
        %v1122 = vsel %vm1116, %v1121, %v1120
        %vm1123 = vcmp.lt.s32.totalorder %v1073, 0
        %v1124 = vsub.s32 0, %v1073
        %v1125 = vsel %vm1123, %v1124, %v1073
        %v1126 = vshrl.u32 %v1125, 4
        %v1127 = vand.u32 %v1125, 15
        %v1128 = vsub.s32 0, %v1127
        %v1129 = vsel %vm1123, %v1128, %v1127
        %vm1130 = vcmp.lt.s32.totalorder %v1074, 0
        %v1131 = vsub.s32 0, %v1074
        %v1132 = vsel %vm1130, %v1131, %v1074
        %v1133 = vshrl.u32 %v1132, 4
        %v1134 = vand.u32 %v1132, 15
        %v1135 = vsub.s32 0, %v1134
        %v1136 = vsel %vm1130, %v1135, %v1134
        %vm1137 = vcmp.lt.s32.totalorder %v1075, 0
        %v1138 = vsub.s32 0, %v1075
        %v1139 = vsel %vm1137, %v1138, %v1075
        %v1140 = vshrl.u32 %v1139, 4
        %v1141 = vand.u32 %v1139, 15
        %v1142 = vsub.s32 0, %v1141
        %v1143 = vsel %vm1137, %v1142, %v1141
        %vm1144 = vcmp.lt.s32.totalorder %v1076, 0
        %v1145 = vsub.s32 0, %v1076
        %v1146 = vsel %vm1144, %v1145, %v1076
        %v1147 = vshrl.u32 %v1146, 4
        %v1148 = vand.u32 %v1146, 15
        %v1149 = vsub.s32 0, %v1148
        %v1150 = vsel %vm1144, %v1149, %v1148
        %vm1151 = vcmp.lt.s32.totalorder %v1077, 0
        %v1152 = vsub.s32 0, %v1077
        %v1153 = vsel %vm1151, %v1152, %v1077
        %v1154 = vshrl.u32 %v1153, 4
        %v1155 = vand.u32 %v1153, 15
        %v1156 = vsub.s32 0, %v1155
        %v1157 = vsel %vm1151, %v1156, %v1155
        %vm1158 = vcmp.lt.s32.totalorder %v1078, 0
        %v1159 = vsub.s32 0, %v1078
        %v1160 = vsel %vm1158, %v1159, %v1078
        %v1161 = vshrl.u32 %v1160, 4
        %v1162 = vand.u32 %v1160, 15
        %v1163 = vsub.s32 0, %v1162
        %v1164 = vsel %vm1158, %v1163, %v1162
        %vm1165 = vcmp.lt.s32.totalorder %v1079, 0
        %v1166 = vsub.s32 0, %v1079
        %v1167 = vsel %vm1165, %v1166, %v1079
        %v1168 = vshrl.u32 %v1167, 4
        %v1169 = vand.u32 %v1167, 15
        %v1170 = vsub.s32 0, %v1169
        %v1171 = vsel %vm1165, %v1170, %v1169
        %vm1172 = vcmp.lt.s32.totalorder %v1080, 0
        %v1173 = vsub.s32 0, %v1080
        %v1174 = vsel %vm1172, %v1173, %v1080
        %v1175 = vshrl.u32 %v1174, 4
        %v1176 = vand.u32 %v1174, 15
        %v1177 = vsub.s32 0, %v1176
        %v1178 = vsel %vm1172, %v1177, %v1176
        %vm1179 = vcmp.lt.s32.totalorder %v1081, 0
        %v1180 = vsub.s32 0, %v1081
        %v1181 = vsel %vm1179, %v1180, %v1081
        %v1182 = vshrl.u32 %v1181, 4
        %v1183 = vand.u32 %v1181, 15
        %v1184 = vsub.s32 0, %v1183
        %v1185 = vsel %vm1179, %v1184, %v1183
        %vm1186 = vcmp.lt.s32.totalorder %v1082, 0
        %v1187 = vsub.s32 0, %v1082
        %v1188 = vsel %vm1186, %v1187, %v1082
        %v1189 = vshrl.u32 %v1188, 4
        %v1190 = vand.u32 %v1188, 15
        %v1191 = vsub.s32 0, %v1190
        %v1192 = vsel %vm1186, %v1191, %v1190
        %vm1193 = vcmp.lt.s32.totalorder %v1083, 0
        %v1194 = vsub.s32 0, %v1083
        %v1195 = vsel %vm1193, %v1194, %v1083
        %v1196 = vshrl.u32 %v1195, 4
        %v1197 = vand.u32 %v1195, 15
        %v1198 = vsub.s32 0, %v1197
        %v1199 = vsel %vm1193, %v1198, %v1197
        %vm1200 = vcmp.lt.s32.totalorder %v1084, 0
        %v1201 = vsub.s32 0, %v1084
        %v1202 = vsel %vm1200, %v1201, %v1084
        %v1203 = vshrl.u32 %v1202, 4
        %v1204 = vand.u32 %v1202, 15
        %v1205 = vsub.s32 0, %v1204
        %v1206 = vsel %vm1200, %v1205, %v1204
        %vm1207 = vcmp.lt.s32.totalorder %v1085, 0
        %v1208 = vsub.s32 0, %v1085
        %v1209 = vsel %vm1207, %v1208, %v1085
        %v1210 = vshrl.u32 %v1209, 4
        %v1211 = vand.u32 %v1209, 15
        %v1212 = vsub.s32 0, %v1211
        %v1213 = vsel %vm1207, %v1212, %v1211
        %vm1214 = vcmp.lt.s32.totalorder %v1086, 0
        %v1215 = vsub.s32 0, %v1086
        %v1216 = vsel %vm1214, %v1215, %v1086
        %v1217 = vshrl.u32 %v1216, 4
        %v1218 = vand.u32 %v1216, 15
        %v1219 = vsub.s32 0, %v1218
        %v1220 = vsel %vm1214, %v1219, %v1218
        %vm1221 = vcmp.lt.s32.totalorder %v1087, 0
        %v1222 = vsub.s32 0, %v1087
        %v1223 = vsel %vm1221, %v1222, %v1087
        %v1224 = vshrl.u32 %v1223, 4
        %v1225 = vand.u32 %v1223, 15
        %v1226 = vsub.s32 0, %v1225
        %v1227 = vsel %vm1221, %v1226, %v1225
        %vm1228 = vcmp.lt.s32.totalorder %v1088, 0
        %v1229 = vsub.s32 0, %v1088
        %v1230 = vsel %vm1228, %v1229, %v1088
        %v1231 = vshrl.u32 %v1230, 4
        %v1232 = vand.u32 %v1230, 15
        %v1233 = vsub.s32 0, %v1232
        %v1234 = vsel %vm1228, %v1233, %v1232
        %vm1235 = vcmp.lt.s32.totalorder %v1089, 0
        %v1236 = vsub.s32 0, %v1089
        %v1237 = vsel %vm1235, %v1236, %v1089
        %v1238 = vshrl.u32 %v1237, 4
        %v1239 = vand.u32 %v1237, 15
        %v1240 = vsub.s32 0, %v1239
        %v1241 = vsel %vm1235, %v1240, %v1239
        %vm1242 = vcmp.lt.s32.totalorder %v1090, 0
        %v1243 = vsub.s32 0, %v1090
        %v1244 = vsel %vm1242, %v1243, %v1090
        %v1245 = vshrl.u32 %v1244, 4
        %v1246 = vand.u32 %v1244, 15
        %v1247 = vsub.s32 0, %v1246
        %v1248 = vsel %vm1242, %v1247, %v1246
        %vm1249 = vcmp.lt.s32.totalorder %v1091, 0
        %v1250 = vsub.s32 0, %v1091
        %v1251 = vsel %vm1249, %v1250, %v1091
        %v1252 = vshrl.u32 %v1251, 4
        %v1253 = vand.u32 %v1251, 15
        %v1254 = vsub.s32 0, %v1253
        %v1255 = vsel %vm1249, %v1254, %v1253
        %vm1256 = vcmp.lt.s32.totalorder %v1092, 0
        %v1257 = vsub.s32 0, %v1092
        %v1258 = vsel %vm1256, %v1257, %v1092
        %v1259 = vshrl.u32 %v1258, 4
        %v1260 = vand.u32 %v1258, 15
        %v1261 = vsub.s32 0, %v1260
        %v1262 = vsel %vm1256, %v1261, %v1260
        %vm1263 = vcmp.lt.s32.totalorder %v1093, 0
        %v1264 = vsub.s32 0, %v1093
        %v1265 = vsel %vm1263, %v1264, %v1093
        %v1266 = vshrl.u32 %v1265, 4
        %v1267 = vand.u32 %v1265, 15
        %v1268 = vsub.s32 0, %v1267
        %v1269 = vsel %vm1263, %v1268, %v1267
        %vm1270 = vcmp.lt.s32.totalorder %v1094, 0
        %v1271 = vsub.s32 0, %v1094
        %v1272 = vsel %vm1270, %v1271, %v1094
        %v1273 = vshrl.u32 %v1272, 4
        %v1274 = vand.u32 %v1272, 15
        %v1275 = vsub.s32 0, %v1274
        %v1276 = vsel %vm1270, %v1275, %v1274
        %vm1277 = vcmp.lt.s32.totalorder %v1095, 0
        %v1278 = vsub.s32 0, %v1095
        %v1279 = vsel %vm1277, %v1278, %v1095
        %v1280 = vshrl.u32 %v1279, 4
        %v1281 = vand.u32 %v1279, 15
        %v1282 = vsub.s32 0, %v1281
        %v1283 = vsel %vm1277, %v1282, %v1281
        %vm1284 = vcmp.lt.s32.totalorder %v1096, 0
        %v1285 = vsub.s32 0, %v1096
        %v1286 = vsel %vm1284, %v1285, %v1096
        %v1287 = vshrl.u32 %v1286, 4
        %v1288 = vand.u32 %v1286, 15
        %v1289 = vsub.s32 0, %v1288
        %v1290 = vsel %vm1284, %v1289, %v1288
        %vm1291 = vcmp.lt.s32.totalorder %v1097, 0
        %v1292 = vsub.s32 0, %v1097
        %v1293 = vsel %vm1291, %v1292, %v1097
        %v1294 = vshrl.u32 %v1293, 4
        %v1295 = vand.u32 %v1293, 15
        %v1296 = vsub.s32 0, %v1295
        %v1297 = vsel %vm1291, %v1296, %v1295
        %vm1298 = vcmp.lt.s32.totalorder %v1098, 0
        %v1299 = vsub.s32 0, %v1098
        %v1300 = vsel %vm1298, %v1299, %v1098
        %v1301 = vshrl.u32 %v1300, 4
        %v1302 = vand.u32 %v1300, 15
        %v1303 = vsub.s32 0, %v1302
        %v1304 = vsel %vm1298, %v1303, %v1302
        %vm1305 = vcmp.lt.s32.totalorder %v1099, 0
        %v1306 = vsub.s32 0, %v1099
        %v1307 = vsel %vm1305, %v1306, %v1099
        %v1308 = vshrl.u32 %v1307, 4
        %v1309 = vand.u32 %v1307, 15
        %v1310 = vsub.s32 0, %v1309
        %v1311 = vsel %vm1305, %v1310, %v1309
        %vm1312 = vcmp.lt.s32.totalorder %v1100, 0
        %v1313 = vsub.s32 0, %v1100
        %v1314 = vsel %vm1312, %v1313, %v1100
        %v1315 = vshrl.u32 %v1314, 4
        %v1316 = vand.u32 %v1314, 15
        %v1317 = vsub.s32 0, %v1316
        %v1318 = vsel %vm1312, %v1317, %v1316
        %vm1319 = vcmp.lt.s32.totalorder %v1101, 0
        %v1320 = vsub.s32 0, %v1101
        %v1321 = vsel %vm1319, %v1320, %v1101
        %v1322 = vshrl.u32 %v1321, 4
        %v1323 = vand.u32 %v1321, 15
        %v1324 = vsub.s32 0, %v1323
        %v1325 = vsel %vm1319, %v1324, %v1323
        %vm1326 = vcmp.ne.s32.totalorder %v1108, 0
        %vm1327 = vcmp.ne.s32.totalorder %v1115, 0
        %vm1328 = vcmp.ne.s32.totalorder %v1122, 0
        %vm1329 = vcmp.ne.s32.totalorder %v1129, 0
        %vm1330 = vcmp.ne.s32.totalorder %v1136, 0
        %vm1331 = vcmp.ne.s32.totalorder %v1143, 0
        %vm1332 = vcmp.ne.s32.totalorder %v1150, 0
        %vm1333 = vcmp.ne.s32.totalorder %v1157, 0
        %vm1334 = vcmp.ne.s32.totalorder %v1164, 0
        %vm1335 = vcmp.ne.s32.totalorder %v1171, 0
        %vm1336 = vcmp.ne.s32.totalorder %v1178, 0
        %vm1337 = vcmp.ne.s32.totalorder %v1185, 0
        %vm1338 = vcmp.ne.s32.totalorder %v1192, 0
        %vm1339 = vcmp.ne.s32.totalorder %v1199, 0
        %vm1340 = vcmp.ne.s32.totalorder %v1206, 0
        %vm1341 = vcmp.ne.s32.totalorder %v1213, 0
        %vm1342 = vcmp.ne.s32.totalorder %v1220, 0
        %vm1343 = vcmp.ne.s32.totalorder %v1227, 0
        %vm1344 = vcmp.ne.s32.totalorder %v1234, 0
        %vm1345 = vcmp.ne.s32.totalorder %v1241, 0
        %vm1346 = vcmp.ne.s32.totalorder %v1248, 0
        %vm1347 = vcmp.ne.s32.totalorder %v1255, 0
        %vm1348 = vcmp.ne.s32.totalorder %v1262, 0
        %vm1349 = vcmp.ne.s32.totalorder %v1269, 0
        %vm1350 = vcmp.ne.s32.totalorder %v1276, 0
        %vm1351 = vcmp.ne.s32.totalorder %v1283, 0
        %vm1352 = vcmp.ne.s32.totalorder %v1290, 0
        %vm1353 = vcmp.ne.s32.totalorder %v1297, 0
        %vm1354 = vcmp.ne.s32.totalorder %v1304, 0
        %vm1355 = vcmp.ne.s32.totalorder %v1311, 0
        %vm1356 = vcmp.ne.s32.totalorder %v1318, 0
        %vm1357 = vcmp.ne.s32.totalorder %v1325, 0
        %vm1358 = vcmp.lt.s32.totalorder %v1108, 0
        %vm1359 = vcmp.lt.s32.totalorder %v1115, 0
        %vm1360 = vcmp.lt.s32.totalorder %v1122, 0
        %vm1361 = vcmp.lt.s32.totalorder %v1129, 0
        %vm1362 = vcmp.lt.s32.totalorder %v1136, 0
        %vm1363 = vcmp.lt.s32.totalorder %v1143, 0
        %vm1364 = vcmp.lt.s32.totalorder %v1150, 0
        %vm1365 = vcmp.lt.s32.totalorder %v1157, 0
        %vm1366 = vcmp.lt.s32.totalorder %v1164, 0
        %vm1367 = vcmp.lt.s32.totalorder %v1171, 0
        %vm1368 = vcmp.lt.s32.totalorder %v1178, 0
        %vm1369 = vcmp.lt.s32.totalorder %v1185, 0
        %vm1370 = vcmp.lt.s32.totalorder %v1192, 0
        %vm1371 = vcmp.lt.s32.totalorder %v1199, 0
        %vm1372 = vcmp.lt.s32.totalorder %v1206, 0
        %vm1373 = vcmp.lt.s32.totalorder %v1213, 0
        %vm1374 = vcmp.lt.s32.totalorder %v1220, 0
        %vm1375 = vcmp.lt.s32.totalorder %v1227, 0
        %vm1376 = vcmp.lt.s32.totalorder %v1234, 0
        %vm1377 = vcmp.lt.s32.totalorder %v1241, 0
        %vm1378 = vcmp.lt.s32.totalorder %v1248, 0
        %vm1379 = vcmp.lt.s32.totalorder %v1255, 0
        %vm1380 = vcmp.lt.s32.totalorder %v1262, 0
        %vm1381 = vcmp.lt.s32.totalorder %v1269, 0
        %vm1382 = vcmp.lt.s32.totalorder %v1276, 0
        %vm1383 = vcmp.lt.s32.totalorder %v1283, 0
        %vm1384 = vcmp.lt.s32.totalorder %v1290, 0
        %vm1385 = vcmp.lt.s32.totalorder %v1297, 0
        %vm1386 = vcmp.lt.s32.totalorder %v1304, 0
        %vm1387 = vcmp.lt.s32.totalorder %v1311, 0
        %vm1388 = vcmp.lt.s32.totalorder %v1318, 0
        %vm1389 = vcmp.lt.s32.totalorder %v1325, 0
        %vm1390 = vmand %vm1358, %vm1326
        %vm1391 = vmand %vm1359, %vm1327
        %vm1392 = vmand %vm1360, %vm1328
        %vm1393 = vmand %vm1361, %vm1329
        %vm1394 = vmand %vm1362, %vm1330
        %vm1395 = vmand %vm1363, %vm1331
        %vm1396 = vmand %vm1364, %vm1332
        %vm1397 = vmand %vm1365, %vm1333
        %vm1398 = vmand %vm1366, %vm1334
        %vm1399 = vmand %vm1367, %vm1335
        %vm1400 = vmand %vm1368, %vm1336
        %vm1401 = vmand %vm1369, %vm1337
        %vm1402 = vmand %vm1370, %vm1338
        %vm1403 = vmand %vm1371, %vm1339
        %vm1404 = vmand %vm1372, %vm1340
        %vm1405 = vmand %vm1373, %vm1341
        %vm1406 = vmand %vm1374, %vm1342
        %vm1407 = vmand %vm1375, %vm1343
        %vm1408 = vmand %vm1376, %vm1344
        %vm1409 = vmand %vm1377, %vm1345
        %vm1410 = vmand %vm1378, %vm1346
        %vm1411 = vmand %vm1379, %vm1347
        %vm1412 = vmand %vm1380, %vm1348
        %vm1413 = vmand %vm1381, %vm1349
        %vm1414 = vmand %vm1382, %vm1350
        %vm1415 = vmand %vm1383, %vm1351
        %vm1416 = vmand %vm1384, %vm1352
        %vm1417 = vmand %vm1385, %vm1353
        %vm1418 = vmand %vm1386, %vm1354
        %vm1419 = vmand %vm1387, %vm1355
        %vm1420 = vmand %vm1388, %vm1356
        %vm1421 = vmand %vm1389, %vm1357
        %v1422 = vadd.s32 %v1108, 16
        %v1423 = vadd.s32 %v1115, 16
        %v1424 = vadd.s32 %v1122, 16
        %v1425 = vadd.s32 %v1129, 16
        %v1426 = vadd.s32 %v1136, 16
        %v1427 = vadd.s32 %v1143, 16
        %v1428 = vadd.s32 %v1150, 16
        %v1429 = vadd.s32 %v1157, 16
        %v1430 = vadd.s32 %v1164, 16
        %v1431 = vadd.s32 %v1171, 16
        %v1432 = vadd.s32 %v1178, 16
        %v1433 = vadd.s32 %v1185, 16
        %v1434 = vadd.s32 %v1192, 16
        %v1435 = vadd.s32 %v1199, 16
        %v1436 = vadd.s32 %v1206, 16
        %v1437 = vadd.s32 %v1213, 16
        %v1438 = vadd.s32 %v1220, 16
        %v1439 = vadd.s32 %v1227, 16
        %v1440 = vadd.s32 %v1234, 16
        %v1441 = vadd.s32 %v1241, 16
        %v1442 = vadd.s32 %v1248, 16
        %v1443 = vadd.s32 %v1255, 16
        %v1444 = vadd.s32 %v1262, 16
        %v1445 = vadd.s32 %v1269, 16
        %v1446 = vadd.s32 %v1276, 16
        %v1447 = vadd.s32 %v1283, 16
        %v1448 = vadd.s32 %v1290, 16
        %v1449 = vadd.s32 %v1297, 16
        %v1450 = vadd.s32 %v1304, 16
        %v1451 = vadd.s32 %v1311, 16
        %v1452 = vadd.s32 %v1318, 16
        %v1453 = vadd.s32 %v1325, 16
        %v1454 = vsel %vm1390, %v1422, %v1108
        %v1455 = vsel %vm1391, %v1423, %v1115
        %v1456 = vsel %vm1392, %v1424, %v1122
        %v1457 = vsel %vm1393, %v1425, %v1129
        %v1458 = vsel %vm1394, %v1426, %v1136
        %v1459 = vsel %vm1395, %v1427, %v1143
        %v1460 = vsel %vm1396, %v1428, %v1150
        %v1461 = vsel %vm1397, %v1429, %v1157
        %v1462 = vsel %vm1398, %v1430, %v1164
        %v1463 = vsel %vm1399, %v1431, %v1171
        %v1464 = vsel %vm1400, %v1432, %v1178
        %v1465 = vsel %vm1401, %v1433, %v1185
        %v1466 = vsel %vm1402, %v1434, %v1192
        %v1467 = vsel %vm1403, %v1435, %v1199
        %v1468 = vsel %vm1404, %v1436, %v1206
        %v1469 = vsel %vm1405, %v1437, %v1213
        %v1470 = vsel %vm1406, %v1438, %v1220
        %v1471 = vsel %vm1407, %v1439, %v1227
        %v1472 = vsel %vm1408, %v1440, %v1234
        %v1473 = vsel %vm1409, %v1441, %v1241
        %v1474 = vsel %vm1410, %v1442, %v1248
        %v1475 = vsel %vm1411, %v1443, %v1255
        %v1476 = vsel %vm1412, %v1444, %v1262
        %v1477 = vsel %vm1413, %v1445, %v1269
        %v1478 = vsel %vm1414, %v1446, %v1276
        %v1479 = vsel %vm1415, %v1447, %v1283
        %v1480 = vsel %vm1416, %v1448, %v1290
        %v1481 = vsel %vm1417, %v1449, %v1297
        %v1482 = vsel %vm1418, %v1450, %v1304
        %v1483 = vsel %vm1419, %v1451, %v1311
        %v1484 = vsel %vm1420, %v1452, %v1318
        %v1485 = vsel %vm1421, %v1453, %v1325
        %vm1486 = vcmp.ge.s32.totalorder %v1070, 16
        %vm1487 = vcmp.ge.s32.totalorder %v1071, 16
        %vm1488 = vcmp.ge.s32.totalorder %v1072, 16
        %vm1489 = vcmp.ge.s32.totalorder %v1073, 16
        %vm1490 = vcmp.ge.s32.totalorder %v1074, 16
        %vm1491 = vcmp.ge.s32.totalorder %v1075, 16
        %vm1492 = vcmp.ge.s32.totalorder %v1076, 16
        %vm1493 = vcmp.ge.s32.totalorder %v1077, 16
        %vm1494 = vcmp.ge.s32.totalorder %v1078, 16
        %vm1495 = vcmp.ge.s32.totalorder %v1079, 16
        %vm1496 = vcmp.ge.s32.totalorder %v1080, 16
        %vm1497 = vcmp.ge.s32.totalorder %v1081, 16
        %vm1498 = vcmp.ge.s32.totalorder %v1082, 16
        %vm1499 = vcmp.ge.s32.totalorder %v1083, 16
        %vm1500 = vcmp.ge.s32.totalorder %v1084, 16
        %vm1501 = vcmp.ge.s32.totalorder %v1085, 16
        %vm1502 = vcmp.ge.s32.totalorder %v1086, 16
        %vm1503 = vcmp.ge.s32.totalorder %v1087, 16
        %vm1504 = vcmp.ge.s32.totalorder %v1088, 16
        %vm1505 = vcmp.ge.s32.totalorder %v1089, 16
        %vm1506 = vcmp.ge.s32.totalorder %v1090, 16
        %vm1507 = vcmp.ge.s32.totalorder %v1091, 16
        %vm1508 = vcmp.ge.s32.totalorder %v1092, 16
        %vm1509 = vcmp.ge.s32.totalorder %v1093, 16
        %vm1510 = vcmp.ge.s32.totalorder %v1094, 16
        %vm1511 = vcmp.ge.s32.totalorder %v1095, 16
        %vm1512 = vcmp.ge.s32.totalorder %v1096, 16
        %vm1513 = vcmp.ge.s32.totalorder %v1097, 16
        %vm1514 = vcmp.ge.s32.totalorder %v1098, 16
        %vm1515 = vcmp.ge.s32.totalorder %v1099, 16
        %vm1516 = vcmp.ge.s32.totalorder %v1100, 16
        %vm1517 = vcmp.ge.s32.totalorder %v1101, 16
        %vm1518 = vcmp.lt.s32.totalorder %v1070, 240
        %vm1519 = vcmp.lt.s32.totalorder %v1071, 240
        %vm1520 = vcmp.lt.s32.totalorder %v1072, 240
        %vm1521 = vcmp.lt.s32.totalorder %v1073, 240
        %vm1522 = vcmp.lt.s32.totalorder %v1074, 240
        %vm1523 = vcmp.lt.s32.totalorder %v1075, 240
        %vm1524 = vcmp.lt.s32.totalorder %v1076, 240
        %vm1525 = vcmp.lt.s32.totalorder %v1077, 240
        %vm1526 = vcmp.lt.s32.totalorder %v1078, 240
        %vm1527 = vcmp.lt.s32.totalorder %v1079, 240
        %vm1528 = vcmp.lt.s32.totalorder %v1080, 240
        %vm1529 = vcmp.lt.s32.totalorder %v1081, 240
        %vm1530 = vcmp.lt.s32.totalorder %v1082, 240
        %vm1531 = vcmp.lt.s32.totalorder %v1083, 240
        %vm1532 = vcmp.lt.s32.totalorder %v1084, 240
        %vm1533 = vcmp.lt.s32.totalorder %v1085, 240
        %vm1534 = vcmp.lt.s32.totalorder %v1086, 240
        %vm1535 = vcmp.lt.s32.totalorder %v1087, 240
        %vm1536 = vcmp.lt.s32.totalorder %v1088, 240
        %vm1537 = vcmp.lt.s32.totalorder %v1089, 240
        %vm1538 = vcmp.lt.s32.totalorder %v1090, 240
        %vm1539 = vcmp.lt.s32.totalorder %v1091, 240
        %vm1540 = vcmp.lt.s32.totalorder %v1092, 240
        %vm1541 = vcmp.lt.s32.totalorder %v1093, 240
        %vm1542 = vcmp.lt.s32.totalorder %v1094, 240
        %vm1543 = vcmp.lt.s32.totalorder %v1095, 240
        %vm1544 = vcmp.lt.s32.totalorder %v1096, 240
        %vm1545 = vcmp.lt.s32.totalorder %v1097, 240
        %vm1546 = vcmp.lt.s32.totalorder %v1098, 240
        %vm1547 = vcmp.lt.s32.totalorder %v1099, 240
        %vm1548 = vcmp.lt.s32.totalorder %v1100, 240
        %vm1549 = vcmp.lt.s32.totalorder %v1101, 240
        %vm1550 = vcmp.gt.s32.totalorder %v1454, 0
        %vm1551 = vcmp.gt.s32.totalorder %v1455, 0
        %vm1552 = vcmp.gt.s32.totalorder %v1456, 0
        %vm1553 = vcmp.gt.s32.totalorder %v1457, 0
        %vm1554 = vcmp.gt.s32.totalorder %v1458, 0
        %vm1555 = vcmp.gt.s32.totalorder %v1459, 0
        %vm1556 = vcmp.gt.s32.totalorder %v1460, 0
        %vm1557 = vcmp.gt.s32.totalorder %v1461, 0
        %vm1558 = vcmp.gt.s32.totalorder %v1462, 0
        %vm1559 = vcmp.gt.s32.totalorder %v1463, 0
        %vm1560 = vcmp.gt.s32.totalorder %v1464, 0
        %vm1561 = vcmp.gt.s32.totalorder %v1465, 0
        %vm1562 = vcmp.gt.s32.totalorder %v1466, 0
        %vm1563 = vcmp.gt.s32.totalorder %v1467, 0
        %vm1564 = vcmp.gt.s32.totalorder %v1468, 0
        %vm1565 = vcmp.gt.s32.totalorder %v1469, 0
        %vm1566 = vcmp.gt.s32.totalorder %v1470, 0
        %vm1567 = vcmp.gt.s32.totalorder %v1471, 0
        %vm1568 = vcmp.gt.s32.totalorder %v1472, 0
        %vm1569 = vcmp.gt.s32.totalorder %v1473, 0
        %vm1570 = vcmp.gt.s32.totalorder %v1474, 0
        %vm1571 = vcmp.gt.s32.totalorder %v1475, 0
        %vm1572 = vcmp.gt.s32.totalorder %v1476, 0
        %vm1573 = vcmp.gt.s32.totalorder %v1477, 0
        %vm1574 = vcmp.gt.s32.totalorder %v1478, 0
        %vm1575 = vcmp.gt.s32.totalorder %v1479, 0
        %vm1576 = vcmp.gt.s32.totalorder %v1480, 0
        %vm1577 = vcmp.gt.s32.totalorder %v1481, 0
        %vm1578 = vcmp.gt.s32.totalorder %v1482, 0
        %vm1579 = vcmp.gt.s32.totalorder %v1483, 0
        %vm1580 = vcmp.gt.s32.totalorder %v1484, 0
        %vm1581 = vcmp.gt.s32.totalorder %v1485, 0
        %vm1582 = vcmp.lt.s32.totalorder %v1454, 15
        %vm1583 = vcmp.lt.s32.totalorder %v1455, 15
        %vm1584 = vcmp.lt.s32.totalorder %v1456, 15
        %vm1585 = vcmp.lt.s32.totalorder %v1457, 15
        %vm1586 = vcmp.lt.s32.totalorder %v1458, 15
        %vm1587 = vcmp.lt.s32.totalorder %v1459, 15
        %vm1588 = vcmp.lt.s32.totalorder %v1460, 15
        %vm1589 = vcmp.lt.s32.totalorder %v1461, 15
        %vm1590 = vcmp.lt.s32.totalorder %v1462, 15
        %vm1591 = vcmp.lt.s32.totalorder %v1463, 15
        %vm1592 = vcmp.lt.s32.totalorder %v1464, 15
        %vm1593 = vcmp.lt.s32.totalorder %v1465, 15
        %vm1594 = vcmp.lt.s32.totalorder %v1466, 15
        %vm1595 = vcmp.lt.s32.totalorder %v1467, 15
        %vm1596 = vcmp.lt.s32.totalorder %v1468, 15
        %vm1597 = vcmp.lt.s32.totalorder %v1469, 15
        %vm1598 = vcmp.lt.s32.totalorder %v1470, 15
        %vm1599 = vcmp.lt.s32.totalorder %v1471, 15
        %vm1600 = vcmp.lt.s32.totalorder %v1472, 15
        %vm1601 = vcmp.lt.s32.totalorder %v1473, 15
        %vm1602 = vcmp.lt.s32.totalorder %v1474, 15
        %vm1603 = vcmp.lt.s32.totalorder %v1475, 15
        %vm1604 = vcmp.lt.s32.totalorder %v1476, 15
        %vm1605 = vcmp.lt.s32.totalorder %v1477, 15
        %vm1606 = vcmp.lt.s32.totalorder %v1478, 15
        %vm1607 = vcmp.lt.s32.totalorder %v1479, 15
        %vm1608 = vcmp.lt.s32.totalorder %v1480, 15
        %vm1609 = vcmp.lt.s32.totalorder %v1481, 15
        %vm1610 = vcmp.lt.s32.totalorder %v1482, 15
        %vm1611 = vcmp.lt.s32.totalorder %v1483, 15
        %vm1612 = vcmp.lt.s32.totalorder %v1484, 15
        %vm1613 = vcmp.lt.s32.totalorder %v1485, 15
        %v1614 = vpack.c.bf16 %v654, %v653
        %v1615 = vpack.c.bf16 %v656, %v655
        %v1616 = vpack.c.bf16 %v658, %v657
        %v1617 = vpack.c.bf16 %v660, %v659
        %v1618 = vpack.c.bf16 %v662, %v661
        %v1619 = vpack.c.bf16 %v664, %v663
        %v1620 = vpack.c.bf16 %v666, %v665
        %v1621 = vpack.c.bf16 %v668, %v667
        %v1622 = vpack.c.bf16 %v670, %v669
        %v1623 = vpack.c.bf16 %v672, %v671
        %v1624 = vpack.c.bf16 %v674, %v673
        %v1625 = vpack.c.bf16 %v676, %v675
        %v1626 = vpack.c.bf16 %v678, %v677
        %v1627 = vpack.c.bf16 %v680, %v679
        %v1628 = vpack.c.bf16 %v682, %v681
        %v1629 = vpack.c.bf16 %v684, %v683
        %s1630 = scalar_lea.vmem %s3, 64
        %v1631 = vld [vmem:[%s1630] sm:$0xf]
        %v1632 = vld [vmem:[%s1630 + $0x4] sm:$0xf]
        %v1633 = vld [vmem:[%s1630 + $0x8] sm:$0xf]
        %v1634 = vld [vmem:[%s1630 + $0xc] sm:$0xf]
        %v1635 = vrot.slane %v653, 7
        %v1636 = vrot.slane %v654, 7
        %v1637 = vrot.slane %v655, 7
        %v1638 = vrot.slane %v656, 7
        %v1639 = vrot.slane %v657, 7
        %v1640 = vrot.slane %v658, 7
        %v1641 = vrot.slane %v659, 7
        %v1642 = vrot.slane %v660, 7
        %v1643 = vrot.slane %v661, 7
        %v1644 = vrot.slane %v662, 7
        %v1645 = vrot.slane %v663, 7
        %v1646 = vrot.slane %v664, 7
        %v1647 = vrot.slane %v665, 7
        %v1648 = vrot.slane %v666, 7
        %v1649 = vrot.slane %v667, 7
        %v1650 = vrot.slane %v668, 7
        %v1651 = vrot.slane %v669, 7
        %v1652 = vrot.slane %v670, 7
        %v1653 = vrot.slane %v671, 7
        %v1654 = vrot.slane %v672, 7
        %v1655 = vrot.slane %v673, 7
        %v1656 = vrot.slane %v674, 7
        %v1657 = vrot.slane %v675, 7
        %v1658 = vrot.slane %v676, 7
        %v1659 = vrot.slane %v677, 7
        %v1660 = vrot.slane %v678, 7
        %v1661 = vrot.slane %v679, 7
        %v1662 = vrot.slane %v680, 7
        %v1663 = vrot.slane %v681, 7
        %v1664 = vrot.slane %v682, 7
        %v1665 = vrot.slane %v683, 7
        %v1666 = vrot.slane %v684, 7
        %vm1667 = vcmp.lt.s32.totalorder %v686, 1
        %v1668 = vsel %vm1667, %v1665, %v1666
        %v1669 = vsel %vm1667, %v1664, %v1665
        %v1670 = vsel %vm1667, %v1663, %v1664
        %v1671 = vsel %vm1667, %v1662, %v1663
        %v1672 = vsel %vm1667, %v1661, %v1662
        %v1673 = vsel %vm1667, %v1660, %v1661
        %v1674 = vsel %vm1667, %v1659, %v1660
        %v1675 = vsel %vm1667, %v1658, %v1659
        %v1676 = vsel %vm1667, %v1657, %v1658
        %v1677 = vsel %vm1667, %v1656, %v1657
        %v1678 = vsel %vm1667, %v1655, %v1656
        %v1679 = vsel %vm1667, %v1654, %v1655
        %v1680 = vsel %vm1667, %v1653, %v1654
        %v1681 = vsel %vm1667, %v1652, %v1653
        %v1682 = vsel %vm1667, %v1651, %v1652
        %v1683 = vsel %vm1667, %v1650, %v1651
        %v1684 = vsel %vm1667, %v1649, %v1650
        %v1685 = vsel %vm1667, %v1648, %v1649
        %v1686 = vsel %vm1667, %v1647, %v1648
        %v1687 = vsel %vm1667, %v1646, %v1647
        %v1688 = vsel %vm1667, %v1645, %v1646
        %v1689 = vsel %vm1667, %v1644, %v1645
        %v1690 = vsel %vm1667, %v1643, %v1644
        %v1691 = vsel %vm1667, %v1642, %v1643
        %v1692 = vsel %vm1667, %v1641, %v1642
        %v1693 = vsel %vm1667, %v1640, %v1641
        %v1694 = vsel %vm1667, %v1639, %v1640
        %v1695 = vsel %vm1667, %v1638, %v1639
        %v1696 = vsel %vm1667, %v1637, %v1638
        %v1697 = vsel %vm1667, %v1636, %v1637
        %v1698 = vsel %vm1667, %v1635, %v1636
        %v1699 = vsel %vm1667, %v1666, %v1635
        %vm1700 = vmand %vm1486, %vm1550
        %vm1701 = vmand %vm1487, %vm1551
        %vm1702 = vmand %vm1488, %vm1552
        %vm1703 = vmand %vm1489, %vm1553
        %vm1704 = vmand %vm1490, %vm1554
        %vm1705 = vmand %vm1491, %vm1555
        %vm1706 = vmand %vm1492, %vm1556
        %vm1707 = vmand %vm1493, %vm1557
        %vm1708 = vmand %vm1494, %vm1558
        %vm1709 = vmand %vm1495, %vm1559
        %vm1710 = vmand %vm1496, %vm1560
        %vm1711 = vmand %vm1497, %vm1561
        %vm1712 = vmand %vm1498, %vm1562
        %vm1713 = vmand %vm1499, %vm1563
        %vm1714 = vmand %vm1500, %vm1564
        %vm1715 = vmand %vm1501, %vm1565
        %vm1716 = vmand %vm1502, %vm1566
        %vm1717 = vmand %vm1503, %vm1567
        %vm1718 = vmand %vm1504, %vm1568
        %vm1719 = vmand %vm1505, %vm1569
        %vm1720 = vmand %vm1506, %vm1570
        %vm1721 = vmand %vm1507, %vm1571
        %vm1722 = vmand %vm1508, %vm1572
        %vm1723 = vmand %vm1509, %vm1573
        %vm1724 = vmand %vm1510, %vm1574
        %vm1725 = vmand %vm1511, %vm1575
        %vm1726 = vmand %vm1512, %vm1576
        %vm1727 = vmand %vm1513, %vm1577
        %vm1728 = vmand %vm1514, %vm1578
        %vm1729 = vmand %vm1515, %vm1579
        %vm1730 = vmand %vm1516, %vm1580
        %vm1731 = vmand %vm1517, %vm1581
        %v1732 = vsel %vm1700, 1, 0
        %v1733 = vsel %vm1701, 1, 0
        %v1734 = vsel %vm1702, 1, 0
        %v1735 = vsel %vm1703, 1, 0
        %v1736 = vsel %vm1704, 1, 0
        %v1737 = vsel %vm1705, 1, 0
        %v1738 = vsel %vm1706, 1, 0
        %v1739 = vsel %vm1707, 1, 0
        %v1740 = vsel %vm1708, 1, 0
        %v1741 = vsel %vm1709, 1, 0
        %v1742 = vsel %vm1710, 1, 0
        %v1743 = vsel %vm1711, 1, 0
        %v1744 = vsel %vm1712, 1, 0
        %v1745 = vsel %vm1713, 1, 0
        %v1746 = vsel %vm1714, 1, 0
        %v1747 = vsel %vm1715, 1, 0
        %v1748 = vsel %vm1716, 1, 0
        %v1749 = vsel %vm1717, 1, 0
        %v1750 = vsel %vm1718, 1, 0
        %v1751 = vsel %vm1719, 1, 0
        %v1752 = vsel %vm1720, 1, 0
        %v1753 = vsel %vm1721, 1, 0
        %v1754 = vsel %vm1722, 1, 0
        %v1755 = vsel %vm1723, 1, 0
        %v1756 = vsel %vm1724, 1, 0
        %v1757 = vsel %vm1725, 1, 0
        %v1758 = vsel %vm1726, 1, 0
        %v1759 = vsel %vm1727, 1, 0
        %v1760 = vsel %vm1728, 1, 0
        %v1761 = vsel %vm1729, 1, 0
        %v1762 = vsel %vm1730, 1, 0
        %v1763 = vsel %vm1731, 1, 0
        %vm1764 = vcmp.eq.s32.totalorder %v1732, 1
        %vm1765 = vcmp.eq.s32.totalorder %v1733, 1
        %vm1766 = vcmp.eq.s32.totalorder %v1734, 1
        %vm1767 = vcmp.eq.s32.totalorder %v1735, 1
        %vm1768 = vcmp.eq.s32.totalorder %v1736, 1
        %vm1769 = vcmp.eq.s32.totalorder %v1737, 1
        %vm1770 = vcmp.eq.s32.totalorder %v1738, 1
        %vm1771 = vcmp.eq.s32.totalorder %v1739, 1
        %vm1772 = vcmp.eq.s32.totalorder %v1740, 1
        %vm1773 = vcmp.eq.s32.totalorder %v1741, 1
        %vm1774 = vcmp.eq.s32.totalorder %v1742, 1
        %vm1775 = vcmp.eq.s32.totalorder %v1743, 1
        %vm1776 = vcmp.eq.s32.totalorder %v1744, 1
        %vm1777 = vcmp.eq.s32.totalorder %v1745, 1
        %vm1778 = vcmp.eq.s32.totalorder %v1746, 1
        %vm1779 = vcmp.eq.s32.totalorder %v1747, 1
        %vm1780 = vcmp.eq.s32.totalorder %v1748, 1
        %vm1781 = vcmp.eq.s32.totalorder %v1749, 1
        %vm1782 = vcmp.eq.s32.totalorder %v1750, 1
        %vm1783 = vcmp.eq.s32.totalorder %v1751, 1
        %vm1784 = vcmp.eq.s32.totalorder %v1752, 1
        %vm1785 = vcmp.eq.s32.totalorder %v1753, 1
        %vm1786 = vcmp.eq.s32.totalorder %v1754, 1
        %vm1787 = vcmp.eq.s32.totalorder %v1755, 1
        %vm1788 = vcmp.eq.s32.totalorder %v1756, 1
        %vm1789 = vcmp.eq.s32.totalorder %v1757, 1
        %vm1790 = vcmp.eq.s32.totalorder %v1758, 1
        %vm1791 = vcmp.eq.s32.totalorder %v1759, 1
        %vm1792 = vcmp.eq.s32.totalorder %v1760, 1
        %vm1793 = vcmp.eq.s32.totalorder %v1761, 1
        %vm1794 = vcmp.eq.s32.totalorder %v1762, 1
        %vm1795 = vcmp.eq.s32.totalorder %v1763, 1
        %v1796 = vsel %vm1764, %v1669, 0.0
        %v1797 = vsel %vm1765, %v1668, 0.0
        %v1798 = vsel %vm1766, %v1699, 0.0
        %v1799 = vsel %vm1767, %v1698, 0.0
        %v1800 = vsel %vm1768, %v1697, 0.0
        %v1801 = vsel %vm1769, %v1696, 0.0
        %v1802 = vsel %vm1770, %v1695, 0.0
        %v1803 = vsel %vm1771, %v1694, 0.0
        %v1804 = vsel %vm1772, %v1693, 0.0
        %v1805 = vsel %vm1773, %v1692, 0.0
        %v1806 = vsel %vm1774, %v1691, 0.0
        %v1807 = vsel %vm1775, %v1690, 0.0
        %v1808 = vsel %vm1776, %v1689, 0.0
        %v1809 = vsel %vm1777, %v1688, 0.0
        %v1810 = vsel %vm1778, %v1687, 0.0
        %v1811 = vsel %vm1779, %v1686, 0.0
        %v1812 = vsel %vm1780, %v1685, 0.0
        %v1813 = vsel %vm1781, %v1684, 0.0
        %v1814 = vsel %vm1782, %v1683, 0.0
        %v1815 = vsel %vm1783, %v1682, 0.0
        %v1816 = vsel %vm1784, %v1681, 0.0
        %v1817 = vsel %vm1785, %v1680, 0.0
        %v1818 = vsel %vm1786, %v1679, 0.0
        %v1819 = vsel %vm1787, %v1678, 0.0
        %v1820 = vsel %vm1788, %v1677, 0.0
        %v1821 = vsel %vm1789, %v1676, 0.0
        %v1822 = vsel %vm1790, %v1675, 0.0
        %v1823 = vsel %vm1791, %v1674, 0.0
        %v1824 = vsel %vm1792, %v1673, 0.0
        %v1825 = vsel %vm1793, %v1672, 0.0
        %v1826 = vsel %vm1794, %v1671, 0.0
        %v1827 = vsel %vm1795, %v1670, 0.0
        %v1828 = vpack.c.bf16 %v1797, %v1796
        %v1829 = vpack.c.bf16 %v1799, %v1798
        %v1830 = vpack.c.bf16 %v1801, %v1800
        %v1831 = vpack.c.bf16 %v1803, %v1802
        %v1832 = vpack.c.bf16 %v1805, %v1804
        %v1833 = vpack.c.bf16 %v1807, %v1806
        %v1834 = vpack.c.bf16 %v1809, %v1808
        %v1835 = vpack.c.bf16 %v1811, %v1810
        %v1836 = vpack.c.bf16 %v1813, %v1812
        %v1837 = vpack.c.bf16 %v1815, %v1814
        %v1838 = vpack.c.bf16 %v1817, %v1816
        %v1839 = vpack.c.bf16 %v1819, %v1818
        %v1840 = vpack.c.bf16 %v1821, %v1820
        %v1841 = vpack.c.bf16 %v1823, %v1822
        %v1842 = vpack.c.bf16 %v1825, %v1824
        %v1843 = vpack.c.bf16 %v1827, %v1826
        %v1844 = vld [vmem:[%s3] sm:$0xf]
        %v1845 = vld [vmem:[%s3 + $0x4] sm:$0xf]
        %v1846 = vld [vmem:[%s3 + $0x8] sm:$0xf]
        %v1847 = vld [vmem:[%s3 + $0xc] sm:$0xf]
        %v1852 = vunpack.c.l.b16 %v1844
        %v1853 = vunpack.c.l.b16 %v1845
        %v1854 = vunpack.c.l.b16 %v1846
        %v1855 = vunpack.c.l.b16 %v1847
        %v1856 = vpack.c.b16 %v1853, %v1852
        %v1857 = vpack.c.b16 %v1855, %v1854
        %v1861 = vsel %vm443, %v1828, 0
        %v1864 = vsel %vm443, %v1829, 0
        %v1867 = vsel %vm443, %v1830, 0
        %v1870 = vsel %vm443, %v1831, 0
        %v1873 = vsel %vm443, %v1832, 0
        %v1876 = vsel %vm443, %v1833, 0
        %v1879 = vsel %vm443, %v1834, 0
        %v1882 = vsel %vm443, %v1835, 0
        %v1885 = vsel %vm443, %v1836, 0
        %v1888 = vsel %vm443, %v1837, 0
        %v1891 = vsel %vm443, %v1838, 0
        %v1894 = vsel %vm443, %v1839, 0
        %v1897 = vsel %vm443, %v1840, 0
        %v1900 = vsel %vm443, %v1841, 0
        %v1903 = vsel %vm443, %v1842, 0
        %v1906 = vsel %vm443, %v1843, 0
        %1908 = vmatprep.subr.bf16.mxu0 0
        %1909 = vmatpush1.bf16.msra.mxu0 %v1856
        %1910 = vmatprep.subr.bf16.mxu0 0
        %1911 = vmatpush1.bf16.msra.mxu0 %v1857
        %1912 = vmatprep.subr.bf16.mxu0 0
        %1913 = vmatpush1.bf16.msra.mxu0 0
        %1914 = vmatprep.subr.bf16.mxu0 0
        %1915 = vmatpush1.bf16.msra.mxu0 0
        %1916 = vmatprep.subr.bf16.mxu0 0
        %1917 = vmatpush1.bf16.msra.mxu0 0
        %1918 = vmatprep.subr.bf16.mxu0 0
        %1919 = vmatpush1.bf16.msra.mxu0 0
        %1920 = vmatprep.subr.bf16.mxu0 0
        %1921 = vmatpush1.bf16.msra.mxu0 0
        %1922 = vmatprep.subr.bf16.mxu0 0
        %1923 = vmatpush1.bf16.msra.mxu0 0
        %1924 = vmatprep.subr.bf16.mxu0 0
        %1925 = vmatpush1.bf16.msra.mxu0 0
        %1926 = vmatprep.subr.bf16.mxu0 0
        %1927 = vmatpush1.bf16.msra.mxu0 0
        %1928 = vmatprep.subr.bf16.mxu0 0
        %1929 = vmatpush1.bf16.msra.mxu0 0
        %1930 = vmatprep.subr.bf16.mxu0 0
        %1931 = vmatpush1.bf16.msra.mxu0 0
        %1932 = vmatprep.subr.bf16.mxu0 0
        %1933 = vmatpush1.bf16.msra.mxu0 0
        %1934 = vmatprep.subr.bf16.mxu0 0
        %1935 = vmatpush1.bf16.msra.mxu0 0
        %1936 = vmatprep.subr.bf16.mxu0 0
        %1937 = vmatpush1.bf16.msra.mxu0 0
        %1938 = vmatprep.subr.bf16.mxu0 0
        %1939 = vmatpush1.bf16.msra.mxu0 0
        %1940 = vmatprep.mubr.bf16.mxu0 0
        %1941 = vmatmul.mubr.bf16.gmra.mrb[0].mxu0 %v1861
        %v1942 = vpop.f32.mrb[0].mxu0
        %v1943 = vadd.f32 0.0, %v1942
        %v1944 = vpop.f32.mrb[0].mxu0
        %v1945 = vpop.f32.mrb[0].mxu0
        %v1946 = vadd.f32 0.0, %v1945
        %v1947 = vpop.f32.mrb[0].mxu0
        %1948 = vmatprep.mubr.bf16.mxu0 0
        %1949 = vmatmul.mubr.bf16.gmra.mrb[0].mxu0 %v1864
        %v1950 = vpop.f32.mrb[0].mxu0
        %v1951 = vadd.f32 0.0, %v1950
        %v1952 = vpop.f32.mrb[0].mxu0
        %v1953 = vpop.f32.mrb[0].mxu0
        %v1954 = vadd.f32 0.0, %v1953
        %v1955 = vpop.f32.mrb[0].mxu0
        %1956 = vmatprep.mubr.bf16.mxu0 0
        %1957 = vmatmul.mubr.bf16.gmra.mrb[0].mxu0 %v1867
        %v1958 = vpop.f32.mrb[0].mxu0
        %v1959 = vadd.f32 0.0, %v1958
        %v1960 = vpop.f32.mrb[0].mxu0
        %v1961 = vpop.f32.mrb[0].mxu0
        %v1962 = vadd.f32 0.0, %v1961
        %v1963 = vpop.f32.mrb[0].mxu0
        %1964 = vmatprep.mubr.bf16.mxu0 0
        %1965 = vmatmul.mubr.bf16.gmra.mrb[0].mxu0 %v1870
        %v1966 = vpop.f32.mrb[0].mxu0
        %v1967 = vadd.f32 0.0, %v1966
        %v1968 = vpop.f32.mrb[0].mxu0
        %v1969 = vpop.f32.mrb[0].mxu0
        %v1970 = vadd.f32 0.0, %v1969
        %v1971 = vpop.f32.mrb[0].mxu0
        %1972 = vmatprep.mubr.bf16.mxu0 0
        %1973 = vmatmul.mubr.bf16.gmra.mrb[0].mxu0 %v1873
        %v1974 = vpop.f32.mrb[0].mxu0
        %v1975 = vadd.f32 0.0, %v1974
        %v1976 = vpop.f32.mrb[0].mxu0
        %v1977 = vpop.f32.mrb[0].mxu0
        %v1978 = vadd.f32 0.0, %v1977
        %v1979 = vpop.f32.mrb[0].mxu0
        %1980 = vmatprep.mubr.bf16.mxu0 0
        %1981 = vmatmul.mubr.bf16.gmra.mrb[0].mxu0 %v1876
        %v1982 = vpop.f32.mrb[0].mxu0
        %v1983 = vadd.f32 0.0, %v1982
        %v1984 = vpop.f32.mrb[0].mxu0
        %v1985 = vpop.f32.mrb[0].mxu0
        %v1986 = vadd.f32 0.0, %v1985
        %v1987 = vpop.f32.mrb[0].mxu0
        %1988 = vmatprep.mubr.bf16.mxu0 0
        %1989 = vmatmul.mubr.bf16.gmra.mrb[0].mxu0 %v1879
        %v1990 = vpop.f32.mrb[0].mxu0
        %v1991 = vadd.f32 0.0, %v1990
        %v1992 = vpop.f32.mrb[0].mxu0
        %v1993 = vpop.f32.mrb[0].mxu0
        %v1994 = vadd.f32 0.0, %v1993
        %v1995 = vpop.f32.mrb[0].mxu0
        %1996 = vmatprep.mubr.bf16.mxu0 0
        %1997 = vmatmul.mubr.bf16.gmra.mrb[0].mxu0 %v1882
        %v1998 = vpop.f32.mrb[0].mxu0
        %v1999 = vadd.f32 0.0, %v1998
        %v2000 = vpop.f32.mrb[0].mxu0
        %v2001 = vpop.f32.mrb[0].mxu0
        %v2002 = vadd.f32 0.0, %v2001
        %v2003 = vpop.f32.mrb[0].mxu0
        %2004 = vmatprep.mubr.bf16.mxu0 0
        %2005 = vmatmul.mubr.bf16.gmra.mrb[0].mxu0 %v1885
        %v2006 = vpop.f32.mrb[0].mxu0
        %v2007 = vadd.f32 0.0, %v2006
        %v2008 = vpop.f32.mrb[0].mxu0
        %v2009 = vpop.f32.mrb[0].mxu0
        %v2010 = vadd.f32 0.0, %v2009
        %v2011 = vpop.f32.mrb[0].mxu0
        %2012 = vmatprep.mubr.bf16.mxu0 0
        %2013 = vmatmul.mubr.bf16.gmra.mrb[0].mxu0 %v1888
        %v2014 = vpop.f32.mrb[0].mxu0
        %v2015 = vadd.f32 0.0, %v2014
        %v2016 = vpop.f32.mrb[0].mxu0
        %v2017 = vpop.f32.mrb[0].mxu0
        %v2018 = vadd.f32 0.0, %v2017
        %v2019 = vpop.f32.mrb[0].mxu0
        %2020 = vmatprep.mubr.bf16.mxu0 0
        %2021 = vmatmul.mubr.bf16.gmra.mrb[0].mxu0 %v1891
        %v2022 = vpop.f32.mrb[0].mxu0
        %v2023 = vadd.f32 0.0, %v2022
        %v2024 = vpop.f32.mrb[0].mxu0
        %v2025 = vpop.f32.mrb[0].mxu0
        %v2026 = vadd.f32 0.0, %v2025
        %v2027 = vpop.f32.mrb[0].mxu0
        %2028 = vmatprep.mubr.bf16.mxu0 0
        %2029 = vmatmul.mubr.bf16.gmra.mrb[0].mxu0 %v1894
        %v2030 = vpop.f32.mrb[0].mxu0
        %v2031 = vadd.f32 0.0, %v2030
        %v2032 = vpop.f32.mrb[0].mxu0
        %v2033 = vpop.f32.mrb[0].mxu0
        %v2034 = vadd.f32 0.0, %v2033
        %v2035 = vpop.f32.mrb[0].mxu0
        %2036 = vmatprep.mubr.bf16.mxu0 0
        %2037 = vmatmul.mubr.bf16.gmra.mrb[0].mxu0 %v1897
        %v2038 = vpop.f32.mrb[0].mxu0
        %v2039 = vadd.f32 0.0, %v2038
        %v2040 = vpop.f32.mrb[0].mxu0
        %v2041 = vpop.f32.mrb[0].mxu0
        %v2042 = vadd.f32 0.0, %v2041
        %v2043 = vpop.f32.mrb[0].mxu0
        %2044 = vmatprep.mubr.bf16.mxu0 0
        %2045 = vmatmul.mubr.bf16.gmra.mrb[0].mxu0 %v1900
        %v2046 = vpop.f32.mrb[0].mxu0
        %v2047 = vadd.f32 0.0, %v2046
        %v2048 = vpop.f32.mrb[0].mxu0
        %v2049 = vpop.f32.mrb[0].mxu0
        %v2050 = vadd.f32 0.0, %v2049
        %v2051 = vpop.f32.mrb[0].mxu0
        %2052 = vmatprep.mubr.bf16.mxu0 0
        %2053 = vmatmul.mubr.bf16.gmra.mrb[0].mxu0 %v1903
        %v2054 = vpop.f32.mrb[0].mxu0
        %v2055 = vadd.f32 0.0, %v2054
        %v2056 = vpop.f32.mrb[0].mxu0
        %v2057 = vpop.f32.mrb[0].mxu0
        %v2058 = vadd.f32 0.0, %v2057
        %v2059 = vpop.f32.mrb[0].mxu0
        %2060 = vmatprep.mubr.bf16.mxu0 0
        %2061 = vmatmul.mubr.bf16.gmra.mrb[0].mxu0 %v1906
        %v2062 = vpop.f32.mrb[0].mxu0
        %v2063 = vadd.f32 0.0, %v2062
        %v2064 = vpop.f32.mrb[0].mxu0
        %v2065 = vpop.f32.mrb[0].mxu0
        %v2066 = vadd.f32 0.0, %v2065
        %v2067 = vpop.f32.mrb[0].mxu0
        %2068 = vdwg.mxu0
        %v2073 = vunpack.c.l.b16 %v1631
        %v2074 = vunpack.c.l.b16 %v1632
        %v2075 = vunpack.c.l.b16 %v1633
        %v2076 = vunpack.c.l.b16 %v1634
        %v2077 = vpack.c.b16 %v2074, %v2073
        %v2078 = vpack.c.b16 %v2076, %v2075
        %v2082 = vsel %vm443, %v1614, 0
        %v2085 = vsel %vm443, %v1615, 0
        %v2088 = vsel %vm443, %v1616, 0
        %v2091 = vsel %vm443, %v1617, 0
        %v2094 = vsel %vm443, %v1618, 0
        %v2097 = vsel %vm443, %v1619, 0
        %v2100 = vsel %vm443, %v1620, 0
        %v2103 = vsel %vm443, %v1621, 0
        %v2106 = vsel %vm443, %v1622, 0
        %v2109 = vsel %vm443, %v1623, 0
        %v2112 = vsel %vm443, %v1624, 0
        %v2115 = vsel %vm443, %v1625, 0
        %v2118 = vsel %vm443, %v1626, 0
        %v2121 = vsel %vm443, %v1627, 0
        %v2124 = vsel %vm443, %v1628, 0
        %v2127 = vsel %vm443, %v1629, 0
        %2129 = vmatprep.subr.bf16.mxu0 0
        %2130 = vmatpush1.bf16.msra.mxu0 %v2077
        %2131 = vmatprep.subr.bf16.mxu0 0
        %2132 = vmatpush1.bf16.msra.mxu0 %v2078
        %2133 = vmatprep.subr.bf16.mxu0 0
        %2134 = vmatpush1.bf16.msra.mxu0 0
        %2135 = vmatprep.subr.bf16.mxu0 0
        %2136 = vmatpush1.bf16.msra.mxu0 0
        %2137 = vmatprep.subr.bf16.mxu0 0
        %2138 = vmatpush1.bf16.msra.mxu0 0
        %2139 = vmatprep.subr.bf16.mxu0 0
        %2140 = vmatpush1.bf16.msra.mxu0 0
        %2141 = vmatprep.subr.bf16.mxu0 0
        %2142 = vmatpush1.bf16.msra.mxu0 0
        %2143 = vmatprep.subr.bf16.mxu0 0
        %2144 = vmatpush1.bf16.msra.mxu0 0
        %2145 = vmatprep.subr.bf16.mxu0 0
        %2146 = vmatpush1.bf16.msra.mxu0 0
        %2147 = vmatprep.subr.bf16.mxu0 0
        %2148 = vmatpush1.bf16.msra.mxu0 0
        %2149 = vmatprep.subr.bf16.mxu0 0
        %2150 = vmatpush1.bf16.msra.mxu0 0
        %2151 = vmatprep.subr.bf16.mxu0 0
        %2152 = vmatpush1.bf16.msra.mxu0 0
        %2153 = vmatprep.subr.bf16.mxu0 0
        %2154 = vmatpush1.bf16.msra.mxu0 0
        %2155 = vmatprep.subr.bf16.mxu0 0
        %2156 = vmatpush1.bf16.msra.mxu0 0
        %2157 = vmatprep.subr.bf16.mxu0 0
        %2158 = vmatpush1.bf16.msra.mxu0 0
        %2159 = vmatprep.subr.bf16.mxu0 0
        %2160 = vmatpush1.bf16.msra.mxu0 0
        %2161 = vmatprep.mubr.bf16.mxu0 0
        %2162 = vmatmul.mubr.bf16.gmra.mrb[0].mxu0 %v2082
        %v2163 = vpop.f32.mrb[0].mxu0
        %v2164 = vadd.f32 %v1943, %v2163
        %v2165 = vpop.f32.mrb[0].mxu0
        %v2166 = vpop.f32.mrb[0].mxu0
        %v2167 = vadd.f32 %v1946, %v2166
        %v2168 = vpop.f32.mrb[0].mxu0
        %2169 = vmatprep.mubr.bf16.mxu0 0
        %2170 = vmatmul.mubr.bf16.gmra.mrb[0].mxu0 %v2085
        %v2171 = vpop.f32.mrb[0].mxu0
        %v2172 = vadd.f32 %v1951, %v2171
        %v2173 = vpop.f32.mrb[0].mxu0
        %v2174 = vpop.f32.mrb[0].mxu0
        %v2175 = vadd.f32 %v1954, %v2174
        %v2176 = vpop.f32.mrb[0].mxu0
        %2177 = vmatprep.mubr.bf16.mxu0 0
        %2178 = vmatmul.mubr.bf16.gmra.mrb[0].mxu0 %v2088
        %v2179 = vpop.f32.mrb[0].mxu0
        %v2180 = vadd.f32 %v1959, %v2179
        %v2181 = vpop.f32.mrb[0].mxu0
        %v2182 = vpop.f32.mrb[0].mxu0
        %v2183 = vadd.f32 %v1962, %v2182
        %v2184 = vpop.f32.mrb[0].mxu0
        %2185 = vmatprep.mubr.bf16.mxu0 0
        %2186 = vmatmul.mubr.bf16.gmra.mrb[0].mxu0 %v2091
        %v2187 = vpop.f32.mrb[0].mxu0
        %v2188 = vadd.f32 %v1967, %v2187
        %v2189 = vpop.f32.mrb[0].mxu0
        %v2190 = vpop.f32.mrb[0].mxu0
        %v2191 = vadd.f32 %v1970, %v2190
        %v2192 = vpop.f32.mrb[0].mxu0
        %2193 = vmatprep.mubr.bf16.mxu0 0
        %2194 = vmatmul.mubr.bf16.gmra.mrb[0].mxu0 %v2094
        %v2195 = vpop.f32.mrb[0].mxu0
        %v2196 = vadd.f32 %v1975, %v2195
        %v2197 = vpop.f32.mrb[0].mxu0
        %v2198 = vpop.f32.mrb[0].mxu0
        %v2199 = vadd.f32 %v1978, %v2198
        %v2200 = vpop.f32.mrb[0].mxu0
        %2201 = vmatprep.mubr.bf16.mxu0 0
        %2202 = vmatmul.mubr.bf16.gmra.mrb[0].mxu0 %v2097
        %v2203 = vpop.f32.mrb[0].mxu0
        %v2204 = vadd.f32 %v1983, %v2203
        %v2205 = vpop.f32.mrb[0].mxu0
        %v2206 = vpop.f32.mrb[0].mxu0
        %v2207 = vadd.f32 %v1986, %v2206
        %v2208 = vpop.f32.mrb[0].mxu0
        %2209 = vmatprep.mubr.bf16.mxu0 0
        %2210 = vmatmul.mubr.bf16.gmra.mrb[0].mxu0 %v2100
        %v2211 = vpop.f32.mrb[0].mxu0
        %v2212 = vadd.f32 %v1991, %v2211
        %v2213 = vpop.f32.mrb[0].mxu0
        %v2214 = vpop.f32.mrb[0].mxu0
        %v2215 = vadd.f32 %v1994, %v2214
        %v2216 = vpop.f32.mrb[0].mxu0
        %2217 = vmatprep.mubr.bf16.mxu0 0
        %2218 = vmatmul.mubr.bf16.gmra.mrb[0].mxu0 %v2103
        %v2219 = vpop.f32.mrb[0].mxu0
        %v2220 = vadd.f32 %v1999, %v2219
        %v2221 = vpop.f32.mrb[0].mxu0
        %v2222 = vpop.f32.mrb[0].mxu0
        %v2223 = vadd.f32 %v2002, %v2222
        %v2224 = vpop.f32.mrb[0].mxu0
        %2225 = vmatprep.mubr.bf16.mxu0 0
        %2226 = vmatmul.mubr.bf16.gmra.mrb[0].mxu0 %v2106
        %v2227 = vpop.f32.mrb[0].mxu0
        %v2228 = vadd.f32 %v2007, %v2227
        %v2229 = vpop.f32.mrb[0].mxu0
        %v2230 = vpop.f32.mrb[0].mxu0
        %v2231 = vadd.f32 %v2010, %v2230
        %v2232 = vpop.f32.mrb[0].mxu0
        %2233 = vmatprep.mubr.bf16.mxu0 0
        %2234 = vmatmul.mubr.bf16.gmra.mrb[0].mxu0 %v2109
        %v2235 = vpop.f32.mrb[0].mxu0
        %v2236 = vadd.f32 %v2015, %v2235
        %v2237 = vpop.f32.mrb[0].mxu0
        %v2238 = vpop.f32.mrb[0].mxu0
        %v2239 = vadd.f32 %v2018, %v2238
        %v2240 = vpop.f32.mrb[0].mxu0
        %2241 = vmatprep.mubr.bf16.mxu0 0
        %2242 = vmatmul.mubr.bf16.gmra.mrb[0].mxu0 %v2112
        %v2243 = vpop.f32.mrb[0].mxu0
        %v2244 = vadd.f32 %v2023, %v2243
        %v2245 = vpop.f32.mrb[0].mxu0
        %v2246 = vpop.f32.mrb[0].mxu0
        %v2247 = vadd.f32 %v2026, %v2246
        %v2248 = vpop.f32.mrb[0].mxu0
        %2249 = vmatprep.mubr.bf16.mxu0 0
        %2250 = vmatmul.mubr.bf16.gmra.mrb[0].mxu0 %v2115
        %v2251 = vpop.f32.mrb[0].mxu0
        %v2252 = vadd.f32 %v2031, %v2251
        %v2253 = vpop.f32.mrb[0].mxu0
        %v2254 = vpop.f32.mrb[0].mxu0
        %v2255 = vadd.f32 %v2034, %v2254
        %v2256 = vpop.f32.mrb[0].mxu0
        %2257 = vmatprep.mubr.bf16.mxu0 0
        %2258 = vmatmul.mubr.bf16.gmra.mrb[0].mxu0 %v2118
        %v2259 = vpop.f32.mrb[0].mxu0
        %v2260 = vadd.f32 %v2039, %v2259
        %v2261 = vpop.f32.mrb[0].mxu0
        %v2262 = vpop.f32.mrb[0].mxu0
        %v2263 = vadd.f32 %v2042, %v2262
        %v2264 = vpop.f32.mrb[0].mxu0
        %2265 = vmatprep.mubr.bf16.mxu0 0
        %2266 = vmatmul.mubr.bf16.gmra.mrb[0].mxu0 %v2121
        %v2267 = vpop.f32.mrb[0].mxu0
        %v2268 = vadd.f32 %v2047, %v2267
        %v2269 = vpop.f32.mrb[0].mxu0
        %v2270 = vpop.f32.mrb[0].mxu0
        %v2271 = vadd.f32 %v2050, %v2270
        %v2272 = vpop.f32.mrb[0].mxu0
        %2273 = vmatprep.mubr.bf16.mxu0 0
        %2274 = vmatmul.mubr.bf16.gmra.mrb[0].mxu0 %v2124
        %v2275 = vpop.f32.mrb[0].mxu0
        %v2276 = vadd.f32 %v2055, %v2275
        %v2277 = vpop.f32.mrb[0].mxu0
        %v2278 = vpop.f32.mrb[0].mxu0
        %v2279 = vadd.f32 %v2058, %v2278
        %v2280 = vpop.f32.mrb[0].mxu0
        %2281 = vmatprep.mubr.bf16.mxu0 0
        %2282 = vmatmul.mubr.bf16.gmra.mrb[0].mxu0 %v2127
        %v2283 = vpop.f32.mrb[0].mxu0
        %v2284 = vadd.f32 %v2063, %v2283
        %v2285 = vpop.f32.mrb[0].mxu0
        %v2286 = vpop.f32.mrb[0].mxu0
        %v2287 = vadd.f32 %v2066, %v2286
        %v2288 = vpop.f32.mrb[0].mxu0
        %2289 = vdwg.mxu0
        %v2290 = vsel %vm1486, 1, 0
        %v2291 = vsel %vm1487, 1, 0
        %v2292 = vsel %vm1488, 1, 0
        %v2293 = vsel %vm1489, 1, 0
        %v2294 = vsel %vm1490, 1, 0
        %v2295 = vsel %vm1491, 1, 0
        %v2296 = vsel %vm1492, 1, 0
        %v2297 = vsel %vm1493, 1, 0
        %v2298 = vsel %vm1494, 1, 0
        %v2299 = vsel %vm1495, 1, 0
        %v2300 = vsel %vm1496, 1, 0
        %v2301 = vsel %vm1497, 1, 0
        %v2302 = vsel %vm1498, 1, 0
        %v2303 = vsel %vm1499, 1, 0
        %v2304 = vsel %vm1500, 1, 0
        %v2305 = vsel %vm1501, 1, 0
        %v2306 = vsel %vm1502, 1, 0
        %v2307 = vsel %vm1503, 1, 0
        %v2308 = vsel %vm1504, 1, 0
        %v2309 = vsel %vm1505, 1, 0
        %v2310 = vsel %vm1506, 1, 0
        %v2311 = vsel %vm1507, 1, 0
        %v2312 = vsel %vm1508, 1, 0
        %v2313 = vsel %vm1509, 1, 0
        %v2314 = vsel %vm1510, 1, 0
        %v2315 = vsel %vm1511, 1, 0
        %v2316 = vsel %vm1512, 1, 0
        %v2317 = vsel %vm1513, 1, 0
        %v2318 = vsel %vm1514, 1, 0
        %v2319 = vsel %vm1515, 1, 0
        %v2320 = vsel %vm1516, 1, 0
        %v2321 = vsel %vm1517, 1, 0
        %vm2322 = vcmp.eq.s32.totalorder %v2290, 1
        %vm2323 = vcmp.eq.s32.totalorder %v2291, 1
        %vm2324 = vcmp.eq.s32.totalorder %v2292, 1
        %vm2325 = vcmp.eq.s32.totalorder %v2293, 1
        %vm2326 = vcmp.eq.s32.totalorder %v2294, 1
        %vm2327 = vcmp.eq.s32.totalorder %v2295, 1
        %vm2328 = vcmp.eq.s32.totalorder %v2296, 1
        %vm2329 = vcmp.eq.s32.totalorder %v2297, 1
        %vm2330 = vcmp.eq.s32.totalorder %v2298, 1
        %vm2331 = vcmp.eq.s32.totalorder %v2299, 1
        %vm2332 = vcmp.eq.s32.totalorder %v2300, 1
        %vm2333 = vcmp.eq.s32.totalorder %v2301, 1
        %vm2334 = vcmp.eq.s32.totalorder %v2302, 1
        %vm2335 = vcmp.eq.s32.totalorder %v2303, 1
        %vm2336 = vcmp.eq.s32.totalorder %v2304, 1
        %vm2337 = vcmp.eq.s32.totalorder %v2305, 1
        %vm2338 = vcmp.eq.s32.totalorder %v2306, 1
        %vm2339 = vcmp.eq.s32.totalorder %v2307, 1
        %vm2340 = vcmp.eq.s32.totalorder %v2308, 1
        %vm2341 = vcmp.eq.s32.totalorder %v2309, 1
        %vm2342 = vcmp.eq.s32.totalorder %v2310, 1
        %vm2343 = vcmp.eq.s32.totalorder %v2311, 1
        %vm2344 = vcmp.eq.s32.totalorder %v2312, 1
        %vm2345 = vcmp.eq.s32.totalorder %v2313, 1
        %vm2346 = vcmp.eq.s32.totalorder %v2314, 1
        %vm2347 = vcmp.eq.s32.totalorder %v2315, 1
        %vm2348 = vcmp.eq.s32.totalorder %v2316, 1
        %vm2349 = vcmp.eq.s32.totalorder %v2317, 1
        %vm2350 = vcmp.eq.s32.totalorder %v2318, 1
        %vm2351 = vcmp.eq.s32.totalorder %v2319, 1
        %vm2352 = vcmp.eq.s32.totalorder %v2320, 1
        %vm2353 = vcmp.eq.s32.totalorder %v2321, 1
        %v2354 = vsel %vm2322, %v683, 0.0
        %v2355 = vsel %vm2323, %v684, 0.0
        %v2356 = vsel %vm2324, %v653, 0.0
        %v2357 = vsel %vm2325, %v654, 0.0
        %v2358 = vsel %vm2326, %v655, 0.0
        %v2359 = vsel %vm2327, %v656, 0.0
        %v2360 = vsel %vm2328, %v657, 0.0
        %v2361 = vsel %vm2329, %v658, 0.0
        %v2362 = vsel %vm2330, %v659, 0.0
        %v2363 = vsel %vm2331, %v660, 0.0
        %v2364 = vsel %vm2332, %v661, 0.0
        %v2365 = vsel %vm2333, %v662, 0.0
        %v2366 = vsel %vm2334, %v663, 0.0
        %v2367 = vsel %vm2335, %v664, 0.0
        %v2368 = vsel %vm2336, %v665, 0.0
        %v2369 = vsel %vm2337, %v666, 0.0
        %v2370 = vsel %vm2338, %v667, 0.0
        %v2371 = vsel %vm2339, %v668, 0.0
        %v2372 = vsel %vm2340, %v669, 0.0
        %v2373 = vsel %vm2341, %v670, 0.0
        %v2374 = vsel %vm2342, %v671, 0.0
        %v2375 = vsel %vm2343, %v672, 0.0
        %v2376 = vsel %vm2344, %v673, 0.0
        %v2377 = vsel %vm2345, %v674, 0.0
        %v2378 = vsel %vm2346, %v675, 0.0
        %v2379 = vsel %vm2347, %v676, 0.0
        %v2380 = vsel %vm2348, %v677, 0.0
        %v2381 = vsel %vm2349, %v678, 0.0
        %v2382 = vsel %vm2350, %v679, 0.0
        %v2383 = vsel %vm2351, %v680, 0.0
        %v2384 = vsel %vm2352, %v681, 0.0
        %v2385 = vsel %vm2353, %v682, 0.0
        %v2386 = vpack.c.bf16 %v2355, %v2354
        %v2387 = vpack.c.bf16 %v2357, %v2356
        %v2388 = vpack.c.bf16 %v2359, %v2358
        %v2389 = vpack.c.bf16 %v2361, %v2360
        %v2390 = vpack.c.bf16 %v2363, %v2362
        %v2391 = vpack.c.bf16 %v2365, %v2364
        %v2392 = vpack.c.bf16 %v2367, %v2366
        %v2393 = vpack.c.bf16 %v2369, %v2368
        %v2394 = vpack.c.bf16 %v2371, %v2370
        %v2395 = vpack.c.bf16 %v2373, %v2372
        %v2396 = vpack.c.bf16 %v2375, %v2374
        %v2397 = vpack.c.bf16 %v2377, %v2376
        %v2398 = vpack.c.bf16 %v2379, %v2378
        %v2399 = vpack.c.bf16 %v2381, %v2380
        %v2400 = vpack.c.bf16 %v2383, %v2382
        %v2401 = vpack.c.bf16 %v2385, %v2384
        %s2402 = scalar_lea.vmem %s3, 16
        %v2403 = vld [vmem:[%s2402] sm:$0xf]
        %v2404 = vld [vmem:[%s2402 + $0x4] sm:$0xf]
        %v2405 = vld [vmem:[%s2402 + $0x8] sm:$0xf]
        %v2406 = vld [vmem:[%s2402 + $0xc] sm:$0xf]
        %v2411 = vunpack.c.l.b16 %v2403
        %v2412 = vunpack.c.l.b16 %v2404
        %v2413 = vunpack.c.l.b16 %v2405
        %v2414 = vunpack.c.l.b16 %v2406
        %v2415 = vpack.c.b16 %v2412, %v2411
        %v2416 = vpack.c.b16 %v2414, %v2413
        %v2420 = vsel %vm443, %v2386, 0
        %v2423 = vsel %vm443, %v2387, 0
        %v2426 = vsel %vm443, %v2388, 0
        %v2429 = vsel %vm443, %v2389, 0
        %v2432 = vsel %vm443, %v2390, 0
        %v2435 = vsel %vm443, %v2391, 0
        %v2438 = vsel %vm443, %v2392, 0
        %v2441 = vsel %vm443, %v2393, 0
        %v2444 = vsel %vm443, %v2394, 0
        %v2447 = vsel %vm443, %v2395, 0
        %v2450 = vsel %vm443, %v2396, 0
        %v2453 = vsel %vm443, %v2397, 0
        %v2456 = vsel %vm443, %v2398, 0
        %v2459 = vsel %vm443, %v2399, 0
        %v2462 = vsel %vm443, %v2400, 0
        %v2465 = vsel %vm443, %v2401, 0
        %2467 = vmatprep.subr.bf16.mxu0 0
        %2468 = vmatpush1.bf16.msra.mxu0 %v2415
        %2469 = vmatprep.subr.bf16.mxu0 0
        %2470 = vmatpush1.bf16.msra.mxu0 %v2416
        %2471 = vmatprep.subr.bf16.mxu0 0
        %2472 = vmatpush1.bf16.msra.mxu0 0
        %2473 = vmatprep.subr.bf16.mxu0 0
        %2474 = vmatpush1.bf16.msra.mxu0 0
        %2475 = vmatprep.subr.bf16.mxu0 0
        %2476 = vmatpush1.bf16.msra.mxu0 0
        %2477 = vmatprep.subr.bf16.mxu0 0
        %2478 = vmatpush1.bf16.msra.mxu0 0
        %2479 = vmatprep.subr.bf16.mxu0 0
        %2480 = vmatpush1.bf16.msra.mxu0 0
        %2481 = vmatprep.subr.bf16.mxu0 0
        %2482 = vmatpush1.bf16.msra.mxu0 0
        %2483 = vmatprep.subr.bf16.mxu0 0
        %2484 = vmatpush1.bf16.msra.mxu0 0
        %2485 = vmatprep.subr.bf16.mxu0 0
        %2486 = vmatpush1.bf16.msra.mxu0 0
        %2487 = vmatprep.subr.bf16.mxu0 0
        %2488 = vmatpush1.bf16.msra.mxu0 0
        %2489 = vmatprep.subr.bf16.mxu0 0
        %2490 = vmatpush1.bf16.msra.mxu0 0
        %2491 = vmatprep.subr.bf16.mxu0 0
        %2492 = vmatpush1.bf16.msra.mxu0 0
        %2493 = vmatprep.subr.bf16.mxu0 0
        %2494 = vmatpush1.bf16.msra.mxu0 0
        %2495 = vmatprep.subr.bf16.mxu0 0
        %2496 = vmatpush1.bf16.msra.mxu0 0
        %2497 = vmatprep.subr.bf16.mxu0 0
        %2498 = vmatpush1.bf16.msra.mxu0 0
        %2499 = vmatprep.mubr.bf16.mxu0 0
        %2500 = vmatmul.mubr.bf16.gmra.mrb[0].mxu0 %v2420
        %v2501 = vpop.f32.mrb[0].mxu0
        %v2502 = vadd.f32 0.0, %v2501
        %v2503 = vpop.f32.mrb[0].mxu0
        %v2504 = vpop.f32.mrb[0].mxu0
        %v2505 = vadd.f32 0.0, %v2504
        %v2506 = vpop.f32.mrb[0].mxu0
        %2507 = vmatprep.mubr.bf16.mxu0 0
        %2508 = vmatmul.mubr.bf16.gmra.mrb[0].mxu0 %v2423
        %v2509 = vpop.f32.mrb[0].mxu0
        %v2510 = vadd.f32 0.0, %v2509
        %v2511 = vpop.f32.mrb[0].mxu0
        %v2512 = vpop.f32.mrb[0].mxu0
        %v2513 = vadd.f32 0.0, %v2512
        %v2514 = vpop.f32.mrb[0].mxu0
        %2515 = vmatprep.mubr.bf16.mxu0 0
        %2516 = vmatmul.mubr.bf16.gmra.mrb[0].mxu0 %v2426
        %v2517 = vpop.f32.mrb[0].mxu0
        %v2518 = vadd.f32 0.0, %v2517
        %v2519 = vpop.f32.mrb[0].mxu0
        %v2520 = vpop.f32.mrb[0].mxu0
        %v2521 = vadd.f32 0.0, %v2520
        %v2522 = vpop.f32.mrb[0].mxu0
        %2523 = vmatprep.mubr.bf16.mxu0 0
        %2524 = vmatmul.mubr.bf16.gmra.mrb[0].mxu0 %v2429
        %v2525 = vpop.f32.mrb[0].mxu0
        %v2526 = vadd.f32 0.0, %v2525
        %v2527 = vpop.f32.mrb[0].mxu0
        %v2528 = vpop.f32.mrb[0].mxu0
        %v2529 = vadd.f32 0.0, %v2528
        %v2530 = vpop.f32.mrb[0].mxu0
        %2531 = vmatprep.mubr.bf16.mxu0 0
        %2532 = vmatmul.mubr.bf16.gmra.mrb[0].mxu0 %v2432
        %v2533 = vpop.f32.mrb[0].mxu0
        %v2534 = vadd.f32 0.0, %v2533
        %v2535 = vpop.f32.mrb[0].mxu0
        %v2536 = vpop.f32.mrb[0].mxu0
        %v2537 = vadd.f32 0.0, %v2536
        %v2538 = vpop.f32.mrb[0].mxu0
        %2539 = vmatprep.mubr.bf16.mxu0 0
        %2540 = vmatmul.mubr.bf16.gmra.mrb[0].mxu0 %v2435
        %v2541 = vpop.f32.mrb[0].mxu0
        %v2542 = vadd.f32 0.0, %v2541
        %v2543 = vpop.f32.mrb[0].mxu0
        %v2544 = vpop.f32.mrb[0].mxu0
        %v2545 = vadd.f32 0.0, %v2544
        %v2546 = vpop.f32.mrb[0].mxu0
        %2547 = vmatprep.mubr.bf16.mxu0 0
        %2548 = vmatmul.mubr.bf16.gmra.mrb[0].mxu0 %v2438
        %v2549 = vpop.f32.mrb[0].mxu0
        %v2550 = vadd.f32 0.0, %v2549
        %v2551 = vpop.f32.mrb[0].mxu0
        %v2552 = vpop.f32.mrb[0].mxu0
        %v2553 = vadd.f32 0.0, %v2552
        %v2554 = vpop.f32.mrb[0].mxu0
        %2555 = vmatprep.mubr.bf16.mxu0 0
        %2556 = vmatmul.mubr.bf16.gmra.mrb[0].mxu0 %v2441
        %v2557 = vpop.f32.mrb[0].mxu0
        %v2558 = vadd.f32 0.0, %v2557
        %v2559 = vpop.f32.mrb[0].mxu0
        %v2560 = vpop.f32.mrb[0].mxu0
        %v2561 = vadd.f32 0.0, %v2560
        %v2562 = vpop.f32.mrb[0].mxu0
        %2563 = vmatprep.mubr.bf16.mxu0 0
        %2564 = vmatmul.mubr.bf16.gmra.mrb[0].mxu0 %v2444
        %v2565 = vpop.f32.mrb[0].mxu0
        %v2566 = vadd.f32 0.0, %v2565
        %v2567 = vpop.f32.mrb[0].mxu0
        %v2568 = vpop.f32.mrb[0].mxu0
        %v2569 = vadd.f32 0.0, %v2568
        %v2570 = vpop.f32.mrb[0].mxu0
        %2571 = vmatprep.mubr.bf16.mxu0 0
        %2572 = vmatmul.mubr.bf16.gmra.mrb[0].mxu0 %v2447
        %v2573 = vpop.f32.mrb[0].mxu0
        %v2574 = vadd.f32 0.0, %v2573
        %v2575 = vpop.f32.mrb[0].mxu0
        %v2576 = vpop.f32.mrb[0].mxu0
        %v2577 = vadd.f32 0.0, %v2576
        %v2578 = vpop.f32.mrb[0].mxu0
        %2579 = vmatprep.mubr.bf16.mxu0 0
        %2580 = vmatmul.mubr.bf16.gmra.mrb[0].mxu0 %v2450
        %v2581 = vpop.f32.mrb[0].mxu0
        %v2582 = vadd.f32 0.0, %v2581
        %v2583 = vpop.f32.mrb[0].mxu0
        %v2584 = vpop.f32.mrb[0].mxu0
        %v2585 = vadd.f32 0.0, %v2584
        %v2586 = vpop.f32.mrb[0].mxu0
        %2587 = vmatprep.mubr.bf16.mxu0 0
        %2588 = vmatmul.mubr.bf16.gmra.mrb[0].mxu0 %v2453
        %v2589 = vpop.f32.mrb[0].mxu0
        %v2590 = vadd.f32 0.0, %v2589
        %v2591 = vpop.f32.mrb[0].mxu0
        %v2592 = vpop.f32.mrb[0].mxu0
        %v2593 = vadd.f32 0.0, %v2592
        %v2594 = vpop.f32.mrb[0].mxu0
        %2595 = vmatprep.mubr.bf16.mxu0 0
        %2596 = vmatmul.mubr.bf16.gmra.mrb[0].mxu0 %v2456
        %v2597 = vpop.f32.mrb[0].mxu0
        %v2598 = vadd.f32 0.0, %v2597
        %v2599 = vpop.f32.mrb[0].mxu0
        %v2600 = vpop.f32.mrb[0].mxu0
        %v2601 = vadd.f32 0.0, %v2600
        %v2602 = vpop.f32.mrb[0].mxu0
        %2603 = vmatprep.mubr.bf16.mxu0 0
        %2604 = vmatmul.mubr.bf16.gmra.mrb[0].mxu0 %v2459
        %v2605 = vpop.f32.mrb[0].mxu0
        %v2606 = vadd.f32 0.0, %v2605
        %v2607 = vpop.f32.mrb[0].mxu0
        %v2608 = vpop.f32.mrb[0].mxu0
        %v2609 = vadd.f32 0.0, %v2608
        %v2610 = vpop.f32.mrb[0].mxu0
        %2611 = vmatprep.mubr.bf16.mxu0 0
        %2612 = vmatmul.mubr.bf16.gmra.mrb[0].mxu0 %v2462
        %v2613 = vpop.f32.mrb[0].mxu0
        %v2614 = vadd.f32 0.0, %v2613
        %v2615 = vpop.f32.mrb[0].mxu0
        %v2616 = vpop.f32.mrb[0].mxu0
        %v2617 = vadd.f32 0.0, %v2616
        %v2618 = vpop.f32.mrb[0].mxu0
        %2619 = vmatprep.mubr.bf16.mxu0 0
        %2620 = vmatmul.mubr.bf16.gmra.mrb[0].mxu0 %v2465
        %v2621 = vpop.f32.mrb[0].mxu0
        %v2622 = vadd.f32 0.0, %v2621
        %v2623 = vpop.f32.mrb[0].mxu0
        %v2624 = vpop.f32.mrb[0].mxu0
        %v2625 = vadd.f32 0.0, %v2624
        %v2626 = vpop.f32.mrb[0].mxu0
        %2627 = vdwg.mxu0
        %v2628 = vadd.f32 %v2164, %v2502
        %v2629 = vadd.f32 %v2167, %v2505
        %v2630 = vadd.f32 %v2172, %v2510
        %v2631 = vadd.f32 %v2175, %v2513
        %v2632 = vadd.f32 %v2180, %v2518
        %v2633 = vadd.f32 %v2183, %v2521
        %v2634 = vadd.f32 %v2188, %v2526
        %v2635 = vadd.f32 %v2191, %v2529
        %v2636 = vadd.f32 %v2196, %v2534
        %v2637 = vadd.f32 %v2199, %v2537
        %v2638 = vadd.f32 %v2204, %v2542
        %v2639 = vadd.f32 %v2207, %v2545
        %v2640 = vadd.f32 %v2212, %v2550
        %v2641 = vadd.f32 %v2215, %v2553
        %v2642 = vadd.f32 %v2220, %v2558
        %v2643 = vadd.f32 %v2223, %v2561
        %v2644 = vadd.f32 %v2228, %v2566
        %v2645 = vadd.f32 %v2231, %v2569
        %v2646 = vadd.f32 %v2236, %v2574
        %v2647 = vadd.f32 %v2239, %v2577
        %v2648 = vadd.f32 %v2244, %v2582
        %v2649 = vadd.f32 %v2247, %v2585
        %v2650 = vadd.f32 %v2252, %v2590
        %v2651 = vadd.f32 %v2255, %v2593
        %v2652 = vadd.f32 %v2260, %v2598
        %v2653 = vadd.f32 %v2263, %v2601
        %v2654 = vadd.f32 %v2268, %v2606
        %v2655 = vadd.f32 %v2271, %v2609
        %v2656 = vadd.f32 %v2276, %v2614
        %v2657 = vadd.f32 %v2279, %v2617
        %v2658 = vadd.f32 %v2284, %v2622
        %v2659 = vadd.f32 %v2287, %v2625
        %v2660 = vrot.slane %v653, 1
        %v2661 = vrot.slane %v654, 1
        %v2662 = vrot.slane %v655, 1
        %v2663 = vrot.slane %v656, 1
        %v2664 = vrot.slane %v657, 1
        %v2665 = vrot.slane %v658, 1
        %v2666 = vrot.slane %v659, 1
        %v2667 = vrot.slane %v660, 1
        %v2668 = vrot.slane %v661, 1
        %v2669 = vrot.slane %v662, 1
        %v2670 = vrot.slane %v663, 1
        %v2671 = vrot.slane %v664, 1
        %v2672 = vrot.slane %v665, 1
        %v2673 = vrot.slane %v666, 1
        %v2674 = vrot.slane %v667, 1
        %v2675 = vrot.slane %v668, 1
        %v2676 = vrot.slane %v669, 1
        %v2677 = vrot.slane %v670, 1
        %v2678 = vrot.slane %v671, 1
        %v2679 = vrot.slane %v672, 1
        %v2680 = vrot.slane %v673, 1
        %v2681 = vrot.slane %v674, 1
        %v2682 = vrot.slane %v675, 1
        %v2683 = vrot.slane %v676, 1
        %v2684 = vrot.slane %v677, 1
        %v2685 = vrot.slane %v678, 1
        %v2686 = vrot.slane %v679, 1
        %v2687 = vrot.slane %v680, 1
        %v2688 = vrot.slane %v681, 1
        %v2689 = vrot.slane %v682, 1
        %v2690 = vrot.slane %v683, 1
        %v2691 = vrot.slane %v684, 1
        %vm2692 = vcmp.lt.s32.totalorder %v686, 7
        %v2693 = vsel %vm2692, %v2690, %v2691
        %v2694 = vsel %vm2692, %v2689, %v2690
        %v2695 = vsel %vm2692, %v2688, %v2689
        %v2696 = vsel %vm2692, %v2687, %v2688
        %v2697 = vsel %vm2692, %v2686, %v2687
        %v2698 = vsel %vm2692, %v2685, %v2686
        %v2699 = vsel %vm2692, %v2684, %v2685
        %v2700 = vsel %vm2692, %v2683, %v2684
        %v2701 = vsel %vm2692, %v2682, %v2683
        %v2702 = vsel %vm2692, %v2681, %v2682
        %v2703 = vsel %vm2692, %v2680, %v2681
        %v2704 = vsel %vm2692, %v2679, %v2680
        %v2705 = vsel %vm2692, %v2678, %v2679
        %v2706 = vsel %vm2692, %v2677, %v2678
        %v2707 = vsel %vm2692, %v2676, %v2677
        %v2708 = vsel %vm2692, %v2675, %v2676
        %v2709 = vsel %vm2692, %v2674, %v2675
        %v2710 = vsel %vm2692, %v2673, %v2674
        %v2711 = vsel %vm2692, %v2672, %v2673
        %v2712 = vsel %vm2692, %v2671, %v2672
        %v2713 = vsel %vm2692, %v2670, %v2671
        %v2714 = vsel %vm2692, %v2669, %v2670
        %v2715 = vsel %vm2692, %v2668, %v2669
        %v2716 = vsel %vm2692, %v2667, %v2668
        %v2717 = vsel %vm2692, %v2666, %v2667
        %v2718 = vsel %vm2692, %v2665, %v2666
        %v2719 = vsel %vm2692, %v2664, %v2665
        %v2720 = vsel %vm2692, %v2663, %v2664
        %v2721 = vsel %vm2692, %v2662, %v2663
        %v2722 = vsel %vm2692, %v2661, %v2662
        %v2723 = vsel %vm2692, %v2660, %v2661
        %v2724 = vsel %vm2692, %v2691, %v2660
        %vm2725 = vmand %vm1486, %vm1582
        %vm2726 = vmand %vm1487, %vm1583
        %vm2727 = vmand %vm1488, %vm1584
        %vm2728 = vmand %vm1489, %vm1585
        %vm2729 = vmand %vm1490, %vm1586
        %vm2730 = vmand %vm1491, %vm1587
        %vm2731 = vmand %vm1492, %vm1588
        %vm2732 = vmand %vm1493, %vm1589
        %vm2733 = vmand %vm1494, %vm1590
        %vm2734 = vmand %vm1495, %vm1591
        %vm2735 = vmand %vm1496, %vm1592
        %vm2736 = vmand %vm1497, %vm1593
        %vm2737 = vmand %vm1498, %vm1594
        %vm2738 = vmand %vm1499, %vm1595
        %vm2739 = vmand %vm1500, %vm1596
        %vm2740 = vmand %vm1501, %vm1597
        %vm2741 = vmand %vm1502, %vm1598
        %vm2742 = vmand %vm1503, %vm1599
        %vm2743 = vmand %vm1504, %vm1600
        %vm2744 = vmand %vm1505, %vm1601
        %vm2745 = vmand %vm1506, %vm1602
        %vm2746 = vmand %vm1507, %vm1603
        %vm2747 = vmand %vm1508, %vm1604
        %vm2748 = vmand %vm1509, %vm1605
        %vm2749 = vmand %vm1510, %vm1606
        %vm2750 = vmand %vm1511, %vm1607
        %vm2751 = vmand %vm1512, %vm1608
        %vm2752 = vmand %vm1513, %vm1609
        %vm2753 = vmand %vm1514, %vm1610
        %vm2754 = vmand %vm1515, %vm1611
        %vm2755 = vmand %vm1516, %vm1612
        %vm2756 = vmand %vm1517, %vm1613
        %v2757 = vsel %vm2725, 1, 0
        %v2758 = vsel %vm2726, 1, 0
        %v2759 = vsel %vm2727, 1, 0
        %v2760 = vsel %vm2728, 1, 0
        %v2761 = vsel %vm2729, 1, 0
        %v2762 = vsel %vm2730, 1, 0
        %v2763 = vsel %vm2731, 1, 0
        %v2764 = vsel %vm2732, 1, 0
        %v2765 = vsel %vm2733, 1, 0
        %v2766 = vsel %vm2734, 1, 0
        %v2767 = vsel %vm2735, 1, 0
        %v2768 = vsel %vm2736, 1, 0
        %v2769 = vsel %vm2737, 1, 0
        %v2770 = vsel %vm2738, 1, 0
        %v2771 = vsel %vm2739, 1, 0
        %v2772 = vsel %vm2740, 1, 0
        %v2773 = vsel %vm2741, 1, 0
        %v2774 = vsel %vm2742, 1, 0
        %v2775 = vsel %vm2743, 1, 0
        %v2776 = vsel %vm2744, 1, 0
        %v2777 = vsel %vm2745, 1, 0
        %v2778 = vsel %vm2746, 1, 0
        %v2779 = vsel %vm2747, 1, 0
        %v2780 = vsel %vm2748, 1, 0
        %v2781 = vsel %vm2749, 1, 0
        %v2782 = vsel %vm2750, 1, 0
        %v2783 = vsel %vm2751, 1, 0
        %v2784 = vsel %vm2752, 1, 0
        %v2785 = vsel %vm2753, 1, 0
        %v2786 = vsel %vm2754, 1, 0
        %v2787 = vsel %vm2755, 1, 0
        %v2788 = vsel %vm2756, 1, 0
        %vm2789 = vcmp.eq.s32.totalorder %v2757, 1
        %vm2790 = vcmp.eq.s32.totalorder %v2758, 1
        %vm2791 = vcmp.eq.s32.totalorder %v2759, 1
        %vm2792 = vcmp.eq.s32.totalorder %v2760, 1
        %vm2793 = vcmp.eq.s32.totalorder %v2761, 1
        %vm2794 = vcmp.eq.s32.totalorder %v2762, 1
        %vm2795 = vcmp.eq.s32.totalorder %v2763, 1
        %vm2796 = vcmp.eq.s32.totalorder %v2764, 1
        %vm2797 = vcmp.eq.s32.totalorder %v2765, 1
        %vm2798 = vcmp.eq.s32.totalorder %v2766, 1
        %vm2799 = vcmp.eq.s32.totalorder %v2767, 1
        %vm2800 = vcmp.eq.s32.totalorder %v2768, 1
        %vm2801 = vcmp.eq.s32.totalorder %v2769, 1
        %vm2802 = vcmp.eq.s32.totalorder %v2770, 1
        %vm2803 = vcmp.eq.s32.totalorder %v2771, 1
        %vm2804 = vcmp.eq.s32.totalorder %v2772, 1
        %vm2805 = vcmp.eq.s32.totalorder %v2773, 1
        %vm2806 = vcmp.eq.s32.totalorder %v2774, 1
        %vm2807 = vcmp.eq.s32.totalorder %v2775, 1
        %vm2808 = vcmp.eq.s32.totalorder %v2776, 1
        %vm2809 = vcmp.eq.s32.totalorder %v2777, 1
        %vm2810 = vcmp.eq.s32.totalorder %v2778, 1
        %vm2811 = vcmp.eq.s32.totalorder %v2779, 1
        %vm2812 = vcmp.eq.s32.totalorder %v2780, 1
        %vm2813 = vcmp.eq.s32.totalorder %v2781, 1
        %vm2814 = vcmp.eq.s32.totalorder %v2782, 1
        %vm2815 = vcmp.eq.s32.totalorder %v2783, 1
        %vm2816 = vcmp.eq.s32.totalorder %v2784, 1
        %vm2817 = vcmp.eq.s32.totalorder %v2785, 1
        %vm2818 = vcmp.eq.s32.totalorder %v2786, 1
        %vm2819 = vcmp.eq.s32.totalorder %v2787, 1
        %vm2820 = vcmp.eq.s32.totalorder %v2788, 1
        %v2821 = vsel %vm2789, %v2693, 0.0
        %v2822 = vsel %vm2790, %v2724, 0.0
        %v2823 = vsel %vm2791, %v2723, 0.0
        %v2824 = vsel %vm2792, %v2722, 0.0
        %v2825 = vsel %vm2793, %v2721, 0.0
        %v2826 = vsel %vm2794, %v2720, 0.0
        %v2827 = vsel %vm2795, %v2719, 0.0
        %v2828 = vsel %vm2796, %v2718, 0.0
        %v2829 = vsel %vm2797, %v2717, 0.0
        %v2830 = vsel %vm2798, %v2716, 0.0
        %v2831 = vsel %vm2799, %v2715, 0.0
        %v2832 = vsel %vm2800, %v2714, 0.0
        %v2833 = vsel %vm2801, %v2713, 0.0
        %v2834 = vsel %vm2802, %v2712, 0.0
        %v2835 = vsel %vm2803, %v2711, 0.0
        %v2836 = vsel %vm2804, %v2710, 0.0
        %v2837 = vsel %vm2805, %v2709, 0.0
        %v2838 = vsel %vm2806, %v2708, 0.0
        %v2839 = vsel %vm2807, %v2707, 0.0
        %v2840 = vsel %vm2808, %v2706, 0.0
        %v2841 = vsel %vm2809, %v2705, 0.0
        %v2842 = vsel %vm2810, %v2704, 0.0
        %v2843 = vsel %vm2811, %v2703, 0.0
        %v2844 = vsel %vm2812, %v2702, 0.0
        %v2845 = vsel %vm2813, %v2701, 0.0
        %v2846 = vsel %vm2814, %v2700, 0.0
        %v2847 = vsel %vm2815, %v2699, 0.0
        %v2848 = vsel %vm2816, %v2698, 0.0
        %v2849 = vsel %vm2817, %v2697, 0.0
        %v2850 = vsel %vm2818, %v2696, 0.0
        %v2851 = vsel %vm2819, %v2695, 0.0
        %v2852 = vsel %vm2820, %v2694, 0.0
        %v2853 = vpack.c.bf16 %v2822, %v2821
        %v2854 = vpack.c.bf16 %v2824, %v2823
        %v2855 = vpack.c.bf16 %v2826, %v2825
        %v2856 = vpack.c.bf16 %v2828, %v2827
        %v2857 = vpack.c.bf16 %v2830, %v2829
        %v2858 = vpack.c.bf16 %v2832, %v2831
        %v2859 = vpack.c.bf16 %v2834, %v2833
        %v2860 = vpack.c.bf16 %v2836, %v2835
        %v2861 = vpack.c.bf16 %v2838, %v2837
        %v2862 = vpack.c.bf16 %v2840, %v2839
        %v2863 = vpack.c.bf16 %v2842, %v2841
        %v2864 = vpack.c.bf16 %v2844, %v2843
        %v2865 = vpack.c.bf16 %v2846, %v2845
        %v2866 = vpack.c.bf16 %v2848, %v2847
        %v2867 = vpack.c.bf16 %v2850, %v2849
        %v2868 = vpack.c.bf16 %v2852, %v2851
        %s2869 = scalar_lea.vmem %s3, 32
        %v2870 = vld [vmem:[%s2869] sm:$0xf]
        %v2871 = vld [vmem:[%s2869 + $0x4] sm:$0xf]
        %v2872 = vld [vmem:[%s2869 + $0x8] sm:$0xf]
        %v2873 = vld [vmem:[%s2869 + $0xc] sm:$0xf]
        %v2878 = vunpack.c.l.b16 %v2870
        %v2879 = vunpack.c.l.b16 %v2871
        %v2880 = vunpack.c.l.b16 %v2872
        %v2881 = vunpack.c.l.b16 %v2873
        %v2882 = vpack.c.b16 %v2879, %v2878
        %v2883 = vpack.c.b16 %v2881, %v2880
        %v2887 = vsel %vm443, %v2853, 0
        %v2890 = vsel %vm443, %v2854, 0
        %v2893 = vsel %vm443, %v2855, 0
        %v2896 = vsel %vm443, %v2856, 0
        %v2899 = vsel %vm443, %v2857, 0
        %v2902 = vsel %vm443, %v2858, 0
        %v2905 = vsel %vm443, %v2859, 0
        %v2908 = vsel %vm443, %v2860, 0
        %v2911 = vsel %vm443, %v2861, 0
        %v2914 = vsel %vm443, %v2862, 0
        %v2917 = vsel %vm443, %v2863, 0
        %v2920 = vsel %vm443, %v2864, 0
        %v2923 = vsel %vm443, %v2865, 0
        %v2926 = vsel %vm443, %v2866, 0
        %v2929 = vsel %vm443, %v2867, 0
        %v2932 = vsel %vm443, %v2868, 0
        %2934 = vmatprep.subr.bf16.mxu0 0
        %2935 = vmatpush1.bf16.msra.mxu0 %v2882
        %2936 = vmatprep.subr.bf16.mxu0 0
        %2937 = vmatpush1.bf16.msra.mxu0 %v2883
        %2938 = vmatprep.subr.bf16.mxu0 0
        %2939 = vmatpush1.bf16.msra.mxu0 0
        %2940 = vmatprep.subr.bf16.mxu0 0
        %2941 = vmatpush1.bf16.msra.mxu0 0
        %2942 = vmatprep.subr.bf16.mxu0 0
        %2943 = vmatpush1.bf16.msra.mxu0 0
        %2944 = vmatprep.subr.bf16.mxu0 0
        %2945 = vmatpush1.bf16.msra.mxu0 0
        %2946 = vmatprep.subr.bf16.mxu0 0
        %2947 = vmatpush1.bf16.msra.mxu0 0
        %2948 = vmatprep.subr.bf16.mxu0 0
        %2949 = vmatpush1.bf16.msra.mxu0 0
        %2950 = vmatprep.subr.bf16.mxu0 0
        %2951 = vmatpush1.bf16.msra.mxu0 0
        %2952 = vmatprep.subr.bf16.mxu0 0
        %2953 = vmatpush1.bf16.msra.mxu0 0
        %2954 = vmatprep.subr.bf16.mxu0 0
        %2955 = vmatpush1.bf16.msra.mxu0 0
        %2956 = vmatprep.subr.bf16.mxu0 0
        %2957 = vmatpush1.bf16.msra.mxu0 0
        %2958 = vmatprep.subr.bf16.mxu0 0
        %2959 = vmatpush1.bf16.msra.mxu0 0
        %2960 = vmatprep.subr.bf16.mxu0 0
        %2961 = vmatpush1.bf16.msra.mxu0 0
        %2962 = vmatprep.subr.bf16.mxu0 0
        %2963 = vmatpush1.bf16.msra.mxu0 0
        %2964 = vmatprep.subr.bf16.mxu0 0
        %2965 = vmatpush1.bf16.msra.mxu0 0
        %2966 = vmatprep.mubr.bf16.mxu0 0
        %2967 = vmatmul.mubr.bf16.gmra.mrb[0].mxu0 %v2887
        %v2968 = vpop.f32.mrb[0].mxu0
        %v2969 = vadd.f32 0.0, %v2968
        %v2970 = vpop.f32.mrb[0].mxu0
        %v2971 = vpop.f32.mrb[0].mxu0
        %v2972 = vadd.f32 0.0, %v2971
        %v2973 = vpop.f32.mrb[0].mxu0
        %2974 = vmatprep.mubr.bf16.mxu0 0
        %2975 = vmatmul.mubr.bf16.gmra.mrb[0].mxu0 %v2890
        %v2976 = vpop.f32.mrb[0].mxu0
        %v2977 = vadd.f32 0.0, %v2976
        %v2978 = vpop.f32.mrb[0].mxu0
        %v2979 = vpop.f32.mrb[0].mxu0
        %v2980 = vadd.f32 0.0, %v2979
        %v2981 = vpop.f32.mrb[0].mxu0
        %2982 = vmatprep.mubr.bf16.mxu0 0
        %2983 = vmatmul.mubr.bf16.gmra.mrb[0].mxu0 %v2893
        %v2984 = vpop.f32.mrb[0].mxu0
        %v2985 = vadd.f32 0.0, %v2984
        %v2986 = vpop.f32.mrb[0].mxu0
        %v2987 = vpop.f32.mrb[0].mxu0
        %v2988 = vadd.f32 0.0, %v2987
        %v2989 = vpop.f32.mrb[0].mxu0
        %2990 = vmatprep.mubr.bf16.mxu0 0
        %2991 = vmatmul.mubr.bf16.gmra.mrb[0].mxu0 %v2896
        %v2992 = vpop.f32.mrb[0].mxu0
        %v2993 = vadd.f32 0.0, %v2992
        %v2994 = vpop.f32.mrb[0].mxu0
        %v2995 = vpop.f32.mrb[0].mxu0
        %v2996 = vadd.f32 0.0, %v2995
        %v2997 = vpop.f32.mrb[0].mxu0
        %2998 = vmatprep.mubr.bf16.mxu0 0
        %2999 = vmatmul.mubr.bf16.gmra.mrb[0].mxu0 %v2899
        %v3000 = vpop.f32.mrb[0].mxu0
        %v3001 = vadd.f32 0.0, %v3000
        %v3002 = vpop.f32.mrb[0].mxu0
        %v3003 = vpop.f32.mrb[0].mxu0
        %v3004 = vadd.f32 0.0, %v3003
        %v3005 = vpop.f32.mrb[0].mxu0
        %3006 = vmatprep.mubr.bf16.mxu0 0
        %3007 = vmatmul.mubr.bf16.gmra.mrb[0].mxu0 %v2902
        %v3008 = vpop.f32.mrb[0].mxu0
        %v3009 = vadd.f32 0.0, %v3008
        %v3010 = vpop.f32.mrb[0].mxu0
        %v3011 = vpop.f32.mrb[0].mxu0
        %v3012 = vadd.f32 0.0, %v3011
        %v3013 = vpop.f32.mrb[0].mxu0
        %3014 = vmatprep.mubr.bf16.mxu0 0
        %3015 = vmatmul.mubr.bf16.gmra.mrb[0].mxu0 %v2905
        %v3016 = vpop.f32.mrb[0].mxu0
        %v3017 = vadd.f32 0.0, %v3016
        %v3018 = vpop.f32.mrb[0].mxu0
        %v3019 = vpop.f32.mrb[0].mxu0
        %v3020 = vadd.f32 0.0, %v3019
        %v3021 = vpop.f32.mrb[0].mxu0
        %3022 = vmatprep.mubr.bf16.mxu0 0
        %3023 = vmatmul.mubr.bf16.gmra.mrb[0].mxu0 %v2908
        %v3024 = vpop.f32.mrb[0].mxu0
        %v3025 = vadd.f32 0.0, %v3024
        %v3026 = vpop.f32.mrb[0].mxu0
        %v3027 = vpop.f32.mrb[0].mxu0
        %v3028 = vadd.f32 0.0, %v3027
        %v3029 = vpop.f32.mrb[0].mxu0
        %3030 = vmatprep.mubr.bf16.mxu0 0
        %3031 = vmatmul.mubr.bf16.gmra.mrb[0].mxu0 %v2911
        %v3032 = vpop.f32.mrb[0].mxu0
        %v3033 = vadd.f32 0.0, %v3032
        %v3034 = vpop.f32.mrb[0].mxu0
        %v3035 = vpop.f32.mrb[0].mxu0
        %v3036 = vadd.f32 0.0, %v3035
        %v3037 = vpop.f32.mrb[0].mxu0
        %3038 = vmatprep.mubr.bf16.mxu0 0
        %3039 = vmatmul.mubr.bf16.gmra.mrb[0].mxu0 %v2914
        %v3040 = vpop.f32.mrb[0].mxu0
        %v3041 = vadd.f32 0.0, %v3040
        %v3042 = vpop.f32.mrb[0].mxu0
        %v3043 = vpop.f32.mrb[0].mxu0
        %v3044 = vadd.f32 0.0, %v3043
        %v3045 = vpop.f32.mrb[0].mxu0
        %3046 = vmatprep.mubr.bf16.mxu0 0
        %3047 = vmatmul.mubr.bf16.gmra.mrb[0].mxu0 %v2917
        %v3048 = vpop.f32.mrb[0].mxu0
        %v3049 = vadd.f32 0.0, %v3048
        %v3050 = vpop.f32.mrb[0].mxu0
        %v3051 = vpop.f32.mrb[0].mxu0
        %v3052 = vadd.f32 0.0, %v3051
        %v3053 = vpop.f32.mrb[0].mxu0
        %3054 = vmatprep.mubr.bf16.mxu0 0
        %3055 = vmatmul.mubr.bf16.gmra.mrb[0].mxu0 %v2920
        %v3056 = vpop.f32.mrb[0].mxu0
        %v3057 = vadd.f32 0.0, %v3056
        %v3058 = vpop.f32.mrb[0].mxu0
        %v3059 = vpop.f32.mrb[0].mxu0
        %v3060 = vadd.f32 0.0, %v3059
        %v3061 = vpop.f32.mrb[0].mxu0
        %3062 = vmatprep.mubr.bf16.mxu0 0
        %3063 = vmatmul.mubr.bf16.gmra.mrb[0].mxu0 %v2923
        %v3064 = vpop.f32.mrb[0].mxu0
        %v3065 = vadd.f32 0.0, %v3064
        %v3066 = vpop.f32.mrb[0].mxu0
        %v3067 = vpop.f32.mrb[0].mxu0
        %v3068 = vadd.f32 0.0, %v3067
        %v3069 = vpop.f32.mrb[0].mxu0
        %3070 = vmatprep.mubr.bf16.mxu0 0
        %3071 = vmatmul.mubr.bf16.gmra.mrb[0].mxu0 %v2926
        %v3072 = vpop.f32.mrb[0].mxu0
        %v3073 = vadd.f32 0.0, %v3072
        %v3074 = vpop.f32.mrb[0].mxu0
        %v3075 = vpop.f32.mrb[0].mxu0
        %v3076 = vadd.f32 0.0, %v3075
        %v3077 = vpop.f32.mrb[0].mxu0
        %3078 = vmatprep.mubr.bf16.mxu0 0
        %3079 = vmatmul.mubr.bf16.gmra.mrb[0].mxu0 %v2929
        %v3080 = vpop.f32.mrb[0].mxu0
        %v3081 = vadd.f32 0.0, %v3080
        %v3082 = vpop.f32.mrb[0].mxu0
        %v3083 = vpop.f32.mrb[0].mxu0
        %v3084 = vadd.f32 0.0, %v3083
        %v3085 = vpop.f32.mrb[0].mxu0
        %3086 = vmatprep.mubr.bf16.mxu0 0
        %3087 = vmatmul.mubr.bf16.gmra.mrb[0].mxu0 %v2932
        %v3088 = vpop.f32.mrb[0].mxu0
        %v3089 = vadd.f32 0.0, %v3088
        %v3090 = vpop.f32.mrb[0].mxu0
        %v3091 = vpop.f32.mrb[0].mxu0
        %v3092 = vadd.f32 0.0, %v3091
        %v3093 = vpop.f32.mrb[0].mxu0
        %3094 = vdwg.mxu0
        %v3095 = vadd.f32 %v2628, %v2969
        %v3096 = vadd.f32 %v2629, %v2972
        %v3097 = vadd.f32 %v2630, %v2977
        %v3098 = vadd.f32 %v2631, %v2980
        %v3099 = vadd.f32 %v2632, %v2985
        %v3100 = vadd.f32 %v2633, %v2988
        %v3101 = vadd.f32 %v2634, %v2993
        %v3102 = vadd.f32 %v2635, %v2996
        %v3103 = vadd.f32 %v2636, %v3001
        %v3104 = vadd.f32 %v2637, %v3004
        %v3105 = vadd.f32 %v2638, %v3009
        %v3106 = vadd.f32 %v2639, %v3012
        %v3107 = vadd.f32 %v2640, %v3017
        %v3108 = vadd.f32 %v2641, %v3020
        %v3109 = vadd.f32 %v2642, %v3025
        %v3110 = vadd.f32 %v2643, %v3028
        %v3111 = vadd.f32 %v2644, %v3033
        %v3112 = vadd.f32 %v2645, %v3036
        %v3113 = vadd.f32 %v2646, %v3041
        %v3114 = vadd.f32 %v2647, %v3044
        %v3115 = vadd.f32 %v2648, %v3049
        %v3116 = vadd.f32 %v2649, %v3052
        %v3117 = vadd.f32 %v2650, %v3057
        %v3118 = vadd.f32 %v2651, %v3060
        %v3119 = vadd.f32 %v2652, %v3065
        %v3120 = vadd.f32 %v2653, %v3068
        %v3121 = vadd.f32 %v2654, %v3073
        %v3122 = vadd.f32 %v2655, %v3076
        %v3123 = vadd.f32 %v2656, %v3081
        %v3124 = vadd.f32 %v2657, %v3084
        %v3125 = vadd.f32 %v2658, %v3089
        %v3126 = vadd.f32 %v2659, %v3092
        %v3127 = vsel %vm1550, 1, 0
        %v3128 = vsel %vm1551, 1, 0
        %v3129 = vsel %vm1552, 1, 0
        %v3130 = vsel %vm1553, 1, 0
        %v3131 = vsel %vm1554, 1, 0
        %v3132 = vsel %vm1555, 1, 0
        %v3133 = vsel %vm1556, 1, 0
        %v3134 = vsel %vm1557, 1, 0
        %v3135 = vsel %vm1558, 1, 0
        %v3136 = vsel %vm1559, 1, 0
        %v3137 = vsel %vm1560, 1, 0
        %v3138 = vsel %vm1561, 1, 0
        %v3139 = vsel %vm1562, 1, 0
        %v3140 = vsel %vm1563, 1, 0
        %v3141 = vsel %vm1564, 1, 0
        %v3142 = vsel %vm1565, 1, 0
        %v3143 = vsel %vm1566, 1, 0
        %v3144 = vsel %vm1567, 1, 0
        %v3145 = vsel %vm1568, 1, 0
        %v3146 = vsel %vm1569, 1, 0
        %v3147 = vsel %vm1570, 1, 0
        %v3148 = vsel %vm1571, 1, 0
        %v3149 = vsel %vm1572, 1, 0
        %v3150 = vsel %vm1573, 1, 0
        %v3151 = vsel %vm1574, 1, 0
        %v3152 = vsel %vm1575, 1, 0
        %v3153 = vsel %vm1576, 1, 0
        %v3154 = vsel %vm1577, 1, 0
        %v3155 = vsel %vm1578, 1, 0
        %v3156 = vsel %vm1579, 1, 0
        %v3157 = vsel %vm1580, 1, 0
        %v3158 = vsel %vm1581, 1, 0
        %vm3159 = vcmp.eq.s32.totalorder %v3127, 1
        %vm3160 = vcmp.eq.s32.totalorder %v3128, 1
        %vm3161 = vcmp.eq.s32.totalorder %v3129, 1
        %vm3162 = vcmp.eq.s32.totalorder %v3130, 1
        %vm3163 = vcmp.eq.s32.totalorder %v3131, 1
        %vm3164 = vcmp.eq.s32.totalorder %v3132, 1
        %vm3165 = vcmp.eq.s32.totalorder %v3133, 1
        %vm3166 = vcmp.eq.s32.totalorder %v3134, 1
        %vm3167 = vcmp.eq.s32.totalorder %v3135, 1
        %vm3168 = vcmp.eq.s32.totalorder %v3136, 1
        %vm3169 = vcmp.eq.s32.totalorder %v3137, 1
        %vm3170 = vcmp.eq.s32.totalorder %v3138, 1
        %vm3171 = vcmp.eq.s32.totalorder %v3139, 1
        %vm3172 = vcmp.eq.s32.totalorder %v3140, 1
        %vm3173 = vcmp.eq.s32.totalorder %v3141, 1
        %vm3174 = vcmp.eq.s32.totalorder %v3142, 1
        %vm3175 = vcmp.eq.s32.totalorder %v3143, 1
        %vm3176 = vcmp.eq.s32.totalorder %v3144, 1
        %vm3177 = vcmp.eq.s32.totalorder %v3145, 1
        %vm3178 = vcmp.eq.s32.totalorder %v3146, 1
        %vm3179 = vcmp.eq.s32.totalorder %v3147, 1
        %vm3180 = vcmp.eq.s32.totalorder %v3148, 1
        %vm3181 = vcmp.eq.s32.totalorder %v3149, 1
        %vm3182 = vcmp.eq.s32.totalorder %v3150, 1
        %vm3183 = vcmp.eq.s32.totalorder %v3151, 1
        %vm3184 = vcmp.eq.s32.totalorder %v3152, 1
        %vm3185 = vcmp.eq.s32.totalorder %v3153, 1
        %vm3186 = vcmp.eq.s32.totalorder %v3154, 1
        %vm3187 = vcmp.eq.s32.totalorder %v3155, 1
        %vm3188 = vcmp.eq.s32.totalorder %v3156, 1
        %vm3189 = vcmp.eq.s32.totalorder %v3157, 1
        %vm3190 = vcmp.eq.s32.totalorder %v3158, 1
        %v3191 = vsel %vm3159, %v1699, 0.0
        %v3192 = vsel %vm3160, %v1698, 0.0
        %v3193 = vsel %vm3161, %v1697, 0.0
        %v3194 = vsel %vm3162, %v1696, 0.0
        %v3195 = vsel %vm3163, %v1695, 0.0
        %v3196 = vsel %vm3164, %v1694, 0.0
        %v3197 = vsel %vm3165, %v1693, 0.0
        %v3198 = vsel %vm3166, %v1692, 0.0
        %v3199 = vsel %vm3167, %v1691, 0.0
        %v3200 = vsel %vm3168, %v1690, 0.0
        %v3201 = vsel %vm3169, %v1689, 0.0
        %v3202 = vsel %vm3170, %v1688, 0.0
        %v3203 = vsel %vm3171, %v1687, 0.0
        %v3204 = vsel %vm3172, %v1686, 0.0
        %v3205 = vsel %vm3173, %v1685, 0.0
        %v3206 = vsel %vm3174, %v1684, 0.0
        %v3207 = vsel %vm3175, %v1683, 0.0
        %v3208 = vsel %vm3176, %v1682, 0.0
        %v3209 = vsel %vm3177, %v1681, 0.0
        %v3210 = vsel %vm3178, %v1680, 0.0
        %v3211 = vsel %vm3179, %v1679, 0.0
        %v3212 = vsel %vm3180, %v1678, 0.0
        %v3213 = vsel %vm3181, %v1677, 0.0
        %v3214 = vsel %vm3182, %v1676, 0.0
        %v3215 = vsel %vm3183, %v1675, 0.0
        %v3216 = vsel %vm3184, %v1674, 0.0
        %v3217 = vsel %vm3185, %v1673, 0.0
        %v3218 = vsel %vm3186, %v1672, 0.0
        %v3219 = vsel %vm3187, %v1671, 0.0
        %v3220 = vsel %vm3188, %v1670, 0.0
        %v3221 = vsel %vm3189, %v1669, 0.0
        %v3222 = vsel %vm3190, %v1668, 0.0
        %v3223 = vpack.c.bf16 %v3192, %v3191
        %v3224 = vpack.c.bf16 %v3194, %v3193
        %v3225 = vpack.c.bf16 %v3196, %v3195
        %v3226 = vpack.c.bf16 %v3198, %v3197
        %v3227 = vpack.c.bf16 %v3200, %v3199
        %v3228 = vpack.c.bf16 %v3202, %v3201
        %v3229 = vpack.c.bf16 %v3204, %v3203
        %v3230 = vpack.c.bf16 %v3206, %v3205
        %v3231 = vpack.c.bf16 %v3208, %v3207
        %v3232 = vpack.c.bf16 %v3210, %v3209
        %v3233 = vpack.c.bf16 %v3212, %v3211
        %v3234 = vpack.c.bf16 %v3214, %v3213
        %v3235 = vpack.c.bf16 %v3216, %v3215
        %v3236 = vpack.c.bf16 %v3218, %v3217
        %v3237 = vpack.c.bf16 %v3220, %v3219
        %v3238 = vpack.c.bf16 %v3222, %v3221
        %s3239 = scalar_lea.vmem %s3, 48
        %v3240 = vld [vmem:[%s3239] sm:$0xf]
        %v3241 = vld [vmem:[%s3239 + $0x4] sm:$0xf]
        %v3242 = vld [vmem:[%s3239 + $0x8] sm:$0xf]
        %v3243 = vld [vmem:[%s3239 + $0xc] sm:$0xf]
        %v3248 = vunpack.c.l.b16 %v3240
        %v3249 = vunpack.c.l.b16 %v3241
        %v3250 = vunpack.c.l.b16 %v3242
        %v3251 = vunpack.c.l.b16 %v3243
        %v3252 = vpack.c.b16 %v3249, %v3248
        %v3253 = vpack.c.b16 %v3251, %v3250
        %v3257 = vsel %vm443, %v3223, 0
        %v3260 = vsel %vm443, %v3224, 0
        %v3263 = vsel %vm443, %v3225, 0
        %v3266 = vsel %vm443, %v3226, 0
        %v3269 = vsel %vm443, %v3227, 0
        %v3272 = vsel %vm443, %v3228, 0
        %v3275 = vsel %vm443, %v3229, 0
        %v3278 = vsel %vm443, %v3230, 0
        %v3281 = vsel %vm443, %v3231, 0
        %v3284 = vsel %vm443, %v3232, 0
        %v3287 = vsel %vm443, %v3233, 0
        %v3290 = vsel %vm443, %v3234, 0
        %v3293 = vsel %vm443, %v3235, 0
        %v3296 = vsel %vm443, %v3236, 0
        %v3299 = vsel %vm443, %v3237, 0
        %v3302 = vsel %vm443, %v3238, 0
        %3304 = vmatprep.subr.bf16.mxu0 0
        %3305 = vmatpush1.bf16.msra.mxu0 %v3252
        %3306 = vmatprep.subr.bf16.mxu0 0
        %3307 = vmatpush1.bf16.msra.mxu0 %v3253
        %3308 = vmatprep.subr.bf16.mxu0 0
        %3309 = vmatpush1.bf16.msra.mxu0 0
        %3310 = vmatprep.subr.bf16.mxu0 0
        %3311 = vmatpush1.bf16.msra.mxu0 0
        %3312 = vmatprep.subr.bf16.mxu0 0
        %3313 = vmatpush1.bf16.msra.mxu0 0
        %3314 = vmatprep.subr.bf16.mxu0 0
        %3315 = vmatpush1.bf16.msra.mxu0 0
        %3316 = vmatprep.subr.bf16.mxu0 0
        %3317 = vmatpush1.bf16.msra.mxu0 0
        %3318 = vmatprep.subr.bf16.mxu0 0
        %3319 = vmatpush1.bf16.msra.mxu0 0
        %3320 = vmatprep.subr.bf16.mxu0 0
        %3321 = vmatpush1.bf16.msra.mxu0 0
        %3322 = vmatprep.subr.bf16.mxu0 0
        %3323 = vmatpush1.bf16.msra.mxu0 0
        %3324 = vmatprep.subr.bf16.mxu0 0
        %3325 = vmatpush1.bf16.msra.mxu0 0
        %3326 = vmatprep.subr.bf16.mxu0 0
        %3327 = vmatpush1.bf16.msra.mxu0 0
        %3328 = vmatprep.subr.bf16.mxu0 0
        %3329 = vmatpush1.bf16.msra.mxu0 0
        %3330 = vmatprep.subr.bf16.mxu0 0
        %3331 = vmatpush1.bf16.msra.mxu0 0
        %3332 = vmatprep.subr.bf16.mxu0 0
        %3333 = vmatpush1.bf16.msra.mxu0 0
        %3334 = vmatprep.subr.bf16.mxu0 0
        %3335 = vmatpush1.bf16.msra.mxu0 0
        %3336 = vmatprep.mubr.bf16.mxu0 0
        %3337 = vmatmul.mubr.bf16.gmra.mrb[0].mxu0 %v3257
        %v3338 = vpop.f32.mrb[0].mxu0
        %v3339 = vadd.f32 0.0, %v3338
        %v3340 = vpop.f32.mrb[0].mxu0
        %v3341 = vpop.f32.mrb[0].mxu0
        %v3342 = vadd.f32 0.0, %v3341
        %v3343 = vpop.f32.mrb[0].mxu0
        %3344 = vmatprep.mubr.bf16.mxu0 0
        %3345 = vmatmul.mubr.bf16.gmra.mrb[0].mxu0 %v3260
        %v3346 = vpop.f32.mrb[0].mxu0
        %v3347 = vadd.f32 0.0, %v3346
        %v3348 = vpop.f32.mrb[0].mxu0
        %v3349 = vpop.f32.mrb[0].mxu0
        %v3350 = vadd.f32 0.0, %v3349
        %v3351 = vpop.f32.mrb[0].mxu0
        %3352 = vmatprep.mubr.bf16.mxu0 0
        %3353 = vmatmul.mubr.bf16.gmra.mrb[0].mxu0 %v3263
        %v3354 = vpop.f32.mrb[0].mxu0
        %v3355 = vadd.f32 0.0, %v3354
        %v3356 = vpop.f32.mrb[0].mxu0
        %v3357 = vpop.f32.mrb[0].mxu0
        %v3358 = vadd.f32 0.0, %v3357
        %v3359 = vpop.f32.mrb[0].mxu0
        %3360 = vmatprep.mubr.bf16.mxu0 0
        %3361 = vmatmul.mubr.bf16.gmra.mrb[0].mxu0 %v3266
        %v3362 = vpop.f32.mrb[0].mxu0
        %v3363 = vadd.f32 0.0, %v3362
        %v3364 = vpop.f32.mrb[0].mxu0
        %v3365 = vpop.f32.mrb[0].mxu0
        %v3366 = vadd.f32 0.0, %v3365
        %v3367 = vpop.f32.mrb[0].mxu0
        %3368 = vmatprep.mubr.bf16.mxu0 0
        %3369 = vmatmul.mubr.bf16.gmra.mrb[0].mxu0 %v3269
        %v3370 = vpop.f32.mrb[0].mxu0
        %v3371 = vadd.f32 0.0, %v3370
        %v3372 = vpop.f32.mrb[0].mxu0
        %v3373 = vpop.f32.mrb[0].mxu0
        %v3374 = vadd.f32 0.0, %v3373
        %v3375 = vpop.f32.mrb[0].mxu0
        %3376 = vmatprep.mubr.bf16.mxu0 0
        %3377 = vmatmul.mubr.bf16.gmra.mrb[0].mxu0 %v3272
        %v3378 = vpop.f32.mrb[0].mxu0
        %v3379 = vadd.f32 0.0, %v3378
        %v3380 = vpop.f32.mrb[0].mxu0
        %v3381 = vpop.f32.mrb[0].mxu0
        %v3382 = vadd.f32 0.0, %v3381
        %v3383 = vpop.f32.mrb[0].mxu0
        %3384 = vmatprep.mubr.bf16.mxu0 0
        %3385 = vmatmul.mubr.bf16.gmra.mrb[0].mxu0 %v3275
        %v3386 = vpop.f32.mrb[0].mxu0
        %v3387 = vadd.f32 0.0, %v3386
        %v3388 = vpop.f32.mrb[0].mxu0
        %v3389 = vpop.f32.mrb[0].mxu0
        %v3390 = vadd.f32 0.0, %v3389
        %v3391 = vpop.f32.mrb[0].mxu0
        %3392 = vmatprep.mubr.bf16.mxu0 0
        %3393 = vmatmul.mubr.bf16.gmra.mrb[0].mxu0 %v3278
        %v3394 = vpop.f32.mrb[0].mxu0
        %v3395 = vadd.f32 0.0, %v3394
        %v3396 = vpop.f32.mrb[0].mxu0
        %v3397 = vpop.f32.mrb[0].mxu0
        %v3398 = vadd.f32 0.0, %v3397
        %v3399 = vpop.f32.mrb[0].mxu0
        %3400 = vmatprep.mubr.bf16.mxu0 0
        %3401 = vmatmul.mubr.bf16.gmra.mrb[0].mxu0 %v3281
        %v3402 = vpop.f32.mrb[0].mxu0
        %v3403 = vadd.f32 0.0, %v3402
        %v3404 = vpop.f32.mrb[0].mxu0
        %v3405 = vpop.f32.mrb[0].mxu0
        %v3406 = vadd.f32 0.0, %v3405
        %v3407 = vpop.f32.mrb[0].mxu0
        %3408 = vmatprep.mubr.bf16.mxu0 0
        %3409 = vmatmul.mubr.bf16.gmra.mrb[0].mxu0 %v3284
        %v3410 = vpop.f32.mrb[0].mxu0
        %v3411 = vadd.f32 0.0, %v3410
        %v3412 = vpop.f32.mrb[0].mxu0
        %v3413 = vpop.f32.mrb[0].mxu0
        %v3414 = vadd.f32 0.0, %v3413
        %v3415 = vpop.f32.mrb[0].mxu0
        %3416 = vmatprep.mubr.bf16.mxu0 0
        %3417 = vmatmul.mubr.bf16.gmra.mrb[0].mxu0 %v3287
        %v3418 = vpop.f32.mrb[0].mxu0
        %v3419 = vadd.f32 0.0, %v3418
        %v3420 = vpop.f32.mrb[0].mxu0
        %v3421 = vpop.f32.mrb[0].mxu0
        %v3422 = vadd.f32 0.0, %v3421
        %v3423 = vpop.f32.mrb[0].mxu0
        %3424 = vmatprep.mubr.bf16.mxu0 0
        %3425 = vmatmul.mubr.bf16.gmra.mrb[0].mxu0 %v3290
        %v3426 = vpop.f32.mrb[0].mxu0
        %v3427 = vadd.f32 0.0, %v3426
        %v3428 = vpop.f32.mrb[0].mxu0
        %v3429 = vpop.f32.mrb[0].mxu0
        %v3430 = vadd.f32 0.0, %v3429
        %v3431 = vpop.f32.mrb[0].mxu0
        %3432 = vmatprep.mubr.bf16.mxu0 0
        %3433 = vmatmul.mubr.bf16.gmra.mrb[0].mxu0 %v3293
        %v3434 = vpop.f32.mrb[0].mxu0
        %v3435 = vadd.f32 0.0, %v3434
        %v3436 = vpop.f32.mrb[0].mxu0
        %v3437 = vpop.f32.mrb[0].mxu0
        %v3438 = vadd.f32 0.0, %v3437
        %v3439 = vpop.f32.mrb[0].mxu0
        %3440 = vmatprep.mubr.bf16.mxu0 0
        %3441 = vmatmul.mubr.bf16.gmra.mrb[0].mxu0 %v3296
        %v3442 = vpop.f32.mrb[0].mxu0
        %v3443 = vadd.f32 0.0, %v3442
        %v3444 = vpop.f32.mrb[0].mxu0
        %v3445 = vpop.f32.mrb[0].mxu0
        %v3446 = vadd.f32 0.0, %v3445
        %v3447 = vpop.f32.mrb[0].mxu0
        %3448 = vmatprep.mubr.bf16.mxu0 0
        %3449 = vmatmul.mubr.bf16.gmra.mrb[0].mxu0 %v3299
        %v3450 = vpop.f32.mrb[0].mxu0
        %v3451 = vadd.f32 0.0, %v3450
        %v3452 = vpop.f32.mrb[0].mxu0
        %v3453 = vpop.f32.mrb[0].mxu0
        %v3454 = vadd.f32 0.0, %v3453
        %v3455 = vpop.f32.mrb[0].mxu0
        %3456 = vmatprep.mubr.bf16.mxu0 0
        %3457 = vmatmul.mubr.bf16.gmra.mrb[0].mxu0 %v3302
        %v3458 = vpop.f32.mrb[0].mxu0
        %v3459 = vadd.f32 0.0, %v3458
        %v3460 = vpop.f32.mrb[0].mxu0
        %v3461 = vpop.f32.mrb[0].mxu0
        %v3462 = vadd.f32 0.0, %v3461
        %v3463 = vpop.f32.mrb[0].mxu0
        %3464 = vdwg.mxu0
        %v3465 = vadd.f32 %v3095, %v3339
        %v3466 = vadd.f32 %v3096, %v3342
        %v3467 = vadd.f32 %v3097, %v3347
        %v3468 = vadd.f32 %v3098, %v3350
        %v3469 = vadd.f32 %v3099, %v3355
        %v3470 = vadd.f32 %v3100, %v3358
        %v3471 = vadd.f32 %v3101, %v3363
        %v3472 = vadd.f32 %v3102, %v3366
        %v3473 = vadd.f32 %v3103, %v3371
        %v3474 = vadd.f32 %v3104, %v3374
        %v3475 = vadd.f32 %v3105, %v3379
        %v3476 = vadd.f32 %v3106, %v3382
        %v3477 = vadd.f32 %v3107, %v3387
        %v3478 = vadd.f32 %v3108, %v3390
        %v3479 = vadd.f32 %v3109, %v3395
        %v3480 = vadd.f32 %v3110, %v3398
        %v3481 = vadd.f32 %v3111, %v3403
        %v3482 = vadd.f32 %v3112, %v3406
        %v3483 = vadd.f32 %v3113, %v3411
        %v3484 = vadd.f32 %v3114, %v3414
        %v3485 = vadd.f32 %v3115, %v3419
        %v3486 = vadd.f32 %v3116, %v3422
        %v3487 = vadd.f32 %v3117, %v3427
        %v3488 = vadd.f32 %v3118, %v3430
        %v3489 = vadd.f32 %v3119, %v3435
        %v3490 = vadd.f32 %v3120, %v3438
        %v3491 = vadd.f32 %v3121, %v3443
        %v3492 = vadd.f32 %v3122, %v3446
        %v3493 = vadd.f32 %v3123, %v3451
        %v3494 = vadd.f32 %v3124, %v3454
        %v3495 = vadd.f32 %v3125, %v3459
        %v3496 = vadd.f32 %v3126, %v3462
        %v3497 = vsel %vm1582, 1, 0
        %v3498 = vsel %vm1583, 1, 0
        %v3499 = vsel %vm1584, 1, 0
        %v3500 = vsel %vm1585, 1, 0
        %v3501 = vsel %vm1586, 1, 0
        %v3502 = vsel %vm1587, 1, 0
        %v3503 = vsel %vm1588, 1, 0
        %v3504 = vsel %vm1589, 1, 0
        %v3505 = vsel %vm1590, 1, 0
        %v3506 = vsel %vm1591, 1, 0
        %v3507 = vsel %vm1592, 1, 0
        %v3508 = vsel %vm1593, 1, 0
        %v3509 = vsel %vm1594, 1, 0
        %v3510 = vsel %vm1595, 1, 0
        %v3511 = vsel %vm1596, 1, 0
        %v3512 = vsel %vm1597, 1, 0
        %v3513 = vsel %vm1598, 1, 0
        %v3514 = vsel %vm1599, 1, 0
        %v3515 = vsel %vm1600, 1, 0
        %v3516 = vsel %vm1601, 1, 0
        %v3517 = vsel %vm1602, 1, 0
        %v3518 = vsel %vm1603, 1, 0
        %v3519 = vsel %vm1604, 1, 0
        %v3520 = vsel %vm1605, 1, 0
        %v3521 = vsel %vm1606, 1, 0
        %v3522 = vsel %vm1607, 1, 0
        %v3523 = vsel %vm1608, 1, 0
        %v3524 = vsel %vm1609, 1, 0
        %v3525 = vsel %vm1610, 1, 0
        %v3526 = vsel %vm1611, 1, 0
        %v3527 = vsel %vm1612, 1, 0
        %v3528 = vsel %vm1613, 1, 0
        %vm3529 = vcmp.eq.s32.totalorder %v3497, 1
        %vm3530 = vcmp.eq.s32.totalorder %v3498, 1
        %vm3531 = vcmp.eq.s32.totalorder %v3499, 1
        %vm3532 = vcmp.eq.s32.totalorder %v3500, 1
        %vm3533 = vcmp.eq.s32.totalorder %v3501, 1
        %vm3534 = vcmp.eq.s32.totalorder %v3502, 1
        %vm3535 = vcmp.eq.s32.totalorder %v3503, 1
        %vm3536 = vcmp.eq.s32.totalorder %v3504, 1
        %vm3537 = vcmp.eq.s32.totalorder %v3505, 1
        %vm3538 = vcmp.eq.s32.totalorder %v3506, 1
        %vm3539 = vcmp.eq.s32.totalorder %v3507, 1
        %vm3540 = vcmp.eq.s32.totalorder %v3508, 1
        %vm3541 = vcmp.eq.s32.totalorder %v3509, 1
        %vm3542 = vcmp.eq.s32.totalorder %v3510, 1
        %vm3543 = vcmp.eq.s32.totalorder %v3511, 1
        %vm3544 = vcmp.eq.s32.totalorder %v3512, 1
        %vm3545 = vcmp.eq.s32.totalorder %v3513, 1
        %vm3546 = vcmp.eq.s32.totalorder %v3514, 1
        %vm3547 = vcmp.eq.s32.totalorder %v3515, 1
        %vm3548 = vcmp.eq.s32.totalorder %v3516, 1
        %vm3549 = vcmp.eq.s32.totalorder %v3517, 1
        %vm3550 = vcmp.eq.s32.totalorder %v3518, 1
        %vm3551 = vcmp.eq.s32.totalorder %v3519, 1
        %vm3552 = vcmp.eq.s32.totalorder %v3520, 1
        %vm3553 = vcmp.eq.s32.totalorder %v3521, 1
        %vm3554 = vcmp.eq.s32.totalorder %v3522, 1
        %vm3555 = vcmp.eq.s32.totalorder %v3523, 1
        %vm3556 = vcmp.eq.s32.totalorder %v3524, 1
        %vm3557 = vcmp.eq.s32.totalorder %v3525, 1
        %vm3558 = vcmp.eq.s32.totalorder %v3526, 1
        %vm3559 = vcmp.eq.s32.totalorder %v3527, 1
        %vm3560 = vcmp.eq.s32.totalorder %v3528, 1
        %v3561 = vsel %vm3529, %v2723, 0.0
        %v3562 = vsel %vm3530, %v2722, 0.0
        %v3563 = vsel %vm3531, %v2721, 0.0
        %v3564 = vsel %vm3532, %v2720, 0.0
        %v3565 = vsel %vm3533, %v2719, 0.0
        %v3566 = vsel %vm3534, %v2718, 0.0
        %v3567 = vsel %vm3535, %v2717, 0.0
        %v3568 = vsel %vm3536, %v2716, 0.0
        %v3569 = vsel %vm3537, %v2715, 0.0
        %v3570 = vsel %vm3538, %v2714, 0.0
        %v3571 = vsel %vm3539, %v2713, 0.0
        %v3572 = vsel %vm3540, %v2712, 0.0
        %v3573 = vsel %vm3541, %v2711, 0.0
        %v3574 = vsel %vm3542, %v2710, 0.0
        %v3575 = vsel %vm3543, %v2709, 0.0
        %v3576 = vsel %vm3544, %v2708, 0.0
        %v3577 = vsel %vm3545, %v2707, 0.0
        %v3578 = vsel %vm3546, %v2706, 0.0
        %v3579 = vsel %vm3547, %v2705, 0.0
        %v3580 = vsel %vm3548, %v2704, 0.0
        %v3581 = vsel %vm3549, %v2703, 0.0
        %v3582 = vsel %vm3550, %v2702, 0.0
        %v3583 = vsel %vm3551, %v2701, 0.0
        %v3584 = vsel %vm3552, %v2700, 0.0
        %v3585 = vsel %vm3553, %v2699, 0.0
        %v3586 = vsel %vm3554, %v2698, 0.0
        %v3587 = vsel %vm3555, %v2697, 0.0
        %v3588 = vsel %vm3556, %v2696, 0.0
        %v3589 = vsel %vm3557, %v2695, 0.0
        %v3590 = vsel %vm3558, %v2694, 0.0
        %v3591 = vsel %vm3559, %v2693, 0.0
        %v3592 = vsel %vm3560, %v2724, 0.0
        %v3593 = vpack.c.bf16 %v3562, %v3561
        %v3594 = vpack.c.bf16 %v3564, %v3563
        %v3595 = vpack.c.bf16 %v3566, %v3565
        %v3596 = vpack.c.bf16 %v3568, %v3567
        %v3597 = vpack.c.bf16 %v3570, %v3569
        %v3598 = vpack.c.bf16 %v3572, %v3571
        %v3599 = vpack.c.bf16 %v3574, %v3573
        %v3600 = vpack.c.bf16 %v3576, %v3575
        %v3601 = vpack.c.bf16 %v3578, %v3577
        %v3602 = vpack.c.bf16 %v3580, %v3579
        %v3603 = vpack.c.bf16 %v3582, %v3581
        %v3604 = vpack.c.bf16 %v3584, %v3583
        %v3605 = vpack.c.bf16 %v3586, %v3585
        %v3606 = vpack.c.bf16 %v3588, %v3587
        %v3607 = vpack.c.bf16 %v3590, %v3589
        %v3608 = vpack.c.bf16 %v3592, %v3591
        %s3609 = scalar_lea.vmem %s3, 80
        %v3610 = vld [vmem:[%s3609] sm:$0xf]
        %v3611 = vld [vmem:[%s3609 + $0x4] sm:$0xf]
        %v3612 = vld [vmem:[%s3609 + $0x8] sm:$0xf]
        %v3613 = vld [vmem:[%s3609 + $0xc] sm:$0xf]
        %v3618 = vunpack.c.l.b16 %v3610
        %v3619 = vunpack.c.l.b16 %v3611
        %v3620 = vunpack.c.l.b16 %v3612
        %v3621 = vunpack.c.l.b16 %v3613
        %v3622 = vpack.c.b16 %v3619, %v3618
        %v3623 = vpack.c.b16 %v3621, %v3620
        %v3627 = vsel %vm443, %v3593, 0
        %v3630 = vsel %vm443, %v3594, 0
        %v3633 = vsel %vm443, %v3595, 0
        %v3636 = vsel %vm443, %v3596, 0
        %v3639 = vsel %vm443, %v3597, 0
        %v3642 = vsel %vm443, %v3598, 0
        %v3645 = vsel %vm443, %v3599, 0
        %v3648 = vsel %vm443, %v3600, 0
        %v3651 = vsel %vm443, %v3601, 0
        %v3654 = vsel %vm443, %v3602, 0
        %v3657 = vsel %vm443, %v3603, 0
        %v3660 = vsel %vm443, %v3604, 0
        %v3663 = vsel %vm443, %v3605, 0
        %v3666 = vsel %vm443, %v3606, 0
        %v3669 = vsel %vm443, %v3607, 0
        %v3672 = vsel %vm443, %v3608, 0
        %3674 = vmatprep.subr.bf16.mxu0 0
        %3675 = vmatpush1.bf16.msra.mxu0 %v3622
        %3676 = vmatprep.subr.bf16.mxu0 0
        %3677 = vmatpush1.bf16.msra.mxu0 %v3623
        %3678 = vmatprep.subr.bf16.mxu0 0
        %3679 = vmatpush1.bf16.msra.mxu0 0
        %3680 = vmatprep.subr.bf16.mxu0 0
        %3681 = vmatpush1.bf16.msra.mxu0 0
        %3682 = vmatprep.subr.bf16.mxu0 0
        %3683 = vmatpush1.bf16.msra.mxu0 0
        %3684 = vmatprep.subr.bf16.mxu0 0
        %3685 = vmatpush1.bf16.msra.mxu0 0
        %3686 = vmatprep.subr.bf16.mxu0 0
        %3687 = vmatpush1.bf16.msra.mxu0 0
        %3688 = vmatprep.subr.bf16.mxu0 0
        %3689 = vmatpush1.bf16.msra.mxu0 0
        %3690 = vmatprep.subr.bf16.mxu0 0
        %3691 = vmatpush1.bf16.msra.mxu0 0
        %3692 = vmatprep.subr.bf16.mxu0 0
        %3693 = vmatpush1.bf16.msra.mxu0 0
        %3694 = vmatprep.subr.bf16.mxu0 0
        %3695 = vmatpush1.bf16.msra.mxu0 0
        %3696 = vmatprep.subr.bf16.mxu0 0
        %3697 = vmatpush1.bf16.msra.mxu0 0
        %3698 = vmatprep.subr.bf16.mxu0 0
        %3699 = vmatpush1.bf16.msra.mxu0 0
        %3700 = vmatprep.subr.bf16.mxu0 0
        %3701 = vmatpush1.bf16.msra.mxu0 0
        %3702 = vmatprep.subr.bf16.mxu0 0
        %3703 = vmatpush1.bf16.msra.mxu0 0
        %3704 = vmatprep.subr.bf16.mxu0 0
        %3705 = vmatpush1.bf16.msra.mxu0 0
        %3706 = vmatprep.mubr.bf16.mxu0 0
        %3707 = vmatmul.mubr.bf16.gmra.mrb[0].mxu0 %v3627
        %v3708 = vpop.f32.mrb[0].mxu0
        %v3709 = vadd.f32 0.0, %v3708
        %v3710 = vpop.f32.mrb[0].mxu0
        %v3711 = vpop.f32.mrb[0].mxu0
        %v3712 = vadd.f32 0.0, %v3711
        %v3713 = vpop.f32.mrb[0].mxu0
        %3714 = vmatprep.mubr.bf16.mxu0 0
        %3715 = vmatmul.mubr.bf16.gmra.mrb[0].mxu0 %v3630
        %v3716 = vpop.f32.mrb[0].mxu0
        %v3717 = vadd.f32 0.0, %v3716
        %v3718 = vpop.f32.mrb[0].mxu0
        %v3719 = vpop.f32.mrb[0].mxu0
        %v3720 = vadd.f32 0.0, %v3719
        %v3721 = vpop.f32.mrb[0].mxu0
        %3722 = vmatprep.mubr.bf16.mxu0 0
        %3723 = vmatmul.mubr.bf16.gmra.mrb[0].mxu0 %v3633
        %v3724 = vpop.f32.mrb[0].mxu0
        %v3725 = vadd.f32 0.0, %v3724
        %v3726 = vpop.f32.mrb[0].mxu0
        %v3727 = vpop.f32.mrb[0].mxu0
        %v3728 = vadd.f32 0.0, %v3727
        %v3729 = vpop.f32.mrb[0].mxu0
        %3730 = vmatprep.mubr.bf16.mxu0 0
        %3731 = vmatmul.mubr.bf16.gmra.mrb[0].mxu0 %v3636
        %v3732 = vpop.f32.mrb[0].mxu0
        %v3733 = vadd.f32 0.0, %v3732
        %v3734 = vpop.f32.mrb[0].mxu0
        %v3735 = vpop.f32.mrb[0].mxu0
        %v3736 = vadd.f32 0.0, %v3735
        %v3737 = vpop.f32.mrb[0].mxu0
        %3738 = vmatprep.mubr.bf16.mxu0 0
        %3739 = vmatmul.mubr.bf16.gmra.mrb[0].mxu0 %v3639
        %v3740 = vpop.f32.mrb[0].mxu0
        %v3741 = vadd.f32 0.0, %v3740
        %v3742 = vpop.f32.mrb[0].mxu0
        %v3743 = vpop.f32.mrb[0].mxu0
        %v3744 = vadd.f32 0.0, %v3743
        %v3745 = vpop.f32.mrb[0].mxu0
        %3746 = vmatprep.mubr.bf16.mxu0 0
        %3747 = vmatmul.mubr.bf16.gmra.mrb[0].mxu0 %v3642
        %v3748 = vpop.f32.mrb[0].mxu0
        %v3749 = vadd.f32 0.0, %v3748
        %v3750 = vpop.f32.mrb[0].mxu0
        %v3751 = vpop.f32.mrb[0].mxu0
        %v3752 = vadd.f32 0.0, %v3751
        %v3753 = vpop.f32.mrb[0].mxu0
        %3754 = vmatprep.mubr.bf16.mxu0 0
        %3755 = vmatmul.mubr.bf16.gmra.mrb[0].mxu0 %v3645
        %v3756 = vpop.f32.mrb[0].mxu0
        %v3757 = vadd.f32 0.0, %v3756
        %v3758 = vpop.f32.mrb[0].mxu0
        %v3759 = vpop.f32.mrb[0].mxu0
        %v3760 = vadd.f32 0.0, %v3759
        %v3761 = vpop.f32.mrb[0].mxu0
        %3762 = vmatprep.mubr.bf16.mxu0 0
        %3763 = vmatmul.mubr.bf16.gmra.mrb[0].mxu0 %v3648
        %v3764 = vpop.f32.mrb[0].mxu0
        %v3765 = vadd.f32 0.0, %v3764
        %v3766 = vpop.f32.mrb[0].mxu0
        %v3767 = vpop.f32.mrb[0].mxu0
        %v3768 = vadd.f32 0.0, %v3767
        %v3769 = vpop.f32.mrb[0].mxu0
        %3770 = vmatprep.mubr.bf16.mxu0 0
        %3771 = vmatmul.mubr.bf16.gmra.mrb[0].mxu0 %v3651
        %v3772 = vpop.f32.mrb[0].mxu0
        %v3773 = vadd.f32 0.0, %v3772
        %v3774 = vpop.f32.mrb[0].mxu0
        %v3775 = vpop.f32.mrb[0].mxu0
        %v3776 = vadd.f32 0.0, %v3775
        %v3777 = vpop.f32.mrb[0].mxu0
        %3778 = vmatprep.mubr.bf16.mxu0 0
        %3779 = vmatmul.mubr.bf16.gmra.mrb[0].mxu0 %v3654
        %v3780 = vpop.f32.mrb[0].mxu0
        %v3781 = vadd.f32 0.0, %v3780
        %v3782 = vpop.f32.mrb[0].mxu0
        %v3783 = vpop.f32.mrb[0].mxu0
        %v3784 = vadd.f32 0.0, %v3783
        %v3785 = vpop.f32.mrb[0].mxu0
        %3786 = vmatprep.mubr.bf16.mxu0 0
        %3787 = vmatmul.mubr.bf16.gmra.mrb[0].mxu0 %v3657
        %v3788 = vpop.f32.mrb[0].mxu0
        %v3789 = vadd.f32 0.0, %v3788
        %v3790 = vpop.f32.mrb[0].mxu0
        %v3791 = vpop.f32.mrb[0].mxu0
        %v3792 = vadd.f32 0.0, %v3791
        %v3793 = vpop.f32.mrb[0].mxu0
        %3794 = vmatprep.mubr.bf16.mxu0 0
        %3795 = vmatmul.mubr.bf16.gmra.mrb[0].mxu0 %v3660
        %v3796 = vpop.f32.mrb[0].mxu0
        %v3797 = vadd.f32 0.0, %v3796
        %v3798 = vpop.f32.mrb[0].mxu0
        %v3799 = vpop.f32.mrb[0].mxu0
        %v3800 = vadd.f32 0.0, %v3799
        %v3801 = vpop.f32.mrb[0].mxu0
        %3802 = vmatprep.mubr.bf16.mxu0 0
        %3803 = vmatmul.mubr.bf16.gmra.mrb[0].mxu0 %v3663
        %v3804 = vpop.f32.mrb[0].mxu0
        %v3805 = vadd.f32 0.0, %v3804
        %v3806 = vpop.f32.mrb[0].mxu0
        %v3807 = vpop.f32.mrb[0].mxu0
        %v3808 = vadd.f32 0.0, %v3807
        %v3809 = vpop.f32.mrb[0].mxu0
        %3810 = vmatprep.mubr.bf16.mxu0 0
        %3811 = vmatmul.mubr.bf16.gmra.mrb[0].mxu0 %v3666
        %v3812 = vpop.f32.mrb[0].mxu0
        %v3813 = vadd.f32 0.0, %v3812
        %v3814 = vpop.f32.mrb[0].mxu0
        %v3815 = vpop.f32.mrb[0].mxu0
        %v3816 = vadd.f32 0.0, %v3815
        %v3817 = vpop.f32.mrb[0].mxu0
        %3818 = vmatprep.mubr.bf16.mxu0 0
        %3819 = vmatmul.mubr.bf16.gmra.mrb[0].mxu0 %v3669
        %v3820 = vpop.f32.mrb[0].mxu0
        %v3821 = vadd.f32 0.0, %v3820
        %v3822 = vpop.f32.mrb[0].mxu0
        %v3823 = vpop.f32.mrb[0].mxu0
        %v3824 = vadd.f32 0.0, %v3823
        %v3825 = vpop.f32.mrb[0].mxu0
        %3826 = vmatprep.mubr.bf16.mxu0 0
        %3827 = vmatmul.mubr.bf16.gmra.mrb[0].mxu0 %v3672
        %v3828 = vpop.f32.mrb[0].mxu0
        %v3829 = vadd.f32 0.0, %v3828
        %v3830 = vpop.f32.mrb[0].mxu0
        %v3831 = vpop.f32.mrb[0].mxu0
        %v3832 = vadd.f32 0.0, %v3831
        %v3833 = vpop.f32.mrb[0].mxu0
        %3834 = vdwg.mxu0
        %v3835 = vadd.f32 %v3465, %v3709
        %v3836 = vadd.f32 %v3466, %v3712
        %v3837 = vadd.f32 %v3467, %v3717
        %v3838 = vadd.f32 %v3468, %v3720
        %v3839 = vadd.f32 %v3469, %v3725
        %v3840 = vadd.f32 %v3470, %v3728
        %v3841 = vadd.f32 %v3471, %v3733
        %v3842 = vadd.f32 %v3472, %v3736
        %v3843 = vadd.f32 %v3473, %v3741
        %v3844 = vadd.f32 %v3474, %v3744
        %v3845 = vadd.f32 %v3475, %v3749
        %v3846 = vadd.f32 %v3476, %v3752
        %v3847 = vadd.f32 %v3477, %v3757
        %v3848 = vadd.f32 %v3478, %v3760
        %v3849 = vadd.f32 %v3479, %v3765
        %v3850 = vadd.f32 %v3480, %v3768
        %v3851 = vadd.f32 %v3481, %v3773
        %v3852 = vadd.f32 %v3482, %v3776
        %v3853 = vadd.f32 %v3483, %v3781
        %v3854 = vadd.f32 %v3484, %v3784
        %v3855 = vadd.f32 %v3485, %v3789
        %v3856 = vadd.f32 %v3486, %v3792
        %v3857 = vadd.f32 %v3487, %v3797
        %v3858 = vadd.f32 %v3488, %v3800
        %v3859 = vadd.f32 %v3489, %v3805
        %v3860 = vadd.f32 %v3490, %v3808
        %v3861 = vadd.f32 %v3491, %v3813
        %v3862 = vadd.f32 %v3492, %v3816
        %v3863 = vadd.f32 %v3493, %v3821
        %v3864 = vadd.f32 %v3494, %v3824
        %v3865 = vadd.f32 %v3495, %v3829
        %v3866 = vadd.f32 %v3496, %v3832
        %vm3867 = vmand %vm1518, %vm1550
        %vm3868 = vmand %vm1519, %vm1551
        %vm3869 = vmand %vm1520, %vm1552
        %vm3870 = vmand %vm1521, %vm1553
        %vm3871 = vmand %vm1522, %vm1554
        %vm3872 = vmand %vm1523, %vm1555
        %vm3873 = vmand %vm1524, %vm1556
        %vm3874 = vmand %vm1525, %vm1557
        %vm3875 = vmand %vm1526, %vm1558
        %vm3876 = vmand %vm1527, %vm1559
        %vm3877 = vmand %vm1528, %vm1560
        %vm3878 = vmand %vm1529, %vm1561
        %vm3879 = vmand %vm1530, %vm1562
        %vm3880 = vmand %vm1531, %vm1563
        %vm3881 = vmand %vm1532, %vm1564
        %vm3882 = vmand %vm1533, %vm1565
        %vm3883 = vmand %vm1534, %vm1566
        %vm3884 = vmand %vm1535, %vm1567
        %vm3885 = vmand %vm1536, %vm1568
        %vm3886 = vmand %vm1537, %vm1569
        %vm3887 = vmand %vm1538, %vm1570
        %vm3888 = vmand %vm1539, %vm1571
        %vm3889 = vmand %vm1540, %vm1572
        %vm3890 = vmand %vm1541, %vm1573
        %vm3891 = vmand %vm1542, %vm1574
        %vm3892 = vmand %vm1543, %vm1575
        %vm3893 = vmand %vm1544, %vm1576
        %vm3894 = vmand %vm1545, %vm1577
        %vm3895 = vmand %vm1546, %vm1578
        %vm3896 = vmand %vm1547, %vm1579
        %vm3897 = vmand %vm1548, %vm1580
        %vm3898 = vmand %vm1549, %vm1581
        %v3899 = vsel %vm3867, 1, 0
        %v3900 = vsel %vm3868, 1, 0
        %v3901 = vsel %vm3869, 1, 0
        %v3902 = vsel %vm3870, 1, 0
        %v3903 = vsel %vm3871, 1, 0
        %v3904 = vsel %vm3872, 1, 0
        %v3905 = vsel %vm3873, 1, 0
        %v3906 = vsel %vm3874, 1, 0
        %v3907 = vsel %vm3875, 1, 0
        %v3908 = vsel %vm3876, 1, 0
        %v3909 = vsel %vm3877, 1, 0
        %v3910 = vsel %vm3878, 1, 0
        %v3911 = vsel %vm3879, 1, 0
        %v3912 = vsel %vm3880, 1, 0
        %v3913 = vsel %vm3881, 1, 0
        %v3914 = vsel %vm3882, 1, 0
        %v3915 = vsel %vm3883, 1, 0
        %v3916 = vsel %vm3884, 1, 0
        %v3917 = vsel %vm3885, 1, 0
        %v3918 = vsel %vm3886, 1, 0
        %v3919 = vsel %vm3887, 1, 0
        %v3920 = vsel %vm3888, 1, 0
        %v3921 = vsel %vm3889, 1, 0
        %v3922 = vsel %vm3890, 1, 0
        %v3923 = vsel %vm3891, 1, 0
        %v3924 = vsel %vm3892, 1, 0
        %v3925 = vsel %vm3893, 1, 0
        %v3926 = vsel %vm3894, 1, 0
        %v3927 = vsel %vm3895, 1, 0
        %v3928 = vsel %vm3896, 1, 0
        %v3929 = vsel %vm3897, 1, 0
        %v3930 = vsel %vm3898, 1, 0
        %vm3931 = vcmp.eq.s32.totalorder %v3899, 1
        %vm3932 = vcmp.eq.s32.totalorder %v3900, 1
        %vm3933 = vcmp.eq.s32.totalorder %v3901, 1
        %vm3934 = vcmp.eq.s32.totalorder %v3902, 1
        %vm3935 = vcmp.eq.s32.totalorder %v3903, 1
        %vm3936 = vcmp.eq.s32.totalorder %v3904, 1
        %vm3937 = vcmp.eq.s32.totalorder %v3905, 1
        %vm3938 = vcmp.eq.s32.totalorder %v3906, 1
        %vm3939 = vcmp.eq.s32.totalorder %v3907, 1
        %vm3940 = vcmp.eq.s32.totalorder %v3908, 1
        %vm3941 = vcmp.eq.s32.totalorder %v3909, 1
        %vm3942 = vcmp.eq.s32.totalorder %v3910, 1
        %vm3943 = vcmp.eq.s32.totalorder %v3911, 1
        %vm3944 = vcmp.eq.s32.totalorder %v3912, 1
        %vm3945 = vcmp.eq.s32.totalorder %v3913, 1
        %vm3946 = vcmp.eq.s32.totalorder %v3914, 1
        %vm3947 = vcmp.eq.s32.totalorder %v3915, 1
        %vm3948 = vcmp.eq.s32.totalorder %v3916, 1
        %vm3949 = vcmp.eq.s32.totalorder %v3917, 1
        %vm3950 = vcmp.eq.s32.totalorder %v3918, 1
        %vm3951 = vcmp.eq.s32.totalorder %v3919, 1
        %vm3952 = vcmp.eq.s32.totalorder %v3920, 1
        %vm3953 = vcmp.eq.s32.totalorder %v3921, 1
        %vm3954 = vcmp.eq.s32.totalorder %v3922, 1
        %vm3955 = vcmp.eq.s32.totalorder %v3923, 1
        %vm3956 = vcmp.eq.s32.totalorder %v3924, 1
        %vm3957 = vcmp.eq.s32.totalorder %v3925, 1
        %vm3958 = vcmp.eq.s32.totalorder %v3926, 1
        %vm3959 = vcmp.eq.s32.totalorder %v3927, 1
        %vm3960 = vcmp.eq.s32.totalorder %v3928, 1
        %vm3961 = vcmp.eq.s32.totalorder %v3929, 1
        %vm3962 = vcmp.eq.s32.totalorder %v3930, 1
        %v3963 = vsel %vm3931, %v1697, 0.0
        %v3964 = vsel %vm3932, %v1696, 0.0
        %v3965 = vsel %vm3933, %v1695, 0.0
        %v3966 = vsel %vm3934, %v1694, 0.0
        %v3967 = vsel %vm3935, %v1693, 0.0
        %v3968 = vsel %vm3936, %v1692, 0.0
        %v3969 = vsel %vm3937, %v1691, 0.0
        %v3970 = vsel %vm3938, %v1690, 0.0
        %v3971 = vsel %vm3939, %v1689, 0.0
        %v3972 = vsel %vm3940, %v1688, 0.0
        %v3973 = vsel %vm3941, %v1687, 0.0
        %v3974 = vsel %vm3942, %v1686, 0.0
        %v3975 = vsel %vm3943, %v1685, 0.0
        %v3976 = vsel %vm3944, %v1684, 0.0
        %v3977 = vsel %vm3945, %v1683, 0.0
        %v3978 = vsel %vm3946, %v1682, 0.0
        %v3979 = vsel %vm3947, %v1681, 0.0
        %v3980 = vsel %vm3948, %v1680, 0.0
        %v3981 = vsel %vm3949, %v1679, 0.0
        %v3982 = vsel %vm3950, %v1678, 0.0
        %v3983 = vsel %vm3951, %v1677, 0.0
        %v3984 = vsel %vm3952, %v1676, 0.0
        %v3985 = vsel %vm3953, %v1675, 0.0
        %v3986 = vsel %vm3954, %v1674, 0.0
        %v3987 = vsel %vm3955, %v1673, 0.0
        %v3988 = vsel %vm3956, %v1672, 0.0
        %v3989 = vsel %vm3957, %v1671, 0.0
        %v3990 = vsel %vm3958, %v1670, 0.0
        %v3991 = vsel %vm3959, %v1669, 0.0
        %v3992 = vsel %vm3960, %v1668, 0.0
        %v3993 = vsel %vm3961, %v1699, 0.0
        %v3994 = vsel %vm3962, %v1698, 0.0
        %v3995 = vpack.c.bf16 %v3964, %v3963
        %v3996 = vpack.c.bf16 %v3966, %v3965
        %v3997 = vpack.c.bf16 %v3968, %v3967
        %v3998 = vpack.c.bf16 %v3970, %v3969
        %v3999 = vpack.c.bf16 %v3972, %v3971
        %v4000 = vpack.c.bf16 %v3974, %v3973
        %v4001 = vpack.c.bf16 %v3976, %v3975
        %v4002 = vpack.c.bf16 %v3978, %v3977
        %v4003 = vpack.c.bf16 %v3980, %v3979
        %v4004 = vpack.c.bf16 %v3982, %v3981
        %v4005 = vpack.c.bf16 %v3984, %v3983
        %v4006 = vpack.c.bf16 %v3986, %v3985
        %v4007 = vpack.c.bf16 %v3988, %v3987
        %v4008 = vpack.c.bf16 %v3990, %v3989
        %v4009 = vpack.c.bf16 %v3992, %v3991
        %v4010 = vpack.c.bf16 %v3994, %v3993
        %s4011 = scalar_lea.vmem %s3, 96
        %v4012 = vld [vmem:[%s4011] sm:$0xf]
        %v4013 = vld [vmem:[%s4011 + $0x4] sm:$0xf]
        %v4014 = vld [vmem:[%s4011 + $0x8] sm:$0xf]
        %v4015 = vld [vmem:[%s4011 + $0xc] sm:$0xf]
        %v4020 = vunpack.c.l.b16 %v4012
        %v4021 = vunpack.c.l.b16 %v4013
        %v4022 = vunpack.c.l.b16 %v4014
        %v4023 = vunpack.c.l.b16 %v4015
        %v4024 = vpack.c.b16 %v4021, %v4020
        %v4025 = vpack.c.b16 %v4023, %v4022
        %v4029 = vsel %vm443, %v3995, 0
        %v4032 = vsel %vm443, %v3996, 0
        %v4035 = vsel %vm443, %v3997, 0
        %v4038 = vsel %vm443, %v3998, 0
        %v4041 = vsel %vm443, %v3999, 0
        %v4044 = vsel %vm443, %v4000, 0
        %v4047 = vsel %vm443, %v4001, 0
        %v4050 = vsel %vm443, %v4002, 0
        %v4053 = vsel %vm443, %v4003, 0
        %v4056 = vsel %vm443, %v4004, 0
        %v4059 = vsel %vm443, %v4005, 0
        %v4062 = vsel %vm443, %v4006, 0
        %v4065 = vsel %vm443, %v4007, 0
        %v4068 = vsel %vm443, %v4008, 0
        %v4071 = vsel %vm443, %v4009, 0
        %v4074 = vsel %vm443, %v4010, 0
        %4076 = vmatprep.subr.bf16.mxu0 0
        %4077 = vmatpush1.bf16.msra.mxu0 %v4024
        %4078 = vmatprep.subr.bf16.mxu0 0
        %4079 = vmatpush1.bf16.msra.mxu0 %v4025
        %4080 = vmatprep.subr.bf16.mxu0 0
        %4081 = vmatpush1.bf16.msra.mxu0 0
        %4082 = vmatprep.subr.bf16.mxu0 0
        %4083 = vmatpush1.bf16.msra.mxu0 0
        %4084 = vmatprep.subr.bf16.mxu0 0
        %4085 = vmatpush1.bf16.msra.mxu0 0
        %4086 = vmatprep.subr.bf16.mxu0 0
        %4087 = vmatpush1.bf16.msra.mxu0 0
        %4088 = vmatprep.subr.bf16.mxu0 0
        %4089 = vmatpush1.bf16.msra.mxu0 0
        %4090 = vmatprep.subr.bf16.mxu0 0
        %4091 = vmatpush1.bf16.msra.mxu0 0
        %4092 = vmatprep.subr.bf16.mxu0 0
        %4093 = vmatpush1.bf16.msra.mxu0 0
        %4094 = vmatprep.subr.bf16.mxu0 0
        %4095 = vmatpush1.bf16.msra.mxu0 0
        %4096 = vmatprep.subr.bf16.mxu0 0
        %4097 = vmatpush1.bf16.msra.mxu0 0
        %4098 = vmatprep.subr.bf16.mxu0 0
        %4099 = vmatpush1.bf16.msra.mxu0 0
        %4100 = vmatprep.subr.bf16.mxu0 0
        %4101 = vmatpush1.bf16.msra.mxu0 0
        %4102 = vmatprep.subr.bf16.mxu0 0
        %4103 = vmatpush1.bf16.msra.mxu0 0
        %4104 = vmatprep.subr.bf16.mxu0 0
        %4105 = vmatpush1.bf16.msra.mxu0 0
        %4106 = vmatprep.subr.bf16.mxu0 0
        %4107 = vmatpush1.bf16.msra.mxu0 0
        %4108 = vmatprep.mubr.bf16.mxu0 0
        %4109 = vmatmul.mubr.bf16.gmra.mrb[0].mxu0 %v4029
        %v4110 = vpop.f32.mrb[0].mxu0
        %v4111 = vadd.f32 0.0, %v4110
        %v4112 = vpop.f32.mrb[0].mxu0
        %v4113 = vpop.f32.mrb[0].mxu0
        %v4114 = vadd.f32 0.0, %v4113
        %v4115 = vpop.f32.mrb[0].mxu0
        %4116 = vmatprep.mubr.bf16.mxu0 0
        %4117 = vmatmul.mubr.bf16.gmra.mrb[0].mxu0 %v4032
        %v4118 = vpop.f32.mrb[0].mxu0
        %v4119 = vadd.f32 0.0, %v4118
        %v4120 = vpop.f32.mrb[0].mxu0
        %v4121 = vpop.f32.mrb[0].mxu0
        %v4122 = vadd.f32 0.0, %v4121
        %v4123 = vpop.f32.mrb[0].mxu0
        %4124 = vmatprep.mubr.bf16.mxu0 0
        %4125 = vmatmul.mubr.bf16.gmra.mrb[0].mxu0 %v4035
        %v4126 = vpop.f32.mrb[0].mxu0
        %v4127 = vadd.f32 0.0, %v4126
        %v4128 = vpop.f32.mrb[0].mxu0
        %v4129 = vpop.f32.mrb[0].mxu0
        %v4130 = vadd.f32 0.0, %v4129
        %v4131 = vpop.f32.mrb[0].mxu0
        %4132 = vmatprep.mubr.bf16.mxu0 0
        %4133 = vmatmul.mubr.bf16.gmra.mrb[0].mxu0 %v4038
        %v4134 = vpop.f32.mrb[0].mxu0
        %v4135 = vadd.f32 0.0, %v4134
        %v4136 = vpop.f32.mrb[0].mxu0
        %v4137 = vpop.f32.mrb[0].mxu0
        %v4138 = vadd.f32 0.0, %v4137
        %v4139 = vpop.f32.mrb[0].mxu0
        %4140 = vmatprep.mubr.bf16.mxu0 0
        %4141 = vmatmul.mubr.bf16.gmra.mrb[0].mxu0 %v4041
        %v4142 = vpop.f32.mrb[0].mxu0
        %v4143 = vadd.f32 0.0, %v4142
        %v4144 = vpop.f32.mrb[0].mxu0
        %v4145 = vpop.f32.mrb[0].mxu0
        %v4146 = vadd.f32 0.0, %v4145
        %v4147 = vpop.f32.mrb[0].mxu0
        %4148 = vmatprep.mubr.bf16.mxu0 0
        %4149 = vmatmul.mubr.bf16.gmra.mrb[0].mxu0 %v4044
        %v4150 = vpop.f32.mrb[0].mxu0
        %v4151 = vadd.f32 0.0, %v4150
        %v4152 = vpop.f32.mrb[0].mxu0
        %v4153 = vpop.f32.mrb[0].mxu0
        %v4154 = vadd.f32 0.0, %v4153
        %v4155 = vpop.f32.mrb[0].mxu0
        %4156 = vmatprep.mubr.bf16.mxu0 0
        %4157 = vmatmul.mubr.bf16.gmra.mrb[0].mxu0 %v4047
        %v4158 = vpop.f32.mrb[0].mxu0
        %v4159 = vadd.f32 0.0, %v4158
        %v4160 = vpop.f32.mrb[0].mxu0
        %v4161 = vpop.f32.mrb[0].mxu0
        %v4162 = vadd.f32 0.0, %v4161
        %v4163 = vpop.f32.mrb[0].mxu0
        %4164 = vmatprep.mubr.bf16.mxu0 0
        %4165 = vmatmul.mubr.bf16.gmra.mrb[0].mxu0 %v4050
        %v4166 = vpop.f32.mrb[0].mxu0
        %v4167 = vadd.f32 0.0, %v4166
        %v4168 = vpop.f32.mrb[0].mxu0
        %v4169 = vpop.f32.mrb[0].mxu0
        %v4170 = vadd.f32 0.0, %v4169
        %v4171 = vpop.f32.mrb[0].mxu0
        %4172 = vmatprep.mubr.bf16.mxu0 0
        %4173 = vmatmul.mubr.bf16.gmra.mrb[0].mxu0 %v4053
        %v4174 = vpop.f32.mrb[0].mxu0
        %v4175 = vadd.f32 0.0, %v4174
        %v4176 = vpop.f32.mrb[0].mxu0
        %v4177 = vpop.f32.mrb[0].mxu0
        %v4178 = vadd.f32 0.0, %v4177
        %v4179 = vpop.f32.mrb[0].mxu0
        %4180 = vmatprep.mubr.bf16.mxu0 0
        %4181 = vmatmul.mubr.bf16.gmra.mrb[0].mxu0 %v4056
        %v4182 = vpop.f32.mrb[0].mxu0
        %v4183 = vadd.f32 0.0, %v4182
        %v4184 = vpop.f32.mrb[0].mxu0
        %v4185 = vpop.f32.mrb[0].mxu0
        %v4186 = vadd.f32 0.0, %v4185
        %v4187 = vpop.f32.mrb[0].mxu0
        %4188 = vmatprep.mubr.bf16.mxu0 0
        %4189 = vmatmul.mubr.bf16.gmra.mrb[0].mxu0 %v4059
        %v4190 = vpop.f32.mrb[0].mxu0
        %v4191 = vadd.f32 0.0, %v4190
        %v4192 = vpop.f32.mrb[0].mxu0
        %v4193 = vpop.f32.mrb[0].mxu0
        %v4194 = vadd.f32 0.0, %v4193
        %v4195 = vpop.f32.mrb[0].mxu0
        %4196 = vmatprep.mubr.bf16.mxu0 0
        %4197 = vmatmul.mubr.bf16.gmra.mrb[0].mxu0 %v4062
        %v4198 = vpop.f32.mrb[0].mxu0
        %v4199 = vadd.f32 0.0, %v4198
        %v4200 = vpop.f32.mrb[0].mxu0
        %v4201 = vpop.f32.mrb[0].mxu0
        %v4202 = vadd.f32 0.0, %v4201
        %v4203 = vpop.f32.mrb[0].mxu0
        %4204 = vmatprep.mubr.bf16.mxu0 0
        %4205 = vmatmul.mubr.bf16.gmra.mrb[0].mxu0 %v4065
        %v4206 = vpop.f32.mrb[0].mxu0
        %v4207 = vadd.f32 0.0, %v4206
        %v4208 = vpop.f32.mrb[0].mxu0
        %v4209 = vpop.f32.mrb[0].mxu0
        %v4210 = vadd.f32 0.0, %v4209
        %v4211 = vpop.f32.mrb[0].mxu0
        %4212 = vmatprep.mubr.bf16.mxu0 0
        %4213 = vmatmul.mubr.bf16.gmra.mrb[0].mxu0 %v4068
        %v4214 = vpop.f32.mrb[0].mxu0
        %v4215 = vadd.f32 0.0, %v4214
        %v4216 = vpop.f32.mrb[0].mxu0
        %v4217 = vpop.f32.mrb[0].mxu0
        %v4218 = vadd.f32 0.0, %v4217
        %v4219 = vpop.f32.mrb[0].mxu0
        %4220 = vmatprep.mubr.bf16.mxu0 0
        %4221 = vmatmul.mubr.bf16.gmra.mrb[0].mxu0 %v4071
        %v4222 = vpop.f32.mrb[0].mxu0
        %v4223 = vadd.f32 0.0, %v4222
        %v4224 = vpop.f32.mrb[0].mxu0
        %v4225 = vpop.f32.mrb[0].mxu0
        %v4226 = vadd.f32 0.0, %v4225
        %v4227 = vpop.f32.mrb[0].mxu0
        %4228 = vmatprep.mubr.bf16.mxu0 0
        %4229 = vmatmul.mubr.bf16.gmra.mrb[0].mxu0 %v4074
        %v4230 = vpop.f32.mrb[0].mxu0
        %v4231 = vadd.f32 0.0, %v4230
        %v4232 = vpop.f32.mrb[0].mxu0
        %v4233 = vpop.f32.mrb[0].mxu0
        %v4234 = vadd.f32 0.0, %v4233
        %v4235 = vpop.f32.mrb[0].mxu0
        %4236 = vdwg.mxu0
        %v4237 = vadd.f32 %v3835, %v4111
        %v4238 = vadd.f32 %v3836, %v4114
        %v4239 = vadd.f32 %v3837, %v4119
        %v4240 = vadd.f32 %v3838, %v4122
        %v4241 = vadd.f32 %v3839, %v4127
        %v4242 = vadd.f32 %v3840, %v4130
        %v4243 = vadd.f32 %v3841, %v4135
        %v4244 = vadd.f32 %v3842, %v4138
        %v4245 = vadd.f32 %v3843, %v4143
        %v4246 = vadd.f32 %v3844, %v4146
        %v4247 = vadd.f32 %v3845, %v4151
        %v4248 = vadd.f32 %v3846, %v4154
        %v4249 = vadd.f32 %v3847, %v4159
        %v4250 = vadd.f32 %v3848, %v4162
        %v4251 = vadd.f32 %v3849, %v4167
        %v4252 = vadd.f32 %v3850, %v4170
        %v4253 = vadd.f32 %v3851, %v4175
        %v4254 = vadd.f32 %v3852, %v4178
        %v4255 = vadd.f32 %v3853, %v4183
        %v4256 = vadd.f32 %v3854, %v4186
        %v4257 = vadd.f32 %v3855, %v4191
        %v4258 = vadd.f32 %v3856, %v4194
        %v4259 = vadd.f32 %v3857, %v4199
        %v4260 = vadd.f32 %v3858, %v4202
        %v4261 = vadd.f32 %v3859, %v4207
        %v4262 = vadd.f32 %v3860, %v4210
        %v4263 = vadd.f32 %v3861, %v4215
        %v4264 = vadd.f32 %v3862, %v4218
        %v4265 = vadd.f32 %v3863, %v4223
        %v4266 = vadd.f32 %v3864, %v4226
        %v4267 = vadd.f32 %v3865, %v4231
        %v4268 = vadd.f32 %v3866, %v4234
        %v4269 = vsel %vm1518, 1, 0
        %v4270 = vsel %vm1519, 1, 0
        %v4271 = vsel %vm1520, 1, 0
        %v4272 = vsel %vm1521, 1, 0
        %v4273 = vsel %vm1522, 1, 0
        %v4274 = vsel %vm1523, 1, 0
        %v4275 = vsel %vm1524, 1, 0
        %v4276 = vsel %vm1525, 1, 0
        %v4277 = vsel %vm1526, 1, 0
        %v4278 = vsel %vm1527, 1, 0
        %v4279 = vsel %vm1528, 1, 0
        %v4280 = vsel %vm1529, 1, 0
        %v4281 = vsel %vm1530, 1, 0
        %v4282 = vsel %vm1531, 1, 0
        %v4283 = vsel %vm1532, 1, 0
        %v4284 = vsel %vm1533, 1, 0
        %v4285 = vsel %vm1534, 1, 0
        %v4286 = vsel %vm1535, 1, 0
        %v4287 = vsel %vm1536, 1, 0
        %v4288 = vsel %vm1537, 1, 0
        %v4289 = vsel %vm1538, 1, 0
        %v4290 = vsel %vm1539, 1, 0
        %v4291 = vsel %vm1540, 1, 0
        %v4292 = vsel %vm1541, 1, 0
        %v4293 = vsel %vm1542, 1, 0
        %v4294 = vsel %vm1543, 1, 0
        %v4295 = vsel %vm1544, 1, 0
        %v4296 = vsel %vm1545, 1, 0
        %v4297 = vsel %vm1546, 1, 0
        %v4298 = vsel %vm1547, 1, 0
        %v4299 = vsel %vm1548, 1, 0
        %v4300 = vsel %vm1549, 1, 0
        %vm4301 = vcmp.eq.s32.totalorder %v4269, 1
        %vm4302 = vcmp.eq.s32.totalorder %v4270, 1
        %vm4303 = vcmp.eq.s32.totalorder %v4271, 1
        %vm4304 = vcmp.eq.s32.totalorder %v4272, 1
        %vm4305 = vcmp.eq.s32.totalorder %v4273, 1
        %vm4306 = vcmp.eq.s32.totalorder %v4274, 1
        %vm4307 = vcmp.eq.s32.totalorder %v4275, 1
        %vm4308 = vcmp.eq.s32.totalorder %v4276, 1
        %vm4309 = vcmp.eq.s32.totalorder %v4277, 1
        %vm4310 = vcmp.eq.s32.totalorder %v4278, 1
        %vm4311 = vcmp.eq.s32.totalorder %v4279, 1
        %vm4312 = vcmp.eq.s32.totalorder %v4280, 1
        %vm4313 = vcmp.eq.s32.totalorder %v4281, 1
        %vm4314 = vcmp.eq.s32.totalorder %v4282, 1
        %vm4315 = vcmp.eq.s32.totalorder %v4283, 1
        %vm4316 = vcmp.eq.s32.totalorder %v4284, 1
        %vm4317 = vcmp.eq.s32.totalorder %v4285, 1
        %vm4318 = vcmp.eq.s32.totalorder %v4286, 1
        %vm4319 = vcmp.eq.s32.totalorder %v4287, 1
        %vm4320 = vcmp.eq.s32.totalorder %v4288, 1
        %vm4321 = vcmp.eq.s32.totalorder %v4289, 1
        %vm4322 = vcmp.eq.s32.totalorder %v4290, 1
        %vm4323 = vcmp.eq.s32.totalorder %v4291, 1
        %vm4324 = vcmp.eq.s32.totalorder %v4292, 1
        %vm4325 = vcmp.eq.s32.totalorder %v4293, 1
        %vm4326 = vcmp.eq.s32.totalorder %v4294, 1
        %vm4327 = vcmp.eq.s32.totalorder %v4295, 1
        %vm4328 = vcmp.eq.s32.totalorder %v4296, 1
        %vm4329 = vcmp.eq.s32.totalorder %v4297, 1
        %vm4330 = vcmp.eq.s32.totalorder %v4298, 1
        %vm4331 = vcmp.eq.s32.totalorder %v4299, 1
        %vm4332 = vcmp.eq.s32.totalorder %v4300, 1
        %v4333 = vsel %vm4301, %v655, 0.0
        %v4334 = vsel %vm4302, %v656, 0.0
        %v4335 = vsel %vm4303, %v657, 0.0
        %v4336 = vsel %vm4304, %v658, 0.0
        %v4337 = vsel %vm4305, %v659, 0.0
        %v4338 = vsel %vm4306, %v660, 0.0
        %v4339 = vsel %vm4307, %v661, 0.0
        %v4340 = vsel %vm4308, %v662, 0.0
        %v4341 = vsel %vm4309, %v663, 0.0
        %v4342 = vsel %vm4310, %v664, 0.0
        %v4343 = vsel %vm4311, %v665, 0.0
        %v4344 = vsel %vm4312, %v666, 0.0
        %v4345 = vsel %vm4313, %v667, 0.0
        %v4346 = vsel %vm4314, %v668, 0.0
        %v4347 = vsel %vm4315, %v669, 0.0
        %v4348 = vsel %vm4316, %v670, 0.0
        %v4349 = vsel %vm4317, %v671, 0.0
        %v4350 = vsel %vm4318, %v672, 0.0
        %v4351 = vsel %vm4319, %v673, 0.0
        %v4352 = vsel %vm4320, %v674, 0.0
        %v4353 = vsel %vm4321, %v675, 0.0
        %v4354 = vsel %vm4322, %v676, 0.0
        %v4355 = vsel %vm4323, %v677, 0.0
        %v4356 = vsel %vm4324, %v678, 0.0
        %v4357 = vsel %vm4325, %v679, 0.0
        %v4358 = vsel %vm4326, %v680, 0.0
        %v4359 = vsel %vm4327, %v681, 0.0
        %v4360 = vsel %vm4328, %v682, 0.0
        %v4361 = vsel %vm4329, %v683, 0.0
        %v4362 = vsel %vm4330, %v684, 0.0
        %v4363 = vsel %vm4331, %v653, 0.0
        %v4364 = vsel %vm4332, %v654, 0.0
        %v4365 = vpack.c.bf16 %v4334, %v4333
        %v4366 = vpack.c.bf16 %v4336, %v4335
        %v4367 = vpack.c.bf16 %v4338, %v4337
        %v4368 = vpack.c.bf16 %v4340, %v4339
        %v4369 = vpack.c.bf16 %v4342, %v4341
        %v4370 = vpack.c.bf16 %v4344, %v4343
        %v4371 = vpack.c.bf16 %v4346, %v4345
        %v4372 = vpack.c.bf16 %v4348, %v4347
        %v4373 = vpack.c.bf16 %v4350, %v4349
        %v4374 = vpack.c.bf16 %v4352, %v4351
        %v4375 = vpack.c.bf16 %v4354, %v4353
        %v4376 = vpack.c.bf16 %v4356, %v4355
        %v4377 = vpack.c.bf16 %v4358, %v4357
        %v4378 = vpack.c.bf16 %v4360, %v4359
        %v4379 = vpack.c.bf16 %v4362, %v4361
        %v4380 = vpack.c.bf16 %v4364, %v4363
        %s4381 = scalar_lea.vmem %s3, 112
        %v4382 = vld [vmem:[%s4381] sm:$0xf]
        %v4383 = vld [vmem:[%s4381 + $0x4] sm:$0xf]
        %v4384 = vld [vmem:[%s4381 + $0x8] sm:$0xf]
        %v4385 = vld [vmem:[%s4381 + $0xc] sm:$0xf]
        %v4390 = vunpack.c.l.b16 %v4382
        %v4391 = vunpack.c.l.b16 %v4383
        %v4392 = vunpack.c.l.b16 %v4384
        %v4393 = vunpack.c.l.b16 %v4385
        %v4394 = vpack.c.b16 %v4391, %v4390
        %v4395 = vpack.c.b16 %v4393, %v4392
        %v4399 = vsel %vm443, %v4365, 0
        %v4402 = vsel %vm443, %v4366, 0
        %v4405 = vsel %vm443, %v4367, 0
        %v4408 = vsel %vm443, %v4368, 0
        %v4411 = vsel %vm443, %v4369, 0
        %v4414 = vsel %vm443, %v4370, 0
        %v4417 = vsel %vm443, %v4371, 0
        %v4420 = vsel %vm443, %v4372, 0
        %v4423 = vsel %vm443, %v4373, 0
        %v4426 = vsel %vm443, %v4374, 0
        %v4429 = vsel %vm443, %v4375, 0
        %v4432 = vsel %vm443, %v4376, 0
        %v4435 = vsel %vm443, %v4377, 0
        %v4438 = vsel %vm443, %v4378, 0
        %v4441 = vsel %vm443, %v4379, 0
        %v4444 = vsel %vm443, %v4380, 0
        %4446 = vmatprep.subr.bf16.mxu0 0
        %4447 = vmatpush1.bf16.msra.mxu0 %v4394
        %4448 = vmatprep.subr.bf16.mxu0 0
        %4449 = vmatpush1.bf16.msra.mxu0 %v4395
        %4450 = vmatprep.subr.bf16.mxu0 0
        %4451 = vmatpush1.bf16.msra.mxu0 0
        %4452 = vmatprep.subr.bf16.mxu0 0
        %4453 = vmatpush1.bf16.msra.mxu0 0
        %4454 = vmatprep.subr.bf16.mxu0 0
        %4455 = vmatpush1.bf16.msra.mxu0 0
        %4456 = vmatprep.subr.bf16.mxu0 0
        %4457 = vmatpush1.bf16.msra.mxu0 0
        %4458 = vmatprep.subr.bf16.mxu0 0
        %4459 = vmatpush1.bf16.msra.mxu0 0
        %4460 = vmatprep.subr.bf16.mxu0 0
        %4461 = vmatpush1.bf16.msra.mxu0 0
        %4462 = vmatprep.subr.bf16.mxu0 0
        %4463 = vmatpush1.bf16.msra.mxu0 0
        %4464 = vmatprep.subr.bf16.mxu0 0
        %4465 = vmatpush1.bf16.msra.mxu0 0
        %4466 = vmatprep.subr.bf16.mxu0 0
        %4467 = vmatpush1.bf16.msra.mxu0 0
        %4468 = vmatprep.subr.bf16.mxu0 0
        %4469 = vmatpush1.bf16.msra.mxu0 0
        %4470 = vmatprep.subr.bf16.mxu0 0
        %4471 = vmatpush1.bf16.msra.mxu0 0
        %4472 = vmatprep.subr.bf16.mxu0 0
        %4473 = vmatpush1.bf16.msra.mxu0 0
        %4474 = vmatprep.subr.bf16.mxu0 0
        %4475 = vmatpush1.bf16.msra.mxu0 0
        %4476 = vmatprep.subr.bf16.mxu0 0
        %4477 = vmatpush1.bf16.msra.mxu0 0
        %4478 = vmatprep.mubr.bf16.mxu0 0
        %4479 = vmatmul.mubr.bf16.gmra.mrb[0].mxu0 %v4399
        %v4480 = vpop.f32.mrb[0].mxu0
        %v4481 = vadd.f32 0.0, %v4480
        %v4482 = vpop.f32.mrb[0].mxu0
        %v4483 = vpop.f32.mrb[0].mxu0
        %v4484 = vadd.f32 0.0, %v4483
        %v4485 = vpop.f32.mrb[0].mxu0
        %4486 = vmatprep.mubr.bf16.mxu0 0
        %4487 = vmatmul.mubr.bf16.gmra.mrb[0].mxu0 %v4402
        %v4488 = vpop.f32.mrb[0].mxu0
        %v4489 = vadd.f32 0.0, %v4488
        %v4490 = vpop.f32.mrb[0].mxu0
        %v4491 = vpop.f32.mrb[0].mxu0
        %v4492 = vadd.f32 0.0, %v4491
        %v4493 = vpop.f32.mrb[0].mxu0
        %4494 = vmatprep.mubr.bf16.mxu0 0
        %4495 = vmatmul.mubr.bf16.gmra.mrb[0].mxu0 %v4405
        %v4496 = vpop.f32.mrb[0].mxu0
        %v4497 = vadd.f32 0.0, %v4496
        %v4498 = vpop.f32.mrb[0].mxu0
        %v4499 = vpop.f32.mrb[0].mxu0
        %v4500 = vadd.f32 0.0, %v4499
        %v4501 = vpop.f32.mrb[0].mxu0
        %4502 = vmatprep.mubr.bf16.mxu0 0
        %4503 = vmatmul.mubr.bf16.gmra.mrb[0].mxu0 %v4408
        %v4504 = vpop.f32.mrb[0].mxu0
        %v4505 = vadd.f32 0.0, %v4504
        %v4506 = vpop.f32.mrb[0].mxu0
        %v4507 = vpop.f32.mrb[0].mxu0
        %v4508 = vadd.f32 0.0, %v4507
        %v4509 = vpop.f32.mrb[0].mxu0
        %4510 = vmatprep.mubr.bf16.mxu0 0
        %4511 = vmatmul.mubr.bf16.gmra.mrb[0].mxu0 %v4411
        %v4512 = vpop.f32.mrb[0].mxu0
        %v4513 = vadd.f32 0.0, %v4512
        %v4514 = vpop.f32.mrb[0].mxu0
        %v4515 = vpop.f32.mrb[0].mxu0
        %v4516 = vadd.f32 0.0, %v4515
        %v4517 = vpop.f32.mrb[0].mxu0
        %4518 = vmatprep.mubr.bf16.mxu0 0
        %4519 = vmatmul.mubr.bf16.gmra.mrb[0].mxu0 %v4414
        %v4520 = vpop.f32.mrb[0].mxu0
        %v4521 = vadd.f32 0.0, %v4520
        %v4522 = vpop.f32.mrb[0].mxu0
        %v4523 = vpop.f32.mrb[0].mxu0
        %v4524 = vadd.f32 0.0, %v4523
        %v4525 = vpop.f32.mrb[0].mxu0
        %4526 = vmatprep.mubr.bf16.mxu0 0
        %4527 = vmatmul.mubr.bf16.gmra.mrb[0].mxu0 %v4417
        %v4528 = vpop.f32.mrb[0].mxu0
        %v4529 = vadd.f32 0.0, %v4528
        %v4530 = vpop.f32.mrb[0].mxu0
        %v4531 = vpop.f32.mrb[0].mxu0
        %v4532 = vadd.f32 0.0, %v4531
        %v4533 = vpop.f32.mrb[0].mxu0
        %4534 = vmatprep.mubr.bf16.mxu0 0
        %4535 = vmatmul.mubr.bf16.gmra.mrb[0].mxu0 %v4420
        %v4536 = vpop.f32.mrb[0].mxu0
        %v4537 = vadd.f32 0.0, %v4536
        %v4538 = vpop.f32.mrb[0].mxu0
        %v4539 = vpop.f32.mrb[0].mxu0
        %v4540 = vadd.f32 0.0, %v4539
        %v4541 = vpop.f32.mrb[0].mxu0
        %4542 = vmatprep.mubr.bf16.mxu0 0
        %4543 = vmatmul.mubr.bf16.gmra.mrb[0].mxu0 %v4423
        %v4544 = vpop.f32.mrb[0].mxu0
        %v4545 = vadd.f32 0.0, %v4544
        %v4546 = vpop.f32.mrb[0].mxu0
        %v4547 = vpop.f32.mrb[0].mxu0
        %v4548 = vadd.f32 0.0, %v4547
        %v4549 = vpop.f32.mrb[0].mxu0
        %4550 = vmatprep.mubr.bf16.mxu0 0
        %4551 = vmatmul.mubr.bf16.gmra.mrb[0].mxu0 %v4426
        %v4552 = vpop.f32.mrb[0].mxu0
        %v4553 = vadd.f32 0.0, %v4552
        %v4554 = vpop.f32.mrb[0].mxu0
        %v4555 = vpop.f32.mrb[0].mxu0
        %v4556 = vadd.f32 0.0, %v4555
        %v4557 = vpop.f32.mrb[0].mxu0
        %4558 = vmatprep.mubr.bf16.mxu0 0
        %4559 = vmatmul.mubr.bf16.gmra.mrb[0].mxu0 %v4429
        %v4560 = vpop.f32.mrb[0].mxu0
        %v4561 = vadd.f32 0.0, %v4560
        %v4562 = vpop.f32.mrb[0].mxu0
        %v4563 = vpop.f32.mrb[0].mxu0
        %v4564 = vadd.f32 0.0, %v4563
        %v4565 = vpop.f32.mrb[0].mxu0
        %4566 = vmatprep.mubr.bf16.mxu0 0
        %4567 = vmatmul.mubr.bf16.gmra.mrb[0].mxu0 %v4432
        %v4568 = vpop.f32.mrb[0].mxu0
        %v4569 = vadd.f32 0.0, %v4568
        %v4570 = vpop.f32.mrb[0].mxu0
        %v4571 = vpop.f32.mrb[0].mxu0
        %v4572 = vadd.f32 0.0, %v4571
        %v4573 = vpop.f32.mrb[0].mxu0
        %4574 = vmatprep.mubr.bf16.mxu0 0
        %4575 = vmatmul.mubr.bf16.gmra.mrb[0].mxu0 %v4435
        %v4576 = vpop.f32.mrb[0].mxu0
        %v4577 = vadd.f32 0.0, %v4576
        %v4578 = vpop.f32.mrb[0].mxu0
        %v4579 = vpop.f32.mrb[0].mxu0
        %v4580 = vadd.f32 0.0, %v4579
        %v4581 = vpop.f32.mrb[0].mxu0
        %4582 = vmatprep.mubr.bf16.mxu0 0
        %4583 = vmatmul.mubr.bf16.gmra.mrb[0].mxu0 %v4438
        %v4584 = vpop.f32.mrb[0].mxu0
        %v4585 = vadd.f32 0.0, %v4584
        %v4586 = vpop.f32.mrb[0].mxu0
        %v4587 = vpop.f32.mrb[0].mxu0
        %v4588 = vadd.f32 0.0, %v4587
        %v4589 = vpop.f32.mrb[0].mxu0
        %4590 = vmatprep.mubr.bf16.mxu0 0
        %4591 = vmatmul.mubr.bf16.gmra.mrb[0].mxu0 %v4441
        %v4592 = vpop.f32.mrb[0].mxu0
        %v4593 = vadd.f32 0.0, %v4592
        %v4594 = vpop.f32.mrb[0].mxu0
        %v4595 = vpop.f32.mrb[0].mxu0
        %v4596 = vadd.f32 0.0, %v4595
        %v4597 = vpop.f32.mrb[0].mxu0
        %4598 = vmatprep.mubr.bf16.mxu0 0
        %4599 = vmatmul.mubr.bf16.gmra.mrb[0].mxu0 %v4444
        %v4600 = vpop.f32.mrb[0].mxu0
        %v4601 = vadd.f32 0.0, %v4600
        %v4602 = vpop.f32.mrb[0].mxu0
        %v4603 = vpop.f32.mrb[0].mxu0
        %v4604 = vadd.f32 0.0, %v4603
        %v4605 = vpop.f32.mrb[0].mxu0
        %4606 = vdwg.mxu0
        %v4607 = vadd.f32 %v4237, %v4481
        %v4608 = vadd.f32 %v4238, %v4484
        %v4609 = vadd.f32 %v4239, %v4489
        %v4610 = vadd.f32 %v4240, %v4492
        %v4611 = vadd.f32 %v4241, %v4497
        %v4612 = vadd.f32 %v4242, %v4500
        %v4613 = vadd.f32 %v4243, %v4505
        %v4614 = vadd.f32 %v4244, %v4508
        %v4615 = vadd.f32 %v4245, %v4513
        %v4616 = vadd.f32 %v4246, %v4516
        %v4617 = vadd.f32 %v4247, %v4521
        %v4618 = vadd.f32 %v4248, %v4524
        %v4619 = vadd.f32 %v4249, %v4529
        %v4620 = vadd.f32 %v4250, %v4532
        %v4621 = vadd.f32 %v4251, %v4537
        %v4622 = vadd.f32 %v4252, %v4540
        %v4623 = vadd.f32 %v4253, %v4545
        %v4624 = vadd.f32 %v4254, %v4548
        %v4625 = vadd.f32 %v4255, %v4553
        %v4626 = vadd.f32 %v4256, %v4556
        %v4627 = vadd.f32 %v4257, %v4561
        %v4628 = vadd.f32 %v4258, %v4564
        %v4629 = vadd.f32 %v4259, %v4569
        %v4630 = vadd.f32 %v4260, %v4572
        %v4631 = vadd.f32 %v4261, %v4577
        %v4632 = vadd.f32 %v4262, %v4580
        %v4633 = vadd.f32 %v4263, %v4585
        %v4634 = vadd.f32 %v4264, %v4588
        %v4635 = vadd.f32 %v4265, %v4593
        %v4636 = vadd.f32 %v4266, %v4596
        %v4637 = vadd.f32 %v4267, %v4601
        %v4638 = vadd.f32 %v4268, %v4604
        %vm4639 = vmand %vm1518, %vm1582
        %vm4640 = vmand %vm1519, %vm1583
        %vm4641 = vmand %vm1520, %vm1584
        %vm4642 = vmand %vm1521, %vm1585
        %vm4643 = vmand %vm1522, %vm1586
        %vm4644 = vmand %vm1523, %vm1587
        %vm4645 = vmand %vm1524, %vm1588
        %vm4646 = vmand %vm1525, %vm1589
        %vm4647 = vmand %vm1526, %vm1590
        %vm4648 = vmand %vm1527, %vm1591
        %vm4649 = vmand %vm1528, %vm1592
        %vm4650 = vmand %vm1529, %vm1593
        %vm4651 = vmand %vm1530, %vm1594
        %vm4652 = vmand %vm1531, %vm1595
        %vm4653 = vmand %vm1532, %vm1596
        %vm4654 = vmand %vm1533, %vm1597
        %vm4655 = vmand %vm1534, %vm1598
        %vm4656 = vmand %vm1535, %vm1599
        %vm4657 = vmand %vm1536, %vm1600
        %vm4658 = vmand %vm1537, %vm1601
        %vm4659 = vmand %vm1538, %vm1602
        %vm4660 = vmand %vm1539, %vm1603
        %vm4661 = vmand %vm1540, %vm1604
        %vm4662 = vmand %vm1541, %vm1605
        %vm4663 = vmand %vm1542, %vm1606
        %vm4664 = vmand %vm1543, %vm1607
        %vm4665 = vmand %vm1544, %vm1608
        %vm4666 = vmand %vm1545, %vm1609
        %vm4667 = vmand %vm1546, %vm1610
        %vm4668 = vmand %vm1547, %vm1611
        %vm4669 = vmand %vm1548, %vm1612
        %vm4670 = vmand %vm1549, %vm1613
        %v4671 = vsel %vm4639, 1, 0
        %v4672 = vsel %vm4640, 1, 0
        %v4673 = vsel %vm4641, 1, 0
        %v4674 = vsel %vm4642, 1, 0
        %v4675 = vsel %vm4643, 1, 0
        %v4676 = vsel %vm4644, 1, 0
        %v4677 = vsel %vm4645, 1, 0
        %v4678 = vsel %vm4646, 1, 0
        %v4679 = vsel %vm4647, 1, 0
        %v4680 = vsel %vm4648, 1, 0
        %v4681 = vsel %vm4649, 1, 0
        %v4682 = vsel %vm4650, 1, 0
        %v4683 = vsel %vm4651, 1, 0
        %v4684 = vsel %vm4652, 1, 0
        %v4685 = vsel %vm4653, 1, 0
        %v4686 = vsel %vm4654, 1, 0
        %v4687 = vsel %vm4655, 1, 0
        %v4688 = vsel %vm4656, 1, 0
        %v4689 = vsel %vm4657, 1, 0
        %v4690 = vsel %vm4658, 1, 0
        %v4691 = vsel %vm4659, 1, 0
        %v4692 = vsel %vm4660, 1, 0
        %v4693 = vsel %vm4661, 1, 0
        %v4694 = vsel %vm4662, 1, 0
        %v4695 = vsel %vm4663, 1, 0
        %v4696 = vsel %vm4664, 1, 0
        %v4697 = vsel %vm4665, 1, 0
        %v4698 = vsel %vm4666, 1, 0
        %v4699 = vsel %vm4667, 1, 0
        %v4700 = vsel %vm4668, 1, 0
        %v4701 = vsel %vm4669, 1, 0
        %v4702 = vsel %vm4670, 1, 0
        %vm4703 = vcmp.eq.s32.totalorder %v4671, 1
        %vm4704 = vcmp.eq.s32.totalorder %v4672, 1
        %vm4705 = vcmp.eq.s32.totalorder %v4673, 1
        %vm4706 = vcmp.eq.s32.totalorder %v4674, 1
        %vm4707 = vcmp.eq.s32.totalorder %v4675, 1
        %vm4708 = vcmp.eq.s32.totalorder %v4676, 1
        %vm4709 = vcmp.eq.s32.totalorder %v4677, 1
        %vm4710 = vcmp.eq.s32.totalorder %v4678, 1
        %vm4711 = vcmp.eq.s32.totalorder %v4679, 1
        %vm4712 = vcmp.eq.s32.totalorder %v4680, 1
        %vm4713 = vcmp.eq.s32.totalorder %v4681, 1
        %vm4714 = vcmp.eq.s32.totalorder %v4682, 1
        %vm4715 = vcmp.eq.s32.totalorder %v4683, 1
        %vm4716 = vcmp.eq.s32.totalorder %v4684, 1
        %vm4717 = vcmp.eq.s32.totalorder %v4685, 1
        %vm4718 = vcmp.eq.s32.totalorder %v4686, 1
        %vm4719 = vcmp.eq.s32.totalorder %v4687, 1
        %vm4720 = vcmp.eq.s32.totalorder %v4688, 1
        %vm4721 = vcmp.eq.s32.totalorder %v4689, 1
        %vm4722 = vcmp.eq.s32.totalorder %v4690, 1
        %vm4723 = vcmp.eq.s32.totalorder %v4691, 1
        %vm4724 = vcmp.eq.s32.totalorder %v4692, 1
        %vm4725 = vcmp.eq.s32.totalorder %v4693, 1
        %vm4726 = vcmp.eq.s32.totalorder %v4694, 1
        %vm4727 = vcmp.eq.s32.totalorder %v4695, 1
        %vm4728 = vcmp.eq.s32.totalorder %v4696, 1
        %vm4729 = vcmp.eq.s32.totalorder %v4697, 1
        %vm4730 = vcmp.eq.s32.totalorder %v4698, 1
        %vm4731 = vcmp.eq.s32.totalorder %v4699, 1
        %vm4732 = vcmp.eq.s32.totalorder %v4700, 1
        %vm4733 = vcmp.eq.s32.totalorder %v4701, 1
        %vm4734 = vcmp.eq.s32.totalorder %v4702, 1
        %v4735 = vsel %vm4703, %v2721, 0.0
        %v4736 = vsel %vm4704, %v2720, 0.0
        %v4737 = vsel %vm4705, %v2719, 0.0
        %v4738 = vsel %vm4706, %v2718, 0.0
        %v4739 = vsel %vm4707, %v2717, 0.0
        %v4740 = vsel %vm4708, %v2716, 0.0
        %v4741 = vsel %vm4709, %v2715, 0.0
        %v4742 = vsel %vm4710, %v2714, 0.0
        %v4743 = vsel %vm4711, %v2713, 0.0
        %v4744 = vsel %vm4712, %v2712, 0.0
        %v4745 = vsel %vm4713, %v2711, 0.0
        %v4746 = vsel %vm4714, %v2710, 0.0
        %v4747 = vsel %vm4715, %v2709, 0.0
        %v4748 = vsel %vm4716, %v2708, 0.0
        %v4749 = vsel %vm4717, %v2707, 0.0
        %v4750 = vsel %vm4718, %v2706, 0.0
        %v4751 = vsel %vm4719, %v2705, 0.0
        %v4752 = vsel %vm4720, %v2704, 0.0
        %v4753 = vsel %vm4721, %v2703, 0.0
        %v4754 = vsel %vm4722, %v2702, 0.0
        %v4755 = vsel %vm4723, %v2701, 0.0
        %v4756 = vsel %vm4724, %v2700, 0.0
        %v4757 = vsel %vm4725, %v2699, 0.0
        %v4758 = vsel %vm4726, %v2698, 0.0
        %v4759 = vsel %vm4727, %v2697, 0.0
        %v4760 = vsel %vm4728, %v2696, 0.0
        %v4761 = vsel %vm4729, %v2695, 0.0
        %v4762 = vsel %vm4730, %v2694, 0.0
        %v4763 = vsel %vm4731, %v2693, 0.0
        %v4764 = vsel %vm4732, %v2724, 0.0
        %v4765 = vsel %vm4733, %v2723, 0.0
        %v4766 = vsel %vm4734, %v2722, 0.0
        %v4767 = vpack.c.bf16 %v4736, %v4735
        %v4768 = vpack.c.bf16 %v4738, %v4737
        %v4769 = vpack.c.bf16 %v4740, %v4739
        %v4770 = vpack.c.bf16 %v4742, %v4741
        %v4771 = vpack.c.bf16 %v4744, %v4743
        %v4772 = vpack.c.bf16 %v4746, %v4745
        %v4773 = vpack.c.bf16 %v4748, %v4747
        %v4774 = vpack.c.bf16 %v4750, %v4749
        %v4775 = vpack.c.bf16 %v4752, %v4751
        %v4776 = vpack.c.bf16 %v4754, %v4753
        %v4777 = vpack.c.bf16 %v4756, %v4755
        %v4778 = vpack.c.bf16 %v4758, %v4757
        %v4779 = vpack.c.bf16 %v4760, %v4759
        %v4780 = vpack.c.bf16 %v4762, %v4761
        %v4781 = vpack.c.bf16 %v4764, %v4763
        %v4782 = vpack.c.bf16 %v4766, %v4765
        %s4783 = scalar_lea.vmem %s3, 128
        %v4784 = vld [vmem:[%s4783] sm:$0xf]
        %v4785 = vld [vmem:[%s4783 + $0x4] sm:$0xf]
        %v4786 = vld [vmem:[%s4783 + $0x8] sm:$0xf]
        %v4787 = vld [vmem:[%s4783 + $0xc] sm:$0xf]
        %v4792 = vunpack.c.l.b16 %v4784
        %v4793 = vunpack.c.l.b16 %v4785
        %v4794 = vunpack.c.l.b16 %v4786
        %v4795 = vunpack.c.l.b16 %v4787
        %v4796 = vpack.c.b16 %v4793, %v4792
        %v4797 = vpack.c.b16 %v4795, %v4794
        %v4801 = vsel %vm443, %v4767, 0
        %v4804 = vsel %vm443, %v4768, 0
        %v4807 = vsel %vm443, %v4769, 0
        %v4810 = vsel %vm443, %v4770, 0
        %v4813 = vsel %vm443, %v4771, 0
        %v4816 = vsel %vm443, %v4772, 0
        %v4819 = vsel %vm443, %v4773, 0
        %v4822 = vsel %vm443, %v4774, 0
        %v4825 = vsel %vm443, %v4775, 0
        %v4828 = vsel %vm443, %v4776, 0
        %v4831 = vsel %vm443, %v4777, 0
        %v4834 = vsel %vm443, %v4778, 0
        %v4837 = vsel %vm443, %v4779, 0
        %v4840 = vsel %vm443, %v4780, 0
        %v4843 = vsel %vm443, %v4781, 0
        %v4846 = vsel %vm443, %v4782, 0
        %4848 = vmatprep.subr.bf16.mxu0 0
        %4849 = vmatpush1.bf16.msra.mxu0 %v4796
        %4850 = vmatprep.subr.bf16.mxu0 0
        %4851 = vmatpush1.bf16.msra.mxu0 %v4797
        %4852 = vmatprep.subr.bf16.mxu0 0
        %4853 = vmatpush1.bf16.msra.mxu0 0
        %4854 = vmatprep.subr.bf16.mxu0 0
        %4855 = vmatpush1.bf16.msra.mxu0 0
        %4856 = vmatprep.subr.bf16.mxu0 0
        %4857 = vmatpush1.bf16.msra.mxu0 0
        %4858 = vmatprep.subr.bf16.mxu0 0
        %4859 = vmatpush1.bf16.msra.mxu0 0
        %4860 = vmatprep.subr.bf16.mxu0 0
        %4861 = vmatpush1.bf16.msra.mxu0 0
        %4862 = vmatprep.subr.bf16.mxu0 0
        %4863 = vmatpush1.bf16.msra.mxu0 0
        %4864 = vmatprep.subr.bf16.mxu0 0
        %4865 = vmatpush1.bf16.msra.mxu0 0
        %4866 = vmatprep.subr.bf16.mxu0 0
        %4867 = vmatpush1.bf16.msra.mxu0 0
        %4868 = vmatprep.subr.bf16.mxu0 0
        %4869 = vmatpush1.bf16.msra.mxu0 0
        %4870 = vmatprep.subr.bf16.mxu0 0
        %4871 = vmatpush1.bf16.msra.mxu0 0
        %4872 = vmatprep.subr.bf16.mxu0 0
        %4873 = vmatpush1.bf16.msra.mxu0 0
        %4874 = vmatprep.subr.bf16.mxu0 0
        %4875 = vmatpush1.bf16.msra.mxu0 0
        %4876 = vmatprep.subr.bf16.mxu0 0
        %4877 = vmatpush1.bf16.msra.mxu0 0
        %4878 = vmatprep.subr.bf16.mxu0 0
        %4879 = vmatpush1.bf16.msra.mxu0 0
        %4880 = vmatprep.mubr.bf16.mxu0 0
        %4881 = vmatmul.mubr.bf16.gmra.mrb[0].mxu0 %v4801
        %v4882 = vpop.f32.mrb[0].mxu0
        %v4883 = vadd.f32 0.0, %v4882
        %v4884 = vpop.f32.mrb[0].mxu0
        %v4885 = vpop.f32.mrb[0].mxu0
        %v4886 = vadd.f32 0.0, %v4885
        %v4887 = vpop.f32.mrb[0].mxu0
        %4888 = vmatprep.mubr.bf16.mxu0 0
        %4889 = vmatmul.mubr.bf16.gmra.mrb[0].mxu0 %v4804
        %v4890 = vpop.f32.mrb[0].mxu0
        %v4891 = vadd.f32 0.0, %v4890
        %v4892 = vpop.f32.mrb[0].mxu0
        %v4893 = vpop.f32.mrb[0].mxu0
        %v4894 = vadd.f32 0.0, %v4893
        %v4895 = vpop.f32.mrb[0].mxu0
        %4896 = vmatprep.mubr.bf16.mxu0 0
        %4897 = vmatmul.mubr.bf16.gmra.mrb[0].mxu0 %v4807
        %v4898 = vpop.f32.mrb[0].mxu0
        %v4899 = vadd.f32 0.0, %v4898
        %v4900 = vpop.f32.mrb[0].mxu0
        %v4901 = vpop.f32.mrb[0].mxu0
        %v4902 = vadd.f32 0.0, %v4901
        %v4903 = vpop.f32.mrb[0].mxu0
        %4904 = vmatprep.mubr.bf16.mxu0 0
        %4905 = vmatmul.mubr.bf16.gmra.mrb[0].mxu0 %v4810
        %v4906 = vpop.f32.mrb[0].mxu0
        %v4907 = vadd.f32 0.0, %v4906
        %v4908 = vpop.f32.mrb[0].mxu0
        %v4909 = vpop.f32.mrb[0].mxu0
        %v4910 = vadd.f32 0.0, %v4909
        %v4911 = vpop.f32.mrb[0].mxu0
        %4912 = vmatprep.mubr.bf16.mxu0 0
        %4913 = vmatmul.mubr.bf16.gmra.mrb[0].mxu0 %v4813
        %v4914 = vpop.f32.mrb[0].mxu0
        %v4915 = vadd.f32 0.0, %v4914
        %v4916 = vpop.f32.mrb[0].mxu0
        %v4917 = vpop.f32.mrb[0].mxu0
        %v4918 = vadd.f32 0.0, %v4917
        %v4919 = vpop.f32.mrb[0].mxu0
        %4920 = vmatprep.mubr.bf16.mxu0 0
        %4921 = vmatmul.mubr.bf16.gmra.mrb[0].mxu0 %v4816
        %v4922 = vpop.f32.mrb[0].mxu0
        %v4923 = vadd.f32 0.0, %v4922
        %v4924 = vpop.f32.mrb[0].mxu0
        %v4925 = vpop.f32.mrb[0].mxu0
        %v4926 = vadd.f32 0.0, %v4925
        %v4927 = vpop.f32.mrb[0].mxu0
        %4928 = vmatprep.mubr.bf16.mxu0 0
        %4929 = vmatmul.mubr.bf16.gmra.mrb[0].mxu0 %v4819
        %v4930 = vpop.f32.mrb[0].mxu0
        %v4931 = vadd.f32 0.0, %v4930
        %v4932 = vpop.f32.mrb[0].mxu0
        %v4933 = vpop.f32.mrb[0].mxu0
        %v4934 = vadd.f32 0.0, %v4933
        %v4935 = vpop.f32.mrb[0].mxu0
        %4936 = vmatprep.mubr.bf16.mxu0 0
        %4937 = vmatmul.mubr.bf16.gmra.mrb[0].mxu0 %v4822
        %v4938 = vpop.f32.mrb[0].mxu0
        %v4939 = vadd.f32 0.0, %v4938
        %v4940 = vpop.f32.mrb[0].mxu0
        %v4941 = vpop.f32.mrb[0].mxu0
        %v4942 = vadd.f32 0.0, %v4941
        %v4943 = vpop.f32.mrb[0].mxu0
        %4944 = vmatprep.mubr.bf16.mxu0 0
        %4945 = vmatmul.mubr.bf16.gmra.mrb[0].mxu0 %v4825
        %v4946 = vpop.f32.mrb[0].mxu0
        %v4947 = vadd.f32 0.0, %v4946
        %v4948 = vpop.f32.mrb[0].mxu0
        %v4949 = vpop.f32.mrb[0].mxu0
        %v4950 = vadd.f32 0.0, %v4949
        %v4951 = vpop.f32.mrb[0].mxu0
        %4952 = vmatprep.mubr.bf16.mxu0 0
        %4953 = vmatmul.mubr.bf16.gmra.mrb[0].mxu0 %v4828
        %v4954 = vpop.f32.mrb[0].mxu0
        %v4955 = vadd.f32 0.0, %v4954
        %v4956 = vpop.f32.mrb[0].mxu0
        %v4957 = vpop.f32.mrb[0].mxu0
        %v4958 = vadd.f32 0.0, %v4957
        %v4959 = vpop.f32.mrb[0].mxu0
        %4960 = vmatprep.mubr.bf16.mxu0 0
        %4961 = vmatmul.mubr.bf16.gmra.mrb[0].mxu0 %v4831
        %v4962 = vpop.f32.mrb[0].mxu0
        %v4963 = vadd.f32 0.0, %v4962
        %v4964 = vpop.f32.mrb[0].mxu0
        %v4965 = vpop.f32.mrb[0].mxu0
        %v4966 = vadd.f32 0.0, %v4965
        %v4967 = vpop.f32.mrb[0].mxu0
        %4968 = vmatprep.mubr.bf16.mxu0 0
        %4969 = vmatmul.mubr.bf16.gmra.mrb[0].mxu0 %v4834
        %v4970 = vpop.f32.mrb[0].mxu0
        %v4971 = vadd.f32 0.0, %v4970
        %v4972 = vpop.f32.mrb[0].mxu0
        %v4973 = vpop.f32.mrb[0].mxu0
        %v4974 = vadd.f32 0.0, %v4973
        %v4975 = vpop.f32.mrb[0].mxu0
        %4976 = vmatprep.mubr.bf16.mxu0 0
        %4977 = vmatmul.mubr.bf16.gmra.mrb[0].mxu0 %v4837
        %v4978 = vpop.f32.mrb[0].mxu0
        %v4979 = vadd.f32 0.0, %v4978
        %v4980 = vpop.f32.mrb[0].mxu0
        %v4981 = vpop.f32.mrb[0].mxu0
        %v4982 = vadd.f32 0.0, %v4981
        %v4983 = vpop.f32.mrb[0].mxu0
        %4984 = vmatprep.mubr.bf16.mxu0 0
        %4985 = vmatmul.mubr.bf16.gmra.mrb[0].mxu0 %v4840
        %v4986 = vpop.f32.mrb[0].mxu0
        %v4987 = vadd.f32 0.0, %v4986
        %v4988 = vpop.f32.mrb[0].mxu0
        %v4989 = vpop.f32.mrb[0].mxu0
        %v4990 = vadd.f32 0.0, %v4989
        %v4991 = vpop.f32.mrb[0].mxu0
        %4992 = vmatprep.mubr.bf16.mxu0 0
        %4993 = vmatmul.mubr.bf16.gmra.mrb[0].mxu0 %v4843
        %v4994 = vpop.f32.mrb[0].mxu0
        %v4995 = vadd.f32 0.0, %v4994
        %v4996 = vpop.f32.mrb[0].mxu0
        %v4997 = vpop.f32.mrb[0].mxu0
        %v4998 = vadd.f32 0.0, %v4997
        %v4999 = vpop.f32.mrb[0].mxu0
        %5000 = vmatprep.mubr.bf16.mxu0 0
        %5001 = vmatmul.mubr.bf16.gmra.mrb[0].mxu0 %v4846
        %v5002 = vpop.f32.mrb[0].mxu0
        %v5003 = vadd.f32 0.0, %v5002
        %v5004 = vpop.f32.mrb[0].mxu0
        %v5005 = vpop.f32.mrb[0].mxu0
        %v5006 = vadd.f32 0.0, %v5005
        %v5007 = vpop.f32.mrb[0].mxu0
        %5008 = vdwg.mxu0
        %v5009 = vadd.f32 %v4607, %v4883
        %v5010 = vadd.f32 %v4608, %v4886
        %v5011 = vadd.f32 %v4609, %v4891
        %v5012 = vadd.f32 %v4610, %v4894
        %v5013 = vadd.f32 %v4611, %v4899
        %v5014 = vadd.f32 %v4612, %v4902
        %v5015 = vadd.f32 %v4613, %v4907
        %v5016 = vadd.f32 %v4614, %v4910
        %v5017 = vadd.f32 %v4615, %v4915
        %v5018 = vadd.f32 %v4616, %v4918
        %v5019 = vadd.f32 %v4617, %v4923
        %v5020 = vadd.f32 %v4618, %v4926
        %v5021 = vadd.f32 %v4619, %v4931
        %v5022 = vadd.f32 %v4620, %v4934
        %v5023 = vadd.f32 %v4621, %v4939
        %v5024 = vadd.f32 %v4622, %v4942
        %v5025 = vadd.f32 %v4623, %v4947
        %v5026 = vadd.f32 %v4624, %v4950
        %v5027 = vadd.f32 %v4625, %v4955
        %v5028 = vadd.f32 %v4626, %v4958
        %v5029 = vadd.f32 %v4627, %v4963
        %v5030 = vadd.f32 %v4628, %v4966
        %v5031 = vadd.f32 %v4629, %v4971
        %v5032 = vadd.f32 %v4630, %v4974
        %v5033 = vadd.f32 %v4631, %v4979
        %v5034 = vadd.f32 %v4632, %v4982
        %v5035 = vadd.f32 %v4633, %v4987
        %v5036 = vadd.f32 %v4634, %v4990
        %v5037 = vadd.f32 %v4635, %v4995
        %v5038 = vadd.f32 %v4636, %v4998
        %v5039 = vadd.f32 %v4637, %v5003
        %v5040 = vadd.f32 %v4638, %v5006
        %v5041 = vld [vmem:[%s4] sm:$0x1]
        %v5043 = vlaneseq
        %v5044 = vshrl.u32 %v5043, 7
        %v5045 = vsub.s32 0, %v5044
        %v5046 = vrot.slane %v5041, %v5045
        %v5048 = vadd.f32 %v5009, %v5046
        %v5049 = vadd.f32 %v5010, %v5046
        %v5050 = vadd.f32 %v5011, %v5046
        %v5051 = vadd.f32 %v5012, %v5046
        %v5052 = vadd.f32 %v5013, %v5046
        %v5053 = vadd.f32 %v5014, %v5046
        %v5054 = vadd.f32 %v5015, %v5046
        %v5055 = vadd.f32 %v5016, %v5046
        %v5056 = vadd.f32 %v5017, %v5046
        %v5057 = vadd.f32 %v5018, %v5046
        %v5058 = vadd.f32 %v5019, %v5046
        %v5059 = vadd.f32 %v5020, %v5046
        %v5060 = vadd.f32 %v5021, %v5046
        %v5061 = vadd.f32 %v5022, %v5046
        %v5062 = vadd.f32 %v5023, %v5046
        %v5063 = vadd.f32 %v5024, %v5046
        %v5064 = vadd.f32 %v5025, %v5046
        %v5065 = vadd.f32 %v5026, %v5046
        %v5066 = vadd.f32 %v5027, %v5046
        %v5067 = vadd.f32 %v5028, %v5046
        %v5068 = vadd.f32 %v5029, %v5046
        %v5069 = vadd.f32 %v5030, %v5046
        %v5070 = vadd.f32 %v5031, %v5046
        %v5071 = vadd.f32 %v5032, %v5046
        %v5072 = vadd.f32 %v5033, %v5046
        %v5073 = vadd.f32 %v5034, %v5046
        %v5074 = vadd.f32 %v5035, %v5046
        %v5075 = vadd.f32 %v5036, %v5046
        %v5076 = vadd.f32 %v5037, %v5046
        %v5077 = vadd.f32 %v5038, %v5046
        %v5078 = vadd.f32 %v5039, %v5046
        %v5079 = vadd.f32 %v5040, %v5046
        %v5080 = vmax.f32 %v5048, 0.0
        %v5081 = vmax.f32 %v5049, 0.0
        %v5082 = vmax.f32 %v5050, 0.0
        %v5083 = vmax.f32 %v5051, 0.0
        %v5084 = vmax.f32 %v5052, 0.0
        %v5085 = vmax.f32 %v5053, 0.0
        %v5086 = vmax.f32 %v5054, 0.0
        %v5087 = vmax.f32 %v5055, 0.0
        %v5088 = vmax.f32 %v5056, 0.0
        %v5089 = vmax.f32 %v5057, 0.0
        %v5090 = vmax.f32 %v5058, 0.0
        %v5091 = vmax.f32 %v5059, 0.0
        %v5092 = vmax.f32 %v5060, 0.0
        %v5093 = vmax.f32 %v5061, 0.0
        %v5094 = vmax.f32 %v5062, 0.0
        %v5095 = vmax.f32 %v5063, 0.0
        %v5096 = vmax.f32 %v5064, 0.0
        %v5097 = vmax.f32 %v5065, 0.0
        %v5098 = vmax.f32 %v5066, 0.0
        %v5099 = vmax.f32 %v5067, 0.0
        %v5100 = vmax.f32 %v5068, 0.0
        %v5101 = vmax.f32 %v5069, 0.0
        %v5102 = vmax.f32 %v5070, 0.0
        %v5103 = vmax.f32 %v5071, 0.0
        %v5104 = vmax.f32 %v5072, 0.0
        %v5105 = vmax.f32 %v5073, 0.0
        %v5106 = vmax.f32 %v5074, 0.0
        %v5107 = vmax.f32 %v5075, 0.0
        %v5108 = vmax.f32 %v5076, 0.0
        %v5109 = vmax.f32 %v5077, 0.0
        %v5110 = vmax.f32 %v5078, 0.0
        %v5111 = vmax.f32 %v5079, 0.0
        %v5112 = vpack.c.bf16 %v5081, %v5080
        %v5113 = vpack.c.bf16 %v5083, %v5082
        %v5114 = vpack.c.bf16 %v5085, %v5084
        %v5115 = vpack.c.bf16 %v5087, %v5086
        %v5116 = vpack.c.bf16 %v5089, %v5088
        %v5117 = vpack.c.bf16 %v5091, %v5090
        %v5118 = vpack.c.bf16 %v5093, %v5092
        %v5119 = vpack.c.bf16 %v5095, %v5094
        %v5120 = vpack.c.bf16 %v5097, %v5096
        %v5121 = vpack.c.bf16 %v5099, %v5098
        %v5122 = vpack.c.bf16 %v5101, %v5100
        %v5123 = vpack.c.bf16 %v5103, %v5102
        %v5124 = vpack.c.bf16 %v5105, %v5104
        %v5125 = vpack.c.bf16 %v5107, %v5106
        %v5126 = vpack.c.bf16 %v5109, %v5108
        %v5127 = vpack.c.bf16 %v5111, %v5110
        %v5128 = vld [vmem:[%s5] sm:$0xf]
        %v5129 = vld [vmem:[%s5 + $0x4] sm:$0xf]
        %v5130 = vld [vmem:[%s5 + $0x8] sm:$0xf]
        %v5131 = vld [vmem:[%s5 + $0xc] sm:$0xf]
        %v5132 = vld [vmem:[%s6] sm:$0xf]
        %v5133 = vld [vmem:[%s6 + $0x4] sm:$0xf]
        %v5134 = vld [vmem:[%s6 + $0x8] sm:$0xf]
        %v5135 = vld [vmem:[%s6 + $0xc] sm:$0xf]
        %v5140 = vunpack.c.l.b16 %v5132
        %v5141 = vunpack.c.l.b16 %v5133
        %v5142 = vunpack.c.l.b16 %v5134
        %v5143 = vunpack.c.l.b16 %v5135
        %v5144 = vpack.c.b16 %v5141, %v5140
        %v5145 = vpack.c.b16 %v5143, %v5142
        %5148 = vmatprep.subr.bf16.mxu0 0
        %5149 = vmatpush1.bf16.msra.mxu0 %v5144
        %5150 = vmatprep.subr.bf16.mxu0 0
        %5151 = vmatpush1.bf16.msra.mxu0 %v5145
        %5152 = vmatprep.subr.bf16.mxu0 0
        %5153 = vmatpush1.bf16.msra.mxu0 0
        %5154 = vmatprep.subr.bf16.mxu0 0
        %5155 = vmatpush1.bf16.msra.mxu0 0
        %5156 = vmatprep.subr.bf16.mxu0 0
        %5157 = vmatpush1.bf16.msra.mxu0 0
        %5158 = vmatprep.subr.bf16.mxu0 0
        %5159 = vmatpush1.bf16.msra.mxu0 0
        %5160 = vmatprep.subr.bf16.mxu0 0
        %5161 = vmatpush1.bf16.msra.mxu0 0
        %5162 = vmatprep.subr.bf16.mxu0 0
        %5163 = vmatpush1.bf16.msra.mxu0 0
        %5164 = vmatprep.subr.bf16.mxu0 0
        %5165 = vmatpush1.bf16.msra.mxu0 0
        %5166 = vmatprep.subr.bf16.mxu0 0
        %5167 = vmatpush1.bf16.msra.mxu0 0
        %5168 = vmatprep.subr.bf16.mxu0 0
        %5169 = vmatpush1.bf16.msra.mxu0 0
        %5170 = vmatprep.subr.bf16.mxu0 0
        %5171 = vmatpush1.bf16.msra.mxu0 0
        %5172 = vmatprep.subr.bf16.mxu0 0
        %5173 = vmatpush1.bf16.msra.mxu0 0
        %5174 = vmatprep.subr.bf16.mxu0 0
        %5175 = vmatpush1.bf16.msra.mxu0 0
        %5176 = vmatprep.subr.bf16.mxu0 0
        %5177 = vmatpush1.bf16.msra.mxu0 0
        %5178 = vmatprep.subr.bf16.mxu0 0
        %5179 = vmatpush1.bf16.msra.mxu0 0
        %5180 = vmatprep.mubr.bf16.mxu0 0
        %5181 = vmatmul.mubr.bf16.gmra.mrb[0].mxu0 %v445
        %v5182 = vpop.f32.mrb[0].mxu0
        %v5183 = vadd.f32 0.0, %v5182
        %v5184 = vpop.f32.mrb[0].mxu0
        %v5185 = vpop.f32.mrb[0].mxu0
        %v5186 = vadd.f32 0.0, %v5185
        %v5187 = vpop.f32.mrb[0].mxu0
        %5188 = vmatprep.mubr.bf16.mxu0 0
        %5189 = vmatmul.mubr.bf16.gmra.mrb[0].mxu0 %v448
        %v5190 = vpop.f32.mrb[0].mxu0
        %v5191 = vadd.f32 0.0, %v5190
        %v5192 = vpop.f32.mrb[0].mxu0
        %v5193 = vpop.f32.mrb[0].mxu0
        %v5194 = vadd.f32 0.0, %v5193
        %v5195 = vpop.f32.mrb[0].mxu0
        %5196 = vmatprep.mubr.bf16.mxu0 0
        %5197 = vmatmul.mubr.bf16.gmra.mrb[0].mxu0 %v451
        %v5198 = vpop.f32.mrb[0].mxu0
        %v5199 = vadd.f32 0.0, %v5198
        %v5200 = vpop.f32.mrb[0].mxu0
        %v5201 = vpop.f32.mrb[0].mxu0
        %v5202 = vadd.f32 0.0, %v5201
        %v5203 = vpop.f32.mrb[0].mxu0
        %5204 = vmatprep.mubr.bf16.mxu0 0
        %5205 = vmatmul.mubr.bf16.gmra.mrb[0].mxu0 %v454
        %v5206 = vpop.f32.mrb[0].mxu0
        %v5207 = vadd.f32 0.0, %v5206
        %v5208 = vpop.f32.mrb[0].mxu0
        %v5209 = vpop.f32.mrb[0].mxu0
        %v5210 = vadd.f32 0.0, %v5209
        %v5211 = vpop.f32.mrb[0].mxu0
        %5212 = vmatprep.mubr.bf16.mxu0 0
        %5213 = vmatmul.mubr.bf16.gmra.mrb[0].mxu0 %v457
        %v5214 = vpop.f32.mrb[0].mxu0
        %v5215 = vadd.f32 0.0, %v5214
        %v5216 = vpop.f32.mrb[0].mxu0
        %v5217 = vpop.f32.mrb[0].mxu0
        %v5218 = vadd.f32 0.0, %v5217
        %v5219 = vpop.f32.mrb[0].mxu0
        %5220 = vmatprep.mubr.bf16.mxu0 0
        %5221 = vmatmul.mubr.bf16.gmra.mrb[0].mxu0 %v460
        %v5222 = vpop.f32.mrb[0].mxu0
        %v5223 = vadd.f32 0.0, %v5222
        %v5224 = vpop.f32.mrb[0].mxu0
        %v5225 = vpop.f32.mrb[0].mxu0
        %v5226 = vadd.f32 0.0, %v5225
        %v5227 = vpop.f32.mrb[0].mxu0
        %5228 = vmatprep.mubr.bf16.mxu0 0
        %5229 = vmatmul.mubr.bf16.gmra.mrb[0].mxu0 %v463
        %v5230 = vpop.f32.mrb[0].mxu0
        %v5231 = vadd.f32 0.0, %v5230
        %v5232 = vpop.f32.mrb[0].mxu0
        %v5233 = vpop.f32.mrb[0].mxu0
        %v5234 = vadd.f32 0.0, %v5233
        %v5235 = vpop.f32.mrb[0].mxu0
        %5236 = vmatprep.mubr.bf16.mxu0 0
        %5237 = vmatmul.mubr.bf16.gmra.mrb[0].mxu0 %v466
        %v5238 = vpop.f32.mrb[0].mxu0
        %v5239 = vadd.f32 0.0, %v5238
        %v5240 = vpop.f32.mrb[0].mxu0
        %v5241 = vpop.f32.mrb[0].mxu0
        %v5242 = vadd.f32 0.0, %v5241
        %v5243 = vpop.f32.mrb[0].mxu0
        %5244 = vmatprep.mubr.bf16.mxu0 0
        %5245 = vmatmul.mubr.bf16.gmra.mrb[0].mxu0 %v469
        %v5246 = vpop.f32.mrb[0].mxu0
        %v5247 = vadd.f32 0.0, %v5246
        %v5248 = vpop.f32.mrb[0].mxu0
        %v5249 = vpop.f32.mrb[0].mxu0
        %v5250 = vadd.f32 0.0, %v5249
        %v5251 = vpop.f32.mrb[0].mxu0
        %5252 = vmatprep.mubr.bf16.mxu0 0
        %5253 = vmatmul.mubr.bf16.gmra.mrb[0].mxu0 %v472
        %v5254 = vpop.f32.mrb[0].mxu0
        %v5255 = vadd.f32 0.0, %v5254
        %v5256 = vpop.f32.mrb[0].mxu0
        %v5257 = vpop.f32.mrb[0].mxu0
        %v5258 = vadd.f32 0.0, %v5257
        %v5259 = vpop.f32.mrb[0].mxu0
        %5260 = vmatprep.mubr.bf16.mxu0 0
        %5261 = vmatmul.mubr.bf16.gmra.mrb[0].mxu0 %v475
        %v5262 = vpop.f32.mrb[0].mxu0
        %v5263 = vadd.f32 0.0, %v5262
        %v5264 = vpop.f32.mrb[0].mxu0
        %v5265 = vpop.f32.mrb[0].mxu0
        %v5266 = vadd.f32 0.0, %v5265
        %v5267 = vpop.f32.mrb[0].mxu0
        %5268 = vmatprep.mubr.bf16.mxu0 0
        %5269 = vmatmul.mubr.bf16.gmra.mrb[0].mxu0 %v478
        %v5270 = vpop.f32.mrb[0].mxu0
        %v5271 = vadd.f32 0.0, %v5270
        %v5272 = vpop.f32.mrb[0].mxu0
        %v5273 = vpop.f32.mrb[0].mxu0
        %v5274 = vadd.f32 0.0, %v5273
        %v5275 = vpop.f32.mrb[0].mxu0
        %5276 = vmatprep.mubr.bf16.mxu0 0
        %5277 = vmatmul.mubr.bf16.gmra.mrb[0].mxu0 %v481
        %v5278 = vpop.f32.mrb[0].mxu0
        %v5279 = vadd.f32 0.0, %v5278
        %v5280 = vpop.f32.mrb[0].mxu0
        %v5281 = vpop.f32.mrb[0].mxu0
        %v5282 = vadd.f32 0.0, %v5281
        %v5283 = vpop.f32.mrb[0].mxu0
        %5284 = vmatprep.mubr.bf16.mxu0 0
        %5285 = vmatmul.mubr.bf16.gmra.mrb[0].mxu0 %v484
        %v5286 = vpop.f32.mrb[0].mxu0
        %v5287 = vadd.f32 0.0, %v5286
        %v5288 = vpop.f32.mrb[0].mxu0
        %v5289 = vpop.f32.mrb[0].mxu0
        %v5290 = vadd.f32 0.0, %v5289
        %v5291 = vpop.f32.mrb[0].mxu0
        %5292 = vmatprep.mubr.bf16.mxu0 0
        %5293 = vmatmul.mubr.bf16.gmra.mrb[0].mxu0 %v487
        %v5294 = vpop.f32.mrb[0].mxu0
        %v5295 = vadd.f32 0.0, %v5294
        %v5296 = vpop.f32.mrb[0].mxu0
        %v5297 = vpop.f32.mrb[0].mxu0
        %v5298 = vadd.f32 0.0, %v5297
        %v5299 = vpop.f32.mrb[0].mxu0
        %5300 = vmatprep.mubr.bf16.mxu0 0
        %5301 = vmatmul.mubr.bf16.gmra.mrb[0].mxu0 %v490
        %v5302 = vpop.f32.mrb[0].mxu0
        %v5303 = vadd.f32 0.0, %v5302
        %v5304 = vpop.f32.mrb[0].mxu0
        %v5305 = vpop.f32.mrb[0].mxu0
        %v5306 = vadd.f32 0.0, %v5305
        %v5307 = vpop.f32.mrb[0].mxu0
        %5308 = vdwg.mxu0
        %v5313 = vunpack.c.l.b16 %v5128
        %v5314 = vunpack.c.l.b16 %v5129
        %v5315 = vunpack.c.l.b16 %v5130
        %v5316 = vunpack.c.l.b16 %v5131
        %v5317 = vpack.c.b16 %v5314, %v5313
        %v5318 = vpack.c.b16 %v5316, %v5315
        %v5322 = vsel %vm443, %v5112, 0
        %v5325 = vsel %vm443, %v5113, 0
        %v5328 = vsel %vm443, %v5114, 0
        %v5331 = vsel %vm443, %v5115, 0
        %v5334 = vsel %vm443, %v5116, 0
        %v5337 = vsel %vm443, %v5117, 0
        %v5340 = vsel %vm443, %v5118, 0
        %v5343 = vsel %vm443, %v5119, 0
        %v5346 = vsel %vm443, %v5120, 0
        %v5349 = vsel %vm443, %v5121, 0
        %v5352 = vsel %vm443, %v5122, 0
        %v5355 = vsel %vm443, %v5123, 0
        %v5358 = vsel %vm443, %v5124, 0
        %v5361 = vsel %vm443, %v5125, 0
        %v5364 = vsel %vm443, %v5126, 0
        %v5367 = vsel %vm443, %v5127, 0
        %5369 = vmatprep.subr.bf16.mxu0 0
        %5370 = vmatpush1.bf16.msra.mxu0 %v5317
        %5371 = vmatprep.subr.bf16.mxu0 0
        %5372 = vmatpush1.bf16.msra.mxu0 %v5318
        %5373 = vmatprep.subr.bf16.mxu0 0
        %5374 = vmatpush1.bf16.msra.mxu0 0
        %5375 = vmatprep.subr.bf16.mxu0 0
        %5376 = vmatpush1.bf16.msra.mxu0 0
        %5377 = vmatprep.subr.bf16.mxu0 0
        %5378 = vmatpush1.bf16.msra.mxu0 0
        %5379 = vmatprep.subr.bf16.mxu0 0
        %5380 = vmatpush1.bf16.msra.mxu0 0
        %5381 = vmatprep.subr.bf16.mxu0 0
        %5382 = vmatpush1.bf16.msra.mxu0 0
        %5383 = vmatprep.subr.bf16.mxu0 0
        %5384 = vmatpush1.bf16.msra.mxu0 0
        %5385 = vmatprep.subr.bf16.mxu0 0
        %5386 = vmatpush1.bf16.msra.mxu0 0
        %5387 = vmatprep.subr.bf16.mxu0 0
        %5388 = vmatpush1.bf16.msra.mxu0 0
        %5389 = vmatprep.subr.bf16.mxu0 0
        %5390 = vmatpush1.bf16.msra.mxu0 0
        %5391 = vmatprep.subr.bf16.mxu0 0
        %5392 = vmatpush1.bf16.msra.mxu0 0
        %5393 = vmatprep.subr.bf16.mxu0 0
        %5394 = vmatpush1.bf16.msra.mxu0 0
        %5395 = vmatprep.subr.bf16.mxu0 0
        %5396 = vmatpush1.bf16.msra.mxu0 0
        %5397 = vmatprep.subr.bf16.mxu0 0
        %5398 = vmatpush1.bf16.msra.mxu0 0
        %5399 = vmatprep.subr.bf16.mxu0 0
        %5400 = vmatpush1.bf16.msra.mxu0 0
        %5401 = vmatprep.mubr.bf16.mxu0 0
        %5402 = vmatmul.mubr.bf16.gmra.mrb[0].mxu0 %v5322
        %v5403 = vpop.f32.mrb[0].mxu0
        %v5404 = vadd.f32 %v5183, %v5403
        %v5405 = vpop.f32.mrb[0].mxu0
        %v5406 = vpop.f32.mrb[0].mxu0
        %v5407 = vadd.f32 %v5186, %v5406
        %v5408 = vpop.f32.mrb[0].mxu0
        %5409 = vmatprep.mubr.bf16.mxu0 0
        %5410 = vmatmul.mubr.bf16.gmra.mrb[0].mxu0 %v5325
        %v5411 = vpop.f32.mrb[0].mxu0
        %v5412 = vadd.f32 %v5191, %v5411
        %v5413 = vpop.f32.mrb[0].mxu0
        %v5414 = vpop.f32.mrb[0].mxu0
        %v5415 = vadd.f32 %v5194, %v5414
        %v5416 = vpop.f32.mrb[0].mxu0
        %5417 = vmatprep.mubr.bf16.mxu0 0
        %5418 = vmatmul.mubr.bf16.gmra.mrb[0].mxu0 %v5328
        %v5419 = vpop.f32.mrb[0].mxu0
        %v5420 = vadd.f32 %v5199, %v5419
        %v5421 = vpop.f32.mrb[0].mxu0
        %v5422 = vpop.f32.mrb[0].mxu0
        %v5423 = vadd.f32 %v5202, %v5422
        %v5424 = vpop.f32.mrb[0].mxu0
        %5425 = vmatprep.mubr.bf16.mxu0 0
        %5426 = vmatmul.mubr.bf16.gmra.mrb[0].mxu0 %v5331
        %v5427 = vpop.f32.mrb[0].mxu0
        %v5428 = vadd.f32 %v5207, %v5427
        %v5429 = vpop.f32.mrb[0].mxu0
        %v5430 = vpop.f32.mrb[0].mxu0
        %v5431 = vadd.f32 %v5210, %v5430
        %v5432 = vpop.f32.mrb[0].mxu0
        %5433 = vmatprep.mubr.bf16.mxu0 0
        %5434 = vmatmul.mubr.bf16.gmra.mrb[0].mxu0 %v5334
        %v5435 = vpop.f32.mrb[0].mxu0
        %v5436 = vadd.f32 %v5215, %v5435
        %v5437 = vpop.f32.mrb[0].mxu0
        %v5438 = vpop.f32.mrb[0].mxu0
        %v5439 = vadd.f32 %v5218, %v5438
        %v5440 = vpop.f32.mrb[0].mxu0
        %5441 = vmatprep.mubr.bf16.mxu0 0
        %5442 = vmatmul.mubr.bf16.gmra.mrb[0].mxu0 %v5337
        %v5443 = vpop.f32.mrb[0].mxu0
        %v5444 = vadd.f32 %v5223, %v5443
        %v5445 = vpop.f32.mrb[0].mxu0
        %v5446 = vpop.f32.mrb[0].mxu0
        %v5447 = vadd.f32 %v5226, %v5446
        %v5448 = vpop.f32.mrb[0].mxu0
        %5449 = vmatprep.mubr.bf16.mxu0 0
        %5450 = vmatmul.mubr.bf16.gmra.mrb[0].mxu0 %v5340
        %v5451 = vpop.f32.mrb[0].mxu0
        %v5452 = vadd.f32 %v5231, %v5451
        %v5453 = vpop.f32.mrb[0].mxu0
        %v5454 = vpop.f32.mrb[0].mxu0
        %v5455 = vadd.f32 %v5234, %v5454
        %v5456 = vpop.f32.mrb[0].mxu0
        %5457 = vmatprep.mubr.bf16.mxu0 0
        %5458 = vmatmul.mubr.bf16.gmra.mrb[0].mxu0 %v5343
        %v5459 = vpop.f32.mrb[0].mxu0
        %v5460 = vadd.f32 %v5239, %v5459
        %v5461 = vpop.f32.mrb[0].mxu0
        %v5462 = vpop.f32.mrb[0].mxu0
        %v5463 = vadd.f32 %v5242, %v5462
        %v5464 = vpop.f32.mrb[0].mxu0
        %5465 = vmatprep.mubr.bf16.mxu0 0
        %5466 = vmatmul.mubr.bf16.gmra.mrb[0].mxu0 %v5346
        %v5467 = vpop.f32.mrb[0].mxu0
        %v5468 = vadd.f32 %v5247, %v5467
        %v5469 = vpop.f32.mrb[0].mxu0
        %v5470 = vpop.f32.mrb[0].mxu0
        %v5471 = vadd.f32 %v5250, %v5470
        %v5472 = vpop.f32.mrb[0].mxu0
        %5473 = vmatprep.mubr.bf16.mxu0 0
        %5474 = vmatmul.mubr.bf16.gmra.mrb[0].mxu0 %v5349
        %v5475 = vpop.f32.mrb[0].mxu0
        %v5476 = vadd.f32 %v5255, %v5475
        %v5477 = vpop.f32.mrb[0].mxu0
        %v5478 = vpop.f32.mrb[0].mxu0
        %v5479 = vadd.f32 %v5258, %v5478
        %v5480 = vpop.f32.mrb[0].mxu0
        %5481 = vmatprep.mubr.bf16.mxu0 0
        %5482 = vmatmul.mubr.bf16.gmra.mrb[0].mxu0 %v5352
        %v5483 = vpop.f32.mrb[0].mxu0
        %v5484 = vadd.f32 %v5263, %v5483
        %v5485 = vpop.f32.mrb[0].mxu0
        %v5486 = vpop.f32.mrb[0].mxu0
        %v5487 = vadd.f32 %v5266, %v5486
        %v5488 = vpop.f32.mrb[0].mxu0
        %5489 = vmatprep.mubr.bf16.mxu0 0
        %5490 = vmatmul.mubr.bf16.gmra.mrb[0].mxu0 %v5355
        %v5491 = vpop.f32.mrb[0].mxu0
        %v5492 = vadd.f32 %v5271, %v5491
        %v5493 = vpop.f32.mrb[0].mxu0
        %v5494 = vpop.f32.mrb[0].mxu0
        %v5495 = vadd.f32 %v5274, %v5494
        %v5496 = vpop.f32.mrb[0].mxu0
        %5497 = vmatprep.mubr.bf16.mxu0 0
        %5498 = vmatmul.mubr.bf16.gmra.mrb[0].mxu0 %v5358
        %v5499 = vpop.f32.mrb[0].mxu0
        %v5500 = vadd.f32 %v5279, %v5499
        %v5501 = vpop.f32.mrb[0].mxu0
        %v5502 = vpop.f32.mrb[0].mxu0
        %v5503 = vadd.f32 %v5282, %v5502
        %v5504 = vpop.f32.mrb[0].mxu0
        %5505 = vmatprep.mubr.bf16.mxu0 0
        %5506 = vmatmul.mubr.bf16.gmra.mrb[0].mxu0 %v5361
        %v5507 = vpop.f32.mrb[0].mxu0
        %v5508 = vadd.f32 %v5287, %v5507
        %v5509 = vpop.f32.mrb[0].mxu0
        %v5510 = vpop.f32.mrb[0].mxu0
        %v5511 = vadd.f32 %v5290, %v5510
        %v5512 = vpop.f32.mrb[0].mxu0
        %5513 = vmatprep.mubr.bf16.mxu0 0
        %5514 = vmatmul.mubr.bf16.gmra.mrb[0].mxu0 %v5364
        %v5515 = vpop.f32.mrb[0].mxu0
        %v5516 = vadd.f32 %v5295, %v5515
        %v5517 = vpop.f32.mrb[0].mxu0
        %v5518 = vpop.f32.mrb[0].mxu0
        %v5519 = vadd.f32 %v5298, %v5518
        %v5520 = vpop.f32.mrb[0].mxu0
        %5521 = vmatprep.mubr.bf16.mxu0 0
        %5522 = vmatmul.mubr.bf16.gmra.mrb[0].mxu0 %v5367
        %v5523 = vpop.f32.mrb[0].mxu0
        %v5524 = vadd.f32 %v5303, %v5523
        %v5525 = vpop.f32.mrb[0].mxu0
        %v5526 = vpop.f32.mrb[0].mxu0
        %v5527 = vadd.f32 %v5306, %v5526
        %v5528 = vpop.f32.mrb[0].mxu0
        %5529 = vdwg.mxu0
        %v5530 = vld [vmem:[%s7] sm:$0x1]
        %v5532 = vlaneseq
        %v5533 = vshrl.u32 %v5532, 7
        %v5534 = vsub.s32 0, %v5533
        %v5535 = vrot.slane %v5530, %v5534
        %v5537 = vadd.f32 %v5404, %v5535
        %v5538 = vadd.f32 %v5407, %v5535
        %v5539 = vadd.f32 %v5412, %v5535
        %v5540 = vadd.f32 %v5415, %v5535
        %v5541 = vadd.f32 %v5420, %v5535
        %v5542 = vadd.f32 %v5423, %v5535
        %v5543 = vadd.f32 %v5428, %v5535
        %v5544 = vadd.f32 %v5431, %v5535
        %v5545 = vadd.f32 %v5436, %v5535
        %v5546 = vadd.f32 %v5439, %v5535
        %v5547 = vadd.f32 %v5444, %v5535
        %v5548 = vadd.f32 %v5447, %v5535
        %v5549 = vadd.f32 %v5452, %v5535
        %v5550 = vadd.f32 %v5455, %v5535
        %v5551 = vadd.f32 %v5460, %v5535
        %v5552 = vadd.f32 %v5463, %v5535
        %v5553 = vadd.f32 %v5468, %v5535
        %v5554 = vadd.f32 %v5471, %v5535
        %v5555 = vadd.f32 %v5476, %v5535
        %v5556 = vadd.f32 %v5479, %v5535
        %v5557 = vadd.f32 %v5484, %v5535
        %v5558 = vadd.f32 %v5487, %v5535
        %v5559 = vadd.f32 %v5492, %v5535
        %v5560 = vadd.f32 %v5495, %v5535
        %v5561 = vadd.f32 %v5500, %v5535
        %v5562 = vadd.f32 %v5503, %v5535
        %v5563 = vadd.f32 %v5508, %v5535
        %v5564 = vadd.f32 %v5511, %v5535
        %v5565 = vadd.f32 %v5516, %v5535
        %v5566 = vadd.f32 %v5519, %v5535
        %v5567 = vadd.f32 %v5524, %v5535
        %v5568 = vadd.f32 %v5527, %v5535
        %v5569 = vmax.f32 %v5537, 0.0
        %v5570 = vmax.f32 %v5538, 0.0
        %v5571 = vmax.f32 %v5539, 0.0
        %v5572 = vmax.f32 %v5540, 0.0
        %v5573 = vmax.f32 %v5541, 0.0
        %v5574 = vmax.f32 %v5542, 0.0
        %v5575 = vmax.f32 %v5543, 0.0
        %v5576 = vmax.f32 %v5544, 0.0
        %v5577 = vmax.f32 %v5545, 0.0
        %v5578 = vmax.f32 %v5546, 0.0
        %v5579 = vmax.f32 %v5547, 0.0
        %v5580 = vmax.f32 %v5548, 0.0
        %v5581 = vmax.f32 %v5549, 0.0
        %v5582 = vmax.f32 %v5550, 0.0
        %v5583 = vmax.f32 %v5551, 0.0
        %v5584 = vmax.f32 %v5552, 0.0
        %v5585 = vmax.f32 %v5553, 0.0
        %v5586 = vmax.f32 %v5554, 0.0
        %v5587 = vmax.f32 %v5555, 0.0
        %v5588 = vmax.f32 %v5556, 0.0
        %v5589 = vmax.f32 %v5557, 0.0
        %v5590 = vmax.f32 %v5558, 0.0
        %v5591 = vmax.f32 %v5559, 0.0
        %v5592 = vmax.f32 %v5560, 0.0
        %v5593 = vmax.f32 %v5561, 0.0
        %v5594 = vmax.f32 %v5562, 0.0
        %v5595 = vmax.f32 %v5563, 0.0
        %v5596 = vmax.f32 %v5564, 0.0
        %v5597 = vmax.f32 %v5565, 0.0
        %v5598 = vmax.f32 %v5566, 0.0
        %v5599 = vmax.f32 %v5567, 0.0
        %v5600 = vmax.f32 %v5568, 0.0
        %5601 = vst [vmem:[%s299] sm:$0xff] %v5569
        %5602 = vst [vmem:[%s299 + $0x8] sm:$0xff] %v5570
        %5603 = vst [vmem:[%s299 + $0x10] sm:$0xff] %v5571
        %5604 = vst [vmem:[%s299 + $0x18] sm:$0xff] %v5572
        %5605 = vst [vmem:[%s299 + $0x20] sm:$0xff] %v5573
        %5606 = vst [vmem:[%s299 + $0x28] sm:$0xff] %v5574
        %5607 = vst [vmem:[%s299 + $0x30] sm:$0xff] %v5575
        %5608 = vst [vmem:[%s299 + $0x38] sm:$0xff] %v5576
        %5609 = vst [vmem:[%s299 + $0x40] sm:$0xff] %v5577
        %5610 = vst [vmem:[%s299 + $0x48] sm:$0xff] %v5578
        %5611 = vst [vmem:[%s299 + $0x50] sm:$0xff] %v5579
        %5612 = vst [vmem:[%s299 + $0x58] sm:$0xff] %v5580
        %5613 = vst [vmem:[%s299 + $0x60] sm:$0xff] %v5581
        %5614 = vst [vmem:[%s299 + $0x68] sm:$0xff] %v5582
        %5615 = vst [vmem:[%s299 + $0x70] sm:$0xff] %v5583
        %5616 = vst [vmem:[%s299 + $0x78] sm:$0xff] %v5584
        %5617 = vst [vmem:[%s299 + $0x80] sm:$0xff] %v5585
        %5618 = vst [vmem:[%s299 + $0x88] sm:$0xff] %v5586
        %5619 = vst [vmem:[%s299 + $0x90] sm:$0xff] %v5587
        %5620 = vst [vmem:[%s299 + $0x98] sm:$0xff] %v5588
        %5621 = vst [vmem:[%s299 + $0xa0] sm:$0xff] %v5589
        %5622 = vst [vmem:[%s299 + $0xa8] sm:$0xff] %v5590
        %5623 = vst [vmem:[%s299 + $0xb0] sm:$0xff] %v5591
        %5624 = vst [vmem:[%s299 + $0xb8] sm:$0xff] %v5592
        %5625 = vst [vmem:[%s299 + $0xc0] sm:$0xff] %v5593
        %5626 = vst [vmem:[%s299 + $0xc8] sm:$0xff] %v5594
        %5627 = vst [vmem:[%s299 + $0xd0] sm:$0xff] %v5595
        %5628 = vst [vmem:[%s299 + $0xd8] sm:$0xff] %v5596
        %5629 = vst [vmem:[%s299 + $0xe0] sm:$0xff] %v5597
        %5630 = vst [vmem:[%s299 + $0xe8] sm:$0xff] %v5598
        %5631 = vst [vmem:[%s299 + $0xf0] sm:$0xff] %v5599
        %5632 = vst [vmem:[%s299 + $0xf8] sm:$0xff] %v5600
        %s5633 = sand.u32 %s203, 1
        %s5634 = scalar_lea.sflag [#allocation3], %s5633
        %s5635 = sand.u32 %s203, 1
        %s5636 = smul.addr %s5635, 256
        %s5637 = scalar_lea.vmem [#allocation2], %s5636
        // Predicated region
        $region53: #{tpu_custom_call.1} parent=51 // pred_check
          %p5638 = pneg %p213
        $region54: #{tpu_custom_call.1} parent=51 // pred_check_branch
          %5640 = sbr.rel (%p5638) target = $region56
        $region55: #{tpu_custom_call.1} parent=51 // pred_region
          %s5641 = smul.u32 32, %s22
          %s5643 = ssub.s32 4096, 4096
          %5644 = vsyncadd %s5634, %s5643
          %s5645 = smul.addr %s5641, 128
          %s5646 = scalar_lea.hbm %s8, %s5645
          %s5647 = sshll.u32 %s5637, 4
          %s5648 = int_to_ptr.vmem [resolvable:$true] %s5647
          %5653 = dma.vmem_to_hbm [thread:$0]  %s5648, 4096, %s5646, %s5634, 128, 128, 8
        $region56: #{tpu_custom_call.1} parent=51 // pred_fallthru
          _
      $region52: #{tpu_custom_call.1} parent=5 // pred_fallthru
        _
      %p5654 = scmp.le.s32.totalorder 2, %s17
      // Predicated region
      $region57: #{tpu_custom_call.1} parent=5 // pred_check
        %p5655 = pneg %p5654
      $region58: #{tpu_custom_call.1} parent=5 // pred_check_branch
        %5657 = sbr.rel (%p5655) target = $region60
      $region59: #{tpu_custom_call.1} parent=5 // pred_region
        %s5658 = ssub.s32 %s17, 2
        // Predicated region
        $region61: #{tpu_custom_call.1} parent=59 // pred_check
          %p5659 = pneg %p219
        $region62: #{tpu_custom_call.1} parent=59 // pred_check_branch
          %5661 = sbr.rel (%p5659) target = $region64
        $region63: #{tpu_custom_call.1} parent=59 // pred_region
          %s5662 = sand.u32 %s204, 1
          %s5663 = scalar_lea.sflag [#allocation3], %s5662
          %s5664 = sand.u32 %s204, 1
          %s5665 = smul.addr %s5664, 256
          %s5666 = scalar_lea.vmem [#allocation2], %s5665
          %5667 = dma.done %s5663, 4096
        $region64: #{tpu_custom_call.1} parent=59 // pred_fallthru
          _
      $region60: #{tpu_custom_call.1} parent=5 // pred_fallthru
        _
    $region6: #{tpu_custom_call.1} parent=1 // loop_footer
      %s21 = sadd.s32 1, %s17
    $region7: #{tpu_custom_call.1} parent=1 // loop_footer_branch
      %16 = sbr.rel target = $region3
    $region8: #{tpu_custom_call.1} parent=1 // loop_exit
      _
    %5668 = vsyncpa [#allocation3], 1
    %s5669 = scalar_lea.sflag [#allocation3], 1
    %5670 = vsyncpa %s5669, 1

</llo_original>
